<compile_context>
chip_gen: v6e
topology: v6e:2x2x1
jax: 0.10.0
libtpu: 0.0.40
codegen_flags: <defaults>
</compile_context>

<pallas_src>
import jax
import jax.numpy as jnp
from jax import lax
from jax.experimental import pallas as pl
from jax.experimental.pallas import tpu as pltpu


def _round_up(x, m):
    return ((x + m - 1) // m) * m


def lstm_policy_kernel(keep_ref, ob_ref, h0_ref, c0_ref,
                       wfc_ref, bfc_ref,
                       wih_ref, bg_ref, whh_ref,
                       wa_ref, ba_ref, wc_ref, bc_ref,
                       probs_ref, value_ref, hout_ref, cout_ref,
                       gx_ref, hs_ref):
    T = ob_ref.shape[0]
    n_p = h0_ref.shape[1]            # lane-padded LSTM width (multiple of 128)
    b = pl.program_id(0)             # agent index (parallel grid axis)

    # --- FC encoder: one batched MXU matmul over the whole sequence ---
    xs = jnp.maximum(
        jnp.dot(ob_ref[...], wfc_ref[...], preferred_element_type=jnp.float32)
        + bfc_ref[...], 0.0)                                     # (T, n_fc)

    # --- hoisted input projection for all timesteps, biases folded; staged in
    #     VMEM so the loop body does a single row load per step ---
    gx_ref[...] = (jnp.dot(xs, wih_ref[...], preferred_element_type=jnp.float32)
                   + bg_ref[...])                                # (T, 4*n_p)

    # --- sequential LSTMCell with done-masked state reset ---
    def step(t, carry):
        h, c = carry                                             # (1, n_p) each
        keep = keep_ref[b, t]                                    # SMEM scalar
        h = h * keep
        c = c * keep
        gates = (gx_ref[pl.ds(t, 1), :]
                 + jnp.dot(h, whh_ref[...],
                           preferred_element_type=jnp.float32))  # (1, 4*n_p)
        # n_p is a multiple of 128, so each gate slice is lane-aligned.
        i = jax.nn.sigmoid(gates[:, 0 * n_p:1 * n_p])
        f = jax.nn.sigmoid(gates[:, 1 * n_p:2 * n_p])
        g = jnp.tanh(gates[:, 2 * n_p:3 * n_p])
        o = jax.nn.sigmoid(gates[:, 3 * n_p:4 * n_p])
        c_new = f * c + i * g
        h_new = o * jnp.tanh(c_new)
        hs_ref[pl.ds(t, 1), :] = h_new
        return (h_new, c_new)

    h_fin, c_fin = lax.fori_loop(0, T, step, (h0_ref[...], c0_ref[...]),
                                 unroll=True)

    hs = hs_ref[...]                                             # (T, n_p)

    # --- actor head + softmax (dim=1) ---
    logits = (jnp.dot(hs, wa_ref[...], preferred_element_type=jnp.float32)
              + ba_ref[...])
    m = jnp.max(logits, axis=1, keepdims=True)
    e = jnp.exp(logits - m)
    probs_ref[...] = e / jnp.sum(e, axis=1, keepdims=True)

    # --- critic head (n_n = 0 case: plain Linear(n_lstm -> 1)) ---
    # TODO(synk): n_n > 0 neighbor-action one-hot concat path not implemented.
    value_ref[...] = (jnp.dot(hs, wc_ref[...], preferred_element_type=jnp.float32)
                      + bc_ref[...])

    # --- new_states = cat([h, c]) (padded lanes stripped in the wrapper) ---
    hout_ref[...] = h_fin
    cout_ref[...] = c_fin


def lstm_policy_forward(ob, done, states, params):
    """ob: (T, n_s) or (N, T, n_s); done: (T,) or (N, T);
    states: (2*n_lstm,) or (N, 2*n_lstm). All float32."""
    single = (ob.ndim == 2)
    if single:
        ob, done, states = ob[None], done[None], states[None]

    N, T, n_s = ob.shape
    n_lstm = states.shape[1] // 2
    n_fc = params["w_fc"].shape[1]
    n_a = params["w_a"].shape[1]
    n_p = _round_up(n_lstm, 128)
    f32 = jnp.float32

    # keep-mask (1 - done) lives in SMEM, read as a scalar per step.
    keep = (1.0 - done).astype(f32)                                  # (N, T)

    # Lane-pad initial states; padded lanes stay exactly zero through the
    # recurrence (zero weight columns/rows + zero bias for padded gate lanes).
    h0 = jnp.zeros((N, 1, n_p), f32).at[:, 0, :n_lstm].set(states[:, :n_lstm])
    c0 = jnp.zeros((N, 1, n_p), f32).at[:, 0, :n_lstm].set(states[:, n_lstm:])

    def pad_gate_cols(w):
        # (rows, 4*n_lstm) -> (rows, 4*n_p) with each gate block at k*n_p.
        rows = w.shape[0]
        out = jnp.zeros((rows, 4 * n_p), f32)
        for k in range(4):
            out = out.at[:, k * n_p:k * n_p + n_lstm].set(
                w[:, k * n_lstm:(k + 1) * n_lstm])
        return out

    w_ih_p = pad_gate_cols(params["w_ih"])                           # (n_fc, 4*n_p)
    w_hh_rows = jnp.zeros((n_p, 4 * n_lstm), f32).at[:n_lstm].set(params["w_hh"])
    w_hh_p = pad_gate_cols(w_hh_rows)                                # (n_p, 4*n_p)
    b_gate_p = pad_gate_cols(params["b_ih"] + params["b_hh"])        # (1, 4*n_p)
    w_a_p = jnp.zeros((n_p, n_a), f32).at[:n_lstm].set(params["w_a"])
    w_c_p = jnp.zeros((n_p, 1), f32).at[:n_lstm].set(params["w_c"])

    inputs = (keep, ob, h0, c0,
              params["w_fc"], params["b_fc"],
              w_ih_p, b_gate_p, w_hh_p,
              w_a_p, params["b_a"], w_c_p, params["b_c"])

    out_shapes = (jax.ShapeDtypeStruct((N, T, n_a), f32),            # probs
                  jax.ShapeDtypeStruct((N, T, 1), f32),              # values
                  jax.ShapeDtypeStruct((N, 1, n_p), f32),            # h out
                  jax.ShapeDtypeStruct((N, 1, n_p), f32))            # c out

    # TODO(synk): for large T / n_lstm, stream over a T-chunk "arbitrary" grid
    # axis with h/c carried in scratch instead of keeping (T, 4*n_p) resident
    # (matters for v7x's 64 MiB VMEM); current footprint is a few hundred KiB.
    grid_spec = pltpu.PrefetchScalarGridSpec(
        num_scalar_prefetch=0,
        grid=(N,),
        in_specs=[
            pl.BlockSpec(memory_space=pltpu.MemorySpace.SMEM),       # keep mask
            pl.BlockSpec((None, T, n_s), lambda b: (b, 0, 0)),       # ob
            pl.BlockSpec((None, 1, n_p), lambda b: (b, 0, 0)),       # h0
            pl.BlockSpec((None, 1, n_p), lambda b: (b, 0, 0)),       # c0
            pl.BlockSpec((n_s, n_fc), lambda b: (0, 0)),             # w_fc
            pl.BlockSpec((1, n_fc), lambda b: (0, 0)),               # b_fc
            pl.BlockSpec((n_fc, 4 * n_p), lambda b: (0, 0)),         # w_ih (padded)
            pl.BlockSpec((1, 4 * n_p), lambda b: (0, 0)),            # b_ih+b_hh
            pl.BlockSpec((n_p, 4 * n_p), lambda b: (0, 0)),          # w_hh (padded)
            pl.BlockSpec((n_p, n_a), lambda b: (0, 0)),              # w_a (padded)
            pl.BlockSpec((1, n_a), lambda b: (0, 0)),                # b_a
            pl.BlockSpec((n_p, 1), lambda b: (0, 0)),                # w_c (padded)
            pl.BlockSpec((1, 1), lambda b: (0, 0)),                  # b_c
        ],
        out_specs=[
            pl.BlockSpec((None, T, n_a), lambda b: (b, 0, 0)),       # probs
            pl.BlockSpec((None, T, 1), lambda b: (b, 0, 0)),         # values
            pl.BlockSpec((None, 1, n_p), lambda b: (b, 0, 0)),       # h out
            pl.BlockSpec((None, 1, n_p), lambda b: (b, 0, 0)),       # c out
        ],
        scratch_shapes=[pltpu.VMEM((T, 4 * n_p), f32),               # gates_x
                        pltpu.VMEM((T, n_p), f32)],                  # hidden seq
    )

    probs, values, h_out, c_out = pl.pallas_call(
        lstm_policy_kernel,
        out_shape=out_shapes,
        grid_spec=grid_spec,
        compiler_params=pltpu.CompilerParams(
            dimension_semantics=("parallel",)),
    )(*inputs)

    new_states = jnp.concatenate(
        [h_out[:, 0, :n_lstm], c_out[:, 0, :n_lstm]], axis=1)        # (N, 2*n_lstm)
    values = values[:, :, 0]                                         # (N, T)

    if single:
        return probs[0], values[0], new_states[0]
    return probs, values, new_states


def init_params(key, n_s, n_fc, n_lstm, n_a):
    ks = jax.random.split(key, 7)
    s = 0.1
    return {
        "w_fc": s * jax.random.normal(ks[0], (n_s, n_fc), jnp.float32),
        "b_fc": jnp.zeros((1, n_fc), jnp.float32),
        "w_ih": s * jax.random.normal(ks[1], (n_fc, 4 * n_lstm), jnp.float32),
        "b_ih": jnp.zeros((1, 4 * n_lstm), jnp.float32),
        "w_hh": s * jax.random.normal(ks[2], (n_lstm, 4 * n_lstm), jnp.float32),
        "b_hh": jnp.zeros((1, 4 * n_lstm), jnp.float32),
        "w_a": s * jax.random.normal(ks[3], (n_lstm, n_a), jnp.float32),
        "b_a": jnp.zeros((1, n_a), jnp.float32),
        "w_c": s * jax.random.normal(ks[4], (n_lstm, 1), jnp.float32),
        "b_c": jnp.zeros((1, 1), jnp.float32),
    }


def reference_forward(ob, done, states, p):
    """Pure-JAX single-sequence reference matching the PyTorch semantics."""
    n_lstm = states.shape[0] // 2
    xs = jnp.maximum(ob @ p["w_fc"] + p["b_fc"], 0.0)
    h = states[:n_lstm][None, :]
    c = states[n_lstm:][None, :]
    hs = []
    for t in range(ob.shape[0]):
        mask = 1.0 - done[t]
        h = h * mask
        c = c * mask
        gates = xs[t:t + 1] @ p["w_ih"] + p["b_ih"] + h @ p["w_hh"] + p["b_hh"]
        i = jax.nn.sigmoid(gates[:, 0 * n_lstm:1 * n_lstm])
        f = jax.nn.sigmoid(gates[:, 1 * n_lstm:2 * n_lstm])
        g = jnp.tanh(gates[:, 2 * n_lstm:3 * n_lstm])
        o = jax.nn.sigmoid(gates[:, 3 * n_lstm:4 * n_lstm])
        c = f * c + i * g
        h = o * jnp.tanh(c)
        hs.append(h)
    hs = jnp.concatenate(hs, axis=0)
    logits = hs @ p["w_a"] + p["b_a"]
    probs = jax.nn.softmax(logits, axis=1)
    values = (hs @ p["w_c"] + p["b_c"])[:, 0]
    new_states = jnp.concatenate([h[0], c[0]])
    return probs, values, new_states


if __name__ == "__main__":
    # LstmPolicy(n_s=16, n_a=8, n_n=0, n_step=8, n_fc=64, n_lstm=64); 2 agents.
    n_s, n_a, n_fc, n_lstm, T, N = 16, 8, 64, 64, 8, 2

    key = jax.random.PRNGKey(0)
    k_ob, k_done, k_st, k_p = jax.random.split(key, 4)
    ob = jax.random.normal(k_ob, (N, T, n_s), jnp.float32)
    done = (jax.random.uniform(k_done, (N, T)) < 0.2).astype(jnp.float32)
    states = 0.1 * jax.random.normal(k_st, (N, 2 * n_lstm), jnp.float32)
    params = init_params(k_p, n_s, n_fc, n_lstm, n_a)

    probs, values, new_states = lstm_policy_forward(ob, done, states, params)
    jax.block_until_ready((probs, values, new_states))

    for b in range(N):
        r_probs, r_values, r_states = reference_forward(ob[b], done[b],
                                                        states[b], params)
        assert jnp.allclose(probs[b], r_probs, atol=1e-5), "probs mismatch"
        assert jnp.allclose(values[b], r_values, atol=1e-5), "values mismatch"
        assert jnp.allclose(new_states[b], r_states, atol=1e-5), "states mismatch"

    print("KERNEL_OK")
</pallas_src>

<mosaic_0001>
module attributes {stable_mosaic.version = 11 : i64} {
  func.func @lstm_policy_kernel(%arg0: i32, %arg1: memref<2x8xf32, #tpu.memory_space<smem>>, %arg2: memref<1x8x16xf32, #tpu.memory_space<vmem>>, %arg3: memref<1x1x128xf32, #tpu.memory_space<vmem>>, %arg4: memref<1x1x128xf32, #tpu.memory_space<vmem>>, %arg5: memref<16x64xf32, #tpu.memory_space<vmem>>, %arg6: memref<1x64xf32, #tpu.memory_space<vmem>>, %arg7: memref<64x512xf32, #tpu.memory_space<vmem>>, %arg8: memref<1x512xf32, #tpu.memory_space<vmem>>, %arg9: memref<128x512xf32, #tpu.memory_space<vmem>>, %arg10: memref<128x8xf32, #tpu.memory_space<vmem>>, %arg11: memref<1x8xf32, #tpu.memory_space<vmem>>, %arg12: memref<128x1xf32, #tpu.memory_space<vmem>>, %arg13: memref<1x1xf32, #tpu.memory_space<vmem>>, %arg14: memref<1x8x8xf32, #tpu.memory_space<vmem>>, %arg15: memref<1x8x1xf32, #tpu.memory_space<vmem>>, %arg16: memref<1x1x128xf32, #tpu.memory_space<vmem>>, %arg17: memref<1x1x128xf32, #tpu.memory_space<vmem>>, %arg18: memref<8x512xf32, #tpu.memory_space<vmem>>, %arg19: memref<8x128xf32, #tpu.memory_space<vmem>>) attributes {dimension_semantics = [#tpu.dimension_semantics<parallel>], iteration_bounds = array<i64: 2>, scalar_prefetch = 0 : i64, scratch_operands = 2 : i64, tpu.core_type = #tpu.core_type<tc>, window_params = [{transform_indices = @transform_0, window_bounds = array<i64: 2, 8>}, {transform_indices = @transform_1, window_bounds = array<i64: 1, 8, 16>}, {transform_indices = @transform_2, window_bounds = array<i64: 1, 1, 128>}, {transform_indices = @transform_3, window_bounds = array<i64: 1, 1, 128>}, {pipeline_mode = #tpu.pipeline_mode<synchronous>, transform_indices = @transform_4, window_bounds = array<i64: 16, 64>}, {pipeline_mode = #tpu.pipeline_mode<synchronous>, transform_indices = @transform_5, window_bounds = array<i64: 1, 64>}, {pipeline_mode = #tpu.pipeline_mode<synchronous>, transform_indices = @transform_6, window_bounds = array<i64: 64, 512>}, {pipeline_mode = #tpu.pipeline_mode<synchronous>, transform_indices = @transform_7, window_bounds = array<i64: 1, 512>}, {pipeline_mode = #tpu.pipeline_mode<synchronous>, transform_indices = @transform_8, window_bounds = array<i64: 128, 512>}, {pipeline_mode = #tpu.pipeline_mode<synchronous>, transform_indices = @transform_9, window_bounds = array<i64: 128, 8>}, {pipeline_mode = #tpu.pipeline_mode<synchronous>, transform_indices = @transform_10, window_bounds = array<i64: 1, 8>}, {pipeline_mode = #tpu.pipeline_mode<synchronous>, transform_indices = @transform_11, window_bounds = array<i64: 128, 1>}, {pipeline_mode = #tpu.pipeline_mode<synchronous>, transform_indices = @transform_12, window_bounds = array<i64: 1, 1>}, {transform_indices = @transform_13, window_bounds = array<i64: 1, 8, 8>}, {transform_indices = @transform_14, window_bounds = array<i64: 1, 8, 1>}, {transform_indices = @transform_15, window_bounds = array<i64: 1, 1, 128>}, {transform_indices = @transform_16, window_bounds = array<i64: 1, 1, 128>}]} {
    %c0 = arith.constant 0 : index
    %c0_0 = arith.constant 0 : index
    %c0_1 = arith.constant 0 : index
    %0 = vector.load %arg2[%c0, %c0_0, %c0_1] : memref<1x8x16xf32, #tpu.memory_space<vmem>>, vector<1x8x16xf32>
    %1 = vector.shape_cast %0 : vector<1x8x16xf32> to vector<8x16xf32>
    %c0_2 = arith.constant 0 : index
    %c0_3 = arith.constant 0 : index
    %2 = vector.load %arg5[%c0_2, %c0_3] : memref<16x64xf32, #tpu.memory_space<vmem>>, vector<16x64xf32>
    %cst = arith.constant dense<0.000000e+00> : vector<8x64xf32>
    %3 = tpu.matmul %1, %2, %cst {dimension_numbers = #tpu.dot_dimension_numbers<[1], [0], [0], [1], [0, 0, 1, 1], [], []>} : vector<8x16xf32>, vector<16x64xf32>, vector<8x64xf32> -> vector<8x64xf32>
    %c0_4 = arith.constant 0 : index
    %c0_5 = arith.constant 0 : index
    %4 = vector.load %arg6[%c0_4, %c0_5] : memref<1x64xf32, #tpu.memory_space<vmem>>, vector<1x64xf32>
    %5 = vector.broadcast %4 : vector<1x64xf32> to vector<8x64xf32>
    %6 = arith.addf %3, %5 : vector<8x64xf32>
    %cst_6 = arith.constant 0.000000e+00 : f32
    %7 = vector.broadcast %cst_6 : f32 to vector<8x64xf32>
    %8 = arith.maximumf %6, %7 : vector<8x64xf32>
    %c0_7 = arith.constant 0 : index
    %c0_8 = arith.constant 0 : index
    %9 = vector.load %arg7[%c0_7, %c0_8] : memref<64x512xf32, #tpu.memory_space<vmem>>, vector<64x512xf32>
    %cst_9 = arith.constant dense<0.000000e+00> : vector<8x512xf32>
    %10 = tpu.matmul %8, %9, %cst_9 {dimension_numbers = #tpu.dot_dimension_numbers<[1], [0], [0], [1], [0, 0, 1, 1], [], []>} : vector<8x64xf32>, vector<64x512xf32>, vector<8x512xf32> -> vector<8x512xf32>
    %c0_10 = arith.constant 0 : index
    %c0_11 = arith.constant 0 : index
    %11 = vector.load %arg8[%c0_10, %c0_11] : memref<1x512xf32, #tpu.memory_space<vmem>>, vector<1x512xf32>
    %12 = vector.broadcast %11 : vector<1x512xf32> to vector<8x512xf32>
    %13 = arith.addf %10, %12 : vector<8x512xf32>
    %c0_12 = arith.constant 0 : index
    %c0_13 = arith.constant 0 : index
    %14 = vector.load %arg18[%c0_12, %c0_13] : memref<8x512xf32, #tpu.memory_space<vmem>>, vector<8x512xf32>
    tpu.vector_store %arg18[%c0_12, %c0_13], %13 {strides = array<i32>} : memref<8x512xf32, #tpu.memory_space<vmem>>, vector<8x512xf32>,
    %c0_14 = arith.constant 0 : index
    %c0_15 = arith.constant 0 : index
    %c0_16 = arith.constant 0 : index
    %15 = vector.load %arg3[%c0_14, %c0_15, %c0_16] : memref<1x1x128xf32, #tpu.memory_space<vmem>>, vector<1x1x128xf32>
    %16 = vector.shape_cast %15 : vector<1x1x128xf32> to vector<1x128xf32>
    %c0_17 = arith.constant 0 : index
    %c0_18 = arith.constant 0 : index
    %c0_19 = arith.constant 0 : index
    %17 = vector.load %arg4[%c0_17, %c0_18, %c0_19] : memref<1x1x128xf32, #tpu.memory_space<vmem>>, vector<1x1x128xf32>
    %18 = vector.shape_cast %17 : vector<1x1x128xf32> to vector<1x128xf32>
    %c0_i32 = arith.constant 0 : i32
    %19 = arith.index_cast %arg0 : i32 to index
    %20 = arith.index_cast %c0_i32 : i32 to index
    %21 = memref.load %arg1[%19, %20] : memref<2x8xf32, #tpu.memory_space<smem>>
    %22 = vector.broadcast %21 : f32 to vector<1x128xf32>
    %23 = arith.mulf %16, %22 : vector<1x128xf32>
    %24 = vector.broadcast %21 : f32 to vector<1x128xf32>
    %25 = arith.mulf %18, %24 : vector<1x128xf32>
    %26 = arith.index_cast %c0_i32 : i32 to index
    %c0_20 = arith.constant 0 : index
    %27 = vector.load %arg18[%26, %c0_20] : memref<8x512xf32, #tpu.memory_space<vmem>>, vector<1x512xf32>
    %c0_21 = arith.constant 0 : index
    %c0_22 = arith.constant 0 : index
    %28 = vector.load %arg9[%c0_21, %c0_22] : memref<128x512xf32, #tpu.memory_space<vmem>>, vector<128x512xf32>
    %cst_23 = arith.constant dense<0.000000e+00> : vector<1x512xf32>
    %29 = tpu.matmul %23, %28, %cst_23 {dimension_numbers = #tpu.dot_dimension_numbers<[1], [0], [0], [1], [0, 0, 1, 1], [], []>} : vector<1x128xf32>, vector<128x512xf32>, vector<1x512xf32> -> vector<1x512xf32>
    %30 = arith.addf %27, %29 : vector<1x512xf32>
    %31 = vector.extract_strided_slice %30 {offsets = [0, 0], sizes = [1, 128], strides = [1, 1]} : vector<1x512xf32> to vector<1x128xf32>
    %32 = arith.negf %31 : vector<1x128xf32>
    %33 = math.exp %32 : vector<1x128xf32>
    %cst_24 = arith.constant 1.000000e+00 : f32
    %34 = vector.broadcast %cst_24 : f32 to vector<1x128xf32>
    %35 = arith.addf %34, %33 : vector<1x128xf32>
    %36 = arith.divf %34, %35 : vector<1x128xf32>
    %37 = vector.extract_strided_slice %30 {offsets = [0, 128], sizes = [1, 128], strides = [1, 1]} : vector<1x512xf32> to vector<1x128xf32>
    %38 = arith.negf %37 : vector<1x128xf32>
    %39 = math.exp %38 : vector<1x128xf32>
    %cst_25 = arith.constant 1.000000e+00 : f32
    %40 = vector.broadcast %cst_25 : f32 to vector<1x128xf32>
    %41 = arith.addf %40, %39 : vector<1x128xf32>
    %42 = arith.divf %40, %41 : vector<1x128xf32>
    %43 = vector.extract_strided_slice %30 {offsets = [0, 256], sizes = [1, 128], strides = [1, 1]} : vector<1x512xf32> to vector<1x128xf32>
    %44 = math.tanh %43 : vector<1x128xf32>
    %45 = vector.extract_strided_slice %30 {offsets = [0, 384], sizes = [1, 128], strides = [1, 1]} : vector<1x512xf32> to vector<1x128xf32>
    %46 = arith.negf %45 : vector<1x128xf32>
    %47 = math.exp %46 : vector<1x128xf32>
    %cst_26 = arith.constant 1.000000e+00 : f32
    %48 = vector.broadcast %cst_26 : f32 to vector<1x128xf32>
    %49 = arith.addf %48, %47 : vector<1x128xf32>
    %50 = arith.divf %48, %49 : vector<1x128xf32>
    %51 = arith.mulf %42, %25 : vector<1x128xf32>
    %52 = arith.mulf %36, %44 : vector<1x128xf32>
    %53 = arith.addf %51, %52 : vector<1x128xf32>
    %54 = math.tanh %53 : vector<1x128xf32>
    %55 = arith.mulf %50, %54 : vector<1x128xf32>
    %56 = arith.index_cast %c0_i32 : i32 to index
    %c0_27 = arith.constant 0 : index
    %57 = vector.load %arg19[%56, %c0_27] : memref<8x128xf32, #tpu.memory_space<vmem>>, vector<1x128xf32>
    tpu.vector_store %arg19[%56, %c0_27], %55 {strides = array<i32>} : memref<8x128xf32, #tpu.memory_space<vmem>>, vector<1x128xf32>,
    %c1_i32 = arith.constant 1 : i32
    %58 = arith.index_cast %arg0 : i32 to index
    %59 = arith.index_cast %c1_i32 : i32 to index
    %60 = memref.load %arg1[%58, %59] : memref<2x8xf32, #tpu.memory_space<smem>>
    %61 = vector.broadcast %60 : f32 to vector<1x128xf32>
    %62 = arith.mulf %55, %61 : vector<1x128xf32>
    %63 = vector.broadcast %60 : f32 to vector<1x128xf32>
    %64 = arith.mulf %53, %63 : vector<1x128xf32>
    %65 = arith.index_cast %c1_i32 : i32 to index
    %c0_28 = arith.constant 0 : index
    %66 = vector.load %arg18[%65, %c0_28] : memref<8x512xf32, #tpu.memory_space<vmem>>, vector<1x512xf32>
    %c0_29 = arith.constant 0 : index
    %c0_30 = arith.constant 0 : index
    %67 = vector.load %arg9[%c0_29, %c0_30] : memref<128x512xf32, #tpu.memory_space<vmem>>, vector<128x512xf32>
    %cst_31 = arith.constant dense<0.000000e+00> : vector<1x512xf32>
    %68 = tpu.matmul %62, %67, %cst_31 {dimension_numbers = #tpu.dot_dimension_numbers<[1], [0], [0], [1], [0, 0, 1, 1], [], []>} : vector<1x128xf32>, vector<128x512xf32>, vector<1x512xf32> -> vector<1x512xf32>
    %69 = arith.addf %66, %68 : vector<1x512xf32>
    %70 = vector.extract_strided_slice %69 {offsets = [0, 0], sizes = [1, 128], strides = [1, 1]} : vector<1x512xf32> to vector<1x128xf32>
    %71 = arith.negf %70 : vector<1x128xf32>
    %72 = math.exp %71 : vector<1x128xf32>
    %cst_32 = arith.constant 1.000000e+00 : f32
    %73 = vector.broadcast %cst_32 : f32 to vector<1x128xf32>
    %74 = arith.addf %73, %72 : vector<1x128xf32>
    %75 = arith.divf %73, %74 : vector<1x128xf32>
    %76 = vector.extract_strided_slice %69 {offsets = [0, 128], sizes = [1, 128], strides = [1, 1]} : vector<1x512xf32> to vector<1x128xf32>
    %77 = arith.negf %76 : vector<1x128xf32>
    %78 = math.exp %77 : vector<1x128xf32>
    %cst_33 = arith.constant 1.000000e+00 : f32
    %79 = vector.broadcast %cst_33 : f32 to vector<1x128xf32>
    %80 = arith.addf %79, %78 : vector<1x128xf32>
    %81 = arith.divf %79, %80 : vector<1x128xf32>
    %82 = vector.extract_strided_slice %69 {offsets = [0, 256], sizes = [1, 128], strides = [1, 1]} : vector<1x512xf32> to vector<1x128xf32>
    %83 = math.tanh %82 : vector<1x128xf32>
    %84 = vector.extract_strided_slice %69 {offsets = [0, 384], sizes = [1, 128], strides = [1, 1]} : vector<1x512xf32> to vector<1x128xf32>
    %85 = arith.negf %84 : vector<1x128xf32>
    %86 = math.exp %85 : vector<1x128xf32>
    %cst_34 = arith.constant 1.000000e+00 : f32
    %87 = vector.broadcast %cst_34 : f32 to vector<1x128xf32>
    %88 = arith.addf %87, %86 : vector<1x128xf32>
    %89 = arith.divf %87, %88 : vector<1x128xf32>
    %90 = arith.mulf %81, %64 : vector<1x128xf32>
    %91 = arith.mulf %75, %83 : vector<1x128xf32>
    %92 = arith.addf %90, %91 : vector<1x128xf32>
    %93 = math.tanh %92 : vector<1x128xf32>
    %94 = arith.mulf %89, %93 : vector<1x128xf32>
    %95 = arith.index_cast %c1_i32 : i32 to index
    %c0_35 = arith.constant 0 : index
    %96 = vector.load %arg19[%95, %c0_35] : memref<8x128xf32, #tpu.memory_space<vmem>>, vector<1x128xf32>
    tpu.vector_store %arg19[%95, %c0_35], %94 {strides = array<i32>} : memref<8x128xf32, #tpu.memory_space<vmem>>, vector<1x128xf32>,
    %c2_i32 = arith.constant 2 : i32
    %97 = arith.index_cast %arg0 : i32 to index
    %98 = arith.index_cast %c2_i32 : i32 to index
    %99 = memref.load %arg1[%97, %98] : memref<2x8xf32, #tpu.memory_space<smem>>
    %100 = vector.broadcast %99 : f32 to vector<1x128xf32>
    %101 = arith.mulf %94, %100 : vector<1x128xf32>
    %102 = vector.broadcast %99 : f32 to vector<1x128xf32>
    %103 = arith.mulf %92, %102 : vector<1x128xf32>
    %104 = arith.index_cast %c2_i32 : i32 to index
    %c0_36 = arith.constant 0 : index
    %105 = vector.load %arg18[%104, %c0_36] : memref<8x512xf32, #tpu.memory_space<vmem>>, vector<1x512xf32>
    %c0_37 = arith.constant 0 : index
    %c0_38 = arith.constant 0 : index
    %106 = vector.load %arg9[%c0_37, %c0_38] : memref<128x512xf32, #tpu.memory_space<vmem>>, vector<128x512xf32>
    %cst_39 = arith.constant dense<0.000000e+00> : vector<1x512xf32>
    %107 = tpu.matmul %101, %106, %cst_39 {dimension_numbers = #tpu.dot_dimension_numbers<[1], [0], [0], [1], [0, 0, 1, 1], [], []>} : vector<1x128xf32>, vector<128x512xf32>, vector<1x512xf32> -> vector<1x512xf32>
    %108 = arith.addf %105, %107 : vector<1x512xf32>
    %109 = vector.extract_strided_slice %108 {offsets = [0, 0], sizes = [1, 128], strides = [1, 1]} : vector<1x512xf32> to vector<1x128xf32>
    %110 = arith.negf %109 : vector<1x128xf32>
    %111 = math.exp %110 : vector<1x128xf32>
    %cst_40 = arith.constant 1.000000e+00 : f32
    %112 = vector.broadcast %cst_40 : f32 to vector<1x128xf32>
    %113 = arith.addf %112, %111 : vector<1x128xf32>
    %114 = arith.divf %112, %113 : vector<1x128xf32>
    %115 = vector.extract_strided_slice %108 {offsets = [0, 128], sizes = [1, 128], strides = [1, 1]} : vector<1x512xf32> to vector<1x128xf32>
    %116 = arith.negf %115 : vector<1x128xf32>
    %117 = math.exp %116 : vector<1x128xf32>
    %cst_41 = arith.constant 1.000000e+00 : f32
    %118 = vector.broadcast %cst_41 : f32 to vector<1x128xf32>
    %119 = arith.addf %118, %117 : vector<1x128xf32>
    %120 = arith.divf %118, %119 : vector<1x128xf32>
    %121 = vector.extract_strided_slice %108 {offsets = [0, 256], sizes = [1, 128], strides = [1, 1]} : vector<1x512xf32> to vector<1x128xf32>
    %122 = math.tanh %121 : vector<1x128xf32>
    %123 = vector.extract_strided_slice %108 {offsets = [0, 384], sizes = [1, 128], strides = [1, 1]} : vector<1x512xf32> to vector<1x128xf32>
    %124 = arith.negf %123 : vector<1x128xf32>
    %125 = math.exp %124 : vector<1x128xf32>
    %cst_42 = arith.constant 1.000000e+00 : f32
    %126 = vector.broadcast %cst_42 : f32 to vector<1x128xf32>
    %127 = arith.addf %126, %125 : vector<1x128xf32>
    %128 = arith.divf %126, %127 : vector<1x128xf32>
    %129 = arith.mulf %120, %103 : vector<1x128xf32>
    %130 = arith.mulf %114, %122 : vector<1x128xf32>
    %131 = arith.addf %129, %130 : vector<1x128xf32>
    %132 = math.tanh %131 : vector<1x128xf32>
    %133 = arith.mulf %128, %132 : vector<1x128xf32>
    %134 = arith.index_cast %c2_i32 : i32 to index
    %c0_43 = arith.constant 0 : index
    %135 = vector.load %arg19[%134, %c0_43] : memref<8x128xf32, #tpu.memory_space<vmem>>, vector<1x128xf32>
    tpu.vector_store %arg19[%134, %c0_43], %133 {strides = array<i32>} : memref<8x128xf32, #tpu.memory_space<vmem>>, vector<1x128xf32>,
    %c3_i32 = arith.constant 3 : i32
    %136 = arith.index_cast %arg0 : i32 to index
    %137 = arith.index_cast %c3_i32 : i32 to index
    %138 = memref.load %arg1[%136, %137] : memref<2x8xf32, #tpu.memory_space<smem>>
    %139 = vector.broadcast %138 : f32 to vector<1x128xf32>
    %140 = arith.mulf %133, %139 : vector<1x128xf32>
    %141 = vector.broadcast %138 : f32 to vector<1x128xf32>
    %142 = arith.mulf %131, %141 : vector<1x128xf32>
    %143 = arith.index_cast %c3_i32 : i32 to index
    %c0_44 = arith.constant 0 : index
    %144 = vector.load %arg18[%143, %c0_44] : memref<8x512xf32, #tpu.memory_space<vmem>>, vector<1x512xf32>
    %c0_45 = arith.constant 0 : index
    %c0_46 = arith.constant 0 : index
    %145 = vector.load %arg9[%c0_45, %c0_46] : memref<128x512xf32, #tpu.memory_space<vmem>>, vector<128x512xf32>
    %cst_47 = arith.constant dense<0.000000e+00> : vector<1x512xf32>
    %146 = tpu.matmul %140, %145, %cst_47 {dimension_numbers = #tpu.dot_dimension_numbers<[1], [0], [0], [1], [0, 0, 1, 1], [], []>} : vector<1x128xf32>, vector<128x512xf32>, vector<1x512xf32> -> vector<1x512xf32>
    %147 = arith.addf %144, %146 : vector<1x512xf32>
    %148 = vector.extract_strided_slice %147 {offsets = [0, 0], sizes = [1, 128], strides = [1, 1]} : vector<1x512xf32> to vector<1x128xf32>
    %149 = arith.negf %148 : vector<1x128xf32>
    %150 = math.exp %149 : vector<1x128xf32>
    %cst_48 = arith.constant 1.000000e+00 : f32
    %151 = vector.broadcast %cst_48 : f32 to vector<1x128xf32>
    %152 = arith.addf %151, %150 : vector<1x128xf32>
    %153 = arith.divf %151, %152 : vector<1x128xf32>
    %154 = vector.extract_strided_slice %147 {offsets = [0, 128], sizes = [1, 128], strides = [1, 1]} : vector<1x512xf32> to vector<1x128xf32>
    %155 = arith.negf %154 : vector<1x128xf32>
    %156 = math.exp %155 : vector<1x128xf32>
    %cst_49 = arith.constant 1.000000e+00 : f32
    %157 = vector.broadcast %cst_49 : f32 to vector<1x128xf32>
    %158 = arith.addf %157, %156 : vector<1x128xf32>
    %159 = arith.divf %157, %158 : vector<1x128xf32>
    %160 = vector.extract_strided_slice %147 {offsets = [0, 256], sizes = [1, 128], strides = [1, 1]} : vector<1x512xf32> to vector<1x128xf32>
    %161 = math.tanh %160 : vector<1x128xf32>
    %162 = vector.extract_strided_slice %147 {offsets = [0, 384], sizes = [1, 128], strides = [1, 1]} : vector<1x512xf32> to vector<1x128xf32>
    %163 = arith.negf %162 : vector<1x128xf32>
    %164 = math.exp %163 : vector<1x128xf32>
    %cst_50 = arith.constant 1.000000e+00 : f32
    %165 = vector.broadcast %cst_50 : f32 to vector<1x128xf32>
    %166 = arith.addf %165, %164 : vector<1x128xf32>
    %167 = arith.divf %165, %166 : vector<1x128xf32>
    %168 = arith.mulf %159, %142 : vector<1x128xf32>
    %169 = arith.mulf %153, %161 : vector<1x128xf32>
    %170 = arith.addf %168, %169 : vector<1x128xf32>
    %171 = math.tanh %170 : vector<1x128xf32>
    %172 = arith.mulf %167, %171 : vector<1x128xf32>
    %173 = arith.index_cast %c3_i32 : i32 to index
    %c0_51 = arith.constant 0 : index
    %174 = vector.load %arg19[%173, %c0_51] : memref<8x128xf32, #tpu.memory_space<vmem>>, vector<1x128xf32>
    tpu.vector_store %arg19[%173, %c0_51], %172 {strides = array<i32>} : memref<8x128xf32, #tpu.memory_space<vmem>>, vector<1x128xf32>,
    %c4_i32 = arith.constant 4 : i32
    %175 = arith.index_cast %arg0 : i32 to index
    %176 = arith.index_cast %c4_i32 : i32 to index
    %177 = memref.load %arg1[%175, %176] : memref<2x8xf32, #tpu.memory_space<smem>>
    %178 = vector.broadcast %177 : f32 to vector<1x128xf32>
    %179 = arith.mulf %172, %178 : vector<1x128xf32>
    %180 = vector.broadcast %177 : f32 to vector<1x128xf32>
    %181 = arith.mulf %170, %180 : vector<1x128xf32>
    %182 = arith.index_cast %c4_i32 : i32 to index
    %c0_52 = arith.constant 0 : index
    %183 = vector.load %arg18[%182, %c0_52] : memref<8x512xf32, #tpu.memory_space<vmem>>, vector<1x512xf32>
    %c0_53 = arith.constant 0 : index
    %c0_54 = arith.constant 0 : index
    %184 = vector.load %arg9[%c0_53, %c0_54] : memref<128x512xf32, #tpu.memory_space<vmem>>, vector<128x512xf32>
    %cst_55 = arith.constant dense<0.000000e+00> : vector<1x512xf32>
    %185 = tpu.matmul %179, %184, %cst_55 {dimension_numbers = #tpu.dot_dimension_numbers<[1], [0], [0], [1], [0, 0, 1, 1], [], []>} : vector<1x128xf32>, vector<128x512xf32>, vector<1x512xf32> -> vector<1x512xf32>
    %186 = arith.addf %183, %185 : vector<1x512xf32>
    %187 = vector.extract_strided_slice %186 {offsets = [0, 0], sizes = [1, 128], strides = [1, 1]} : vector<1x512xf32> to vector<1x128xf32>
    %188 = arith.negf %187 : vector<1x128xf32>
    %189 = math.exp %188 : vector<1x128xf32>
    %cst_56 = arith.constant 1.000000e+00 : f32
    %190 = vector.broadcast %cst_56 : f32 to vector<1x128xf32>
    %191 = arith.addf %190, %189 : vector<1x128xf32>
    %192 = arith.divf %190, %191 : vector<1x128xf32>
    %193 = vector.extract_strided_slice %186 {offsets = [0, 128], sizes = [1, 128], strides = [1, 1]} : vector<1x512xf32> to vector<1x128xf32>
    %194 = arith.negf %193 : vector<1x128xf32>
    %195 = math.exp %194 : vector<1x128xf32>
    %cst_57 = arith.constant 1.000000e+00 : f32
    %196 = vector.broadcast %cst_57 : f32 to vector<1x128xf32>
    %197 = arith.addf %196, %195 : vector<1x128xf32>
    %198 = arith.divf %196, %197 : vector<1x128xf32>
    %199 = vector.extract_strided_slice %186 {offsets = [0, 256], sizes = [1, 128], strides = [1, 1]} : vector<1x512xf32> to vector<1x128xf32>
    %200 = math.tanh %199 : vector<1x128xf32>
    %201 = vector.extract_strided_slice %186 {offsets = [0, 384], sizes = [1, 128], strides = [1, 1]} : vector<1x512xf32> to vector<1x128xf32>
    %202 = arith.negf %201 : vector<1x128xf32>
    %203 = math.exp %202 : vector<1x128xf32>
    %cst_58 = arith.constant 1.000000e+00 : f32
    %204 = vector.broadcast %cst_58 : f32 to vector<1x128xf32>
    %205 = arith.addf %204, %203 : vector<1x128xf32>
    %206 = arith.divf %204, %205 : vector<1x128xf32>
    %207 = arith.mulf %198, %181 : vector<1x128xf32>
    %208 = arith.mulf %192, %200 : vector<1x128xf32>
    %209 = arith.addf %207, %208 : vector<1x128xf32>
    %210 = math.tanh %209 : vector<1x128xf32>
    %211 = arith.mulf %206, %210 : vector<1x128xf32>
    %212 = arith.index_cast %c4_i32 : i32 to index
    %c0_59 = arith.constant 0 : index
    %213 = vector.load %arg19[%212, %c0_59] : memref<8x128xf32, #tpu.memory_space<vmem>>, vector<1x128xf32>
    tpu.vector_store %arg19[%212, %c0_59], %211 {strides = array<i32>} : memref<8x128xf32, #tpu.memory_space<vmem>>, vector<1x128xf32>,
    %c5_i32 = arith.constant 5 : i32
    %214 = arith.index_cast %arg0 : i32 to index
    %215 = arith.index_cast %c5_i32 : i32 to index
    %216 = memref.load %arg1[%214, %215] : memref<2x8xf32, #tpu.memory_space<smem>>
    %217 = vector.broadcast %216 : f32 to vector<1x128xf32>
    %218 = arith.mulf %211, %217 : vector<1x128xf32>
    %219 = vector.broadcast %216 : f32 to vector<1x128xf32>
    %220 = arith.mulf %209, %219 : vector<1x128xf32>
    %221 = arith.index_cast %c5_i32 : i32 to index
    %c0_60 = arith.constant 0 : index
    %222 = vector.load %arg18[%221, %c0_60] : memref<8x512xf32, #tpu.memory_space<vmem>>, vector<1x512xf32>
    %c0_61 = arith.constant 0 : index
    %c0_62 = arith.constant 0 : index
    %223 = vector.load %arg9[%c0_61, %c0_62] : memref<128x512xf32, #tpu.memory_space<vmem>>, vector<128x512xf32>
    %cst_63 = arith.constant dense<0.000000e+00> : vector<1x512xf32>
    %224 = tpu.matmul %218, %223, %cst_63 {dimension_numbers = #tpu.dot_dimension_numbers<[1], [0], [0], [1], [0, 0, 1, 1], [], []>} : vector<1x128xf32>, vector<128x512xf32>, vector<1x512xf32> -> vector<1x512xf32>
    %225 = arith.addf %222, %224 : vector<1x512xf32>
    %226 = vector.extract_strided_slice %225 {offsets = [0, 0], sizes = [1, 128], strides = [1, 1]} : vector<1x512xf32> to vector<1x128xf32>
    %227 = arith.negf %226 : vector<1x128xf32>
    %228 = math.exp %227 : vector<1x128xf32>
    %cst_64 = arith.constant 1.000000e+00 : f32
    %229 = vector.broadcast %cst_64 : f32 to vector<1x128xf32>
    %230 = arith.addf %229, %228 : vector<1x128xf32>
    %231 = arith.divf %229, %230 : vector<1x128xf32>
    %232 = vector.extract_strided_slice %225 {offsets = [0, 128], sizes = [1, 128], strides = [1, 1]} : vector<1x512xf32> to vector<1x128xf32>
    %233 = arith.negf %232 : vector<1x128xf32>
    %234 = math.exp %233 : vector<1x128xf32>
    %cst_65 = arith.constant 1.000000e+00 : f32
    %235 = vector.broadcast %cst_65 : f32 to vector<1x128xf32>
    %236 = arith.addf %235, %234 : vector<1x128xf32>
    %237 = arith.divf %235, %236 : vector<1x128xf32>
    %238 = vector.extract_strided_slice %225 {offsets = [0, 256], sizes = [1, 128], strides = [1, 1]} : vector<1x512xf32> to vector<1x128xf32>
    %239 = math.tanh %238 : vector<1x128xf32>
    %240 = vector.extract_strided_slice %225 {offsets = [0, 384], sizes = [1, 128], strides = [1, 1]} : vector<1x512xf32> to vector<1x128xf32>
    %241 = arith.negf %240 : vector<1x128xf32>
    %242 = math.exp %241 : vector<1x128xf32>
    %cst_66 = arith.constant 1.000000e+00 : f32
    %243 = vector.broadcast %cst_66 : f32 to vector<1x128xf32>
    %244 = arith.addf %243, %242 : vector<1x128xf32>
    %245 = arith.divf %243, %244 : vector<1x128xf32>
    %246 = arith.mulf %237, %220 : vector<1x128xf32>
    %247 = arith.mulf %231, %239 : vector<1x128xf32>
    %248 = arith.addf %246, %247 : vector<1x128xf32>
    %249 = math.tanh %248 : vector<1x128xf32>
    %250 = arith.mulf %245, %249 : vector<1x128xf32>
    %251 = arith.index_cast %c5_i32 : i32 to index
    %c0_67 = arith.constant 0 : index
    %252 = vector.load %arg19[%251, %c0_67] : memref<8x128xf32, #tpu.memory_space<vmem>>, vector<1x128xf32>
    tpu.vector_store %arg19[%251, %c0_67], %250 {strides = array<i32>} : memref<8x128xf32, #tpu.memory_space<vmem>>, vector<1x128xf32>,
    %c6_i32 = arith.constant 6 : i32
    %253 = arith.index_cast %arg0 : i32 to index
    %254 = arith.index_cast %c6_i32 : i32 to index
    %255 = memref.load %arg1[%253, %254] : memref<2x8xf32, #tpu.memory_space<smem>>
    %256 = vector.broadcast %255 : f32 to vector<1x128xf32>
    %257 = arith.mulf %250, %256 : vector<1x128xf32>
    %258 = vector.broadcast %255 : f32 to vector<1x128xf32>
    %259 = arith.mulf %248, %258 : vector<1x128xf32>
    %260 = arith.index_cast %c6_i32 : i32 to index
    %c0_68 = arith.constant 0 : index
    %261 = vector.load %arg18[%260, %c0_68] : memref<8x512xf32, #tpu.memory_space<vmem>>, vector<1x512xf32>
    %c0_69 = arith.constant 0 : index
    %c0_70 = arith.constant 0 : index
    %262 = vector.load %arg9[%c0_69, %c0_70] : memref<128x512xf32, #tpu.memory_space<vmem>>, vector<128x512xf32>
    %cst_71 = arith.constant dense<0.000000e+00> : vector<1x512xf32>
    %263 = tpu.matmul %257, %262, %cst_71 {dimension_numbers = #tpu.dot_dimension_numbers<[1], [0], [0], [1], [0, 0, 1, 1], [], []>} : vector<1x128xf32>, vector<128x512xf32>, vector<1x512xf32> -> vector<1x512xf32>
    %264 = arith.addf %261, %263 : vector<1x512xf32>
    %265 = vector.extract_strided_slice %264 {offsets = [0, 0], sizes = [1, 128], strides = [1, 1]} : vector<1x512xf32> to vector<1x128xf32>
    %266 = arith.negf %265 : vector<1x128xf32>
    %267 = math.exp %266 : vector<1x128xf32>
    %cst_72 = arith.constant 1.000000e+00 : f32
    %268 = vector.broadcast %cst_72 : f32 to vector<1x128xf32>
    %269 = arith.addf %268, %267 : vector<1x128xf32>
    %270 = arith.divf %268, %269 : vector<1x128xf32>
    %271 = vector.extract_strided_slice %264 {offsets = [0, 128], sizes = [1, 128], strides = [1, 1]} : vector<1x512xf32> to vector<1x128xf32>
    %272 = arith.negf %271 : vector<1x128xf32>
    %273 = math.exp %272 : vector<1x128xf32>
    %cst_73 = arith.constant 1.000000e+00 : f32
    %274 = vector.broadcast %cst_73 : f32 to vector<1x128xf32>
    %275 = arith.addf %274, %273 : vector<1x128xf32>
    %276 = arith.divf %274, %275 : vector<1x128xf32>
    %277 = vector.extract_strided_slice %264 {offsets = [0, 256], sizes = [1, 128], strides = [1, 1]} : vector<1x512xf32> to vector<1x128xf32>
    %278 = math.tanh %277 : vector<1x128xf32>
    %279 = vector.extract_strided_slice %264 {offsets = [0, 384], sizes = [1, 128], strides = [1, 1]} : vector<1x512xf32> to vector<1x128xf32>
    %280 = arith.negf %279 : vector<1x128xf32>
    %281 = math.exp %280 : vector<1x128xf32>
    %cst_74 = arith.constant 1.000000e+00 : f32
    %282 = vector.broadcast %cst_74 : f32 to vector<1x128xf32>
    %283 = arith.addf %282, %281 : vector<1x128xf32>
    %284 = arith.divf %282, %283 : vector<1x128xf32>
    %285 = arith.mulf %276, %259 : vector<1x128xf32>
    %286 = arith.mulf %270, %278 : vector<1x128xf32>
    %287 = arith.addf %285, %286 : vector<1x128xf32>
    %288 = math.tanh %287 : vector<1x128xf32>
    %289 = arith.mulf %284, %288 : vector<1x128xf32>
    %290 = arith.index_cast %c6_i32 : i32 to index
    %c0_75 = arith.constant 0 : index
    %291 = vector.load %arg19[%290, %c0_75] : memref<8x128xf32, #tpu.memory_space<vmem>>, vector<1x128xf32>
    tpu.vector_store %arg19[%290, %c0_75], %289 {strides = array<i32>} : memref<8x128xf32, #tpu.memory_space<vmem>>, vector<1x128xf32>,
    %c7_i32 = arith.constant 7 : i32
    %292 = arith.index_cast %arg0 : i32 to index
    %293 = arith.index_cast %c7_i32 : i32 to index
    %294 = memref.load %arg1[%292, %293] : memref<2x8xf32, #tpu.memory_space<smem>>
    %295 = vector.broadcast %294 : f32 to vector<1x128xf32>
    %296 = arith.mulf %289, %295 : vector<1x128xf32>
    %297 = vector.broadcast %294 : f32 to vector<1x128xf32>
    %298 = arith.mulf %287, %297 : vector<1x128xf32>
    %299 = arith.index_cast %c7_i32 : i32 to index
    %c0_76 = arith.constant 0 : index
    %300 = vector.load %arg18[%299, %c0_76] : memref<8x512xf32, #tpu.memory_space<vmem>>, vector<1x512xf32>
    %c0_77 = arith.constant 0 : index
    %c0_78 = arith.constant 0 : index
    %301 = vector.load %arg9[%c0_77, %c0_78] : memref<128x512xf32, #tpu.memory_space<vmem>>, vector<128x512xf32>
    %cst_79 = arith.constant dense<0.000000e+00> : vector<1x512xf32>
    %302 = tpu.matmul %296, %301, %cst_79 {dimension_numbers = #tpu.dot_dimension_numbers<[1], [0], [0], [1], [0, 0, 1, 1], [], []>} : vector<1x128xf32>, vector<128x512xf32>, vector<1x512xf32> -> vector<1x512xf32>
    %303 = arith.addf %300, %302 : vector<1x512xf32>
    %304 = vector.extract_strided_slice %303 {offsets = [0, 0], sizes = [1, 128], strides = [1, 1]} : vector<1x512xf32> to vector<1x128xf32>
    %305 = arith.negf %304 : vector<1x128xf32>
    %306 = math.exp %305 : vector<1x128xf32>
    %cst_80 = arith.constant 1.000000e+00 : f32
    %307 = vector.broadcast %cst_80 : f32 to vector<1x128xf32>
    %308 = arith.addf %307, %306 : vector<1x128xf32>
    %309 = arith.divf %307, %308 : vector<1x128xf32>
    %310 = vector.extract_strided_slice %303 {offsets = [0, 128], sizes = [1, 128], strides = [1, 1]} : vector<1x512xf32> to vector<1x128xf32>
    %311 = arith.negf %310 : vector<1x128xf32>
    %312 = math.exp %311 : vector<1x128xf32>
    %cst_81 = arith.constant 1.000000e+00 : f32
    %313 = vector.broadcast %cst_81 : f32 to vector<1x128xf32>
    %314 = arith.addf %313, %312 : vector<1x128xf32>
    %315 = arith.divf %313, %314 : vector<1x128xf32>
    %316 = vector.extract_strided_slice %303 {offsets = [0, 256], sizes = [1, 128], strides = [1, 1]} : vector<1x512xf32> to vector<1x128xf32>
    %317 = math.tanh %316 : vector<1x128xf32>
    %318 = vector.extract_strided_slice %303 {offsets = [0, 384], sizes = [1, 128], strides = [1, 1]} : vector<1x512xf32> to vector<1x128xf32>
    %319 = arith.negf %318 : vector<1x128xf32>
    %320 = math.exp %319 : vector<1x128xf32>
    %cst_82 = arith.constant 1.000000e+00 : f32
    %321 = vector.broadcast %cst_82 : f32 to vector<1x128xf32>
    %322 = arith.addf %321, %320 : vector<1x128xf32>
    %323 = arith.divf %321, %322 : vector<1x128xf32>
    %324 = arith.mulf %315, %298 : vector<1x128xf32>
    %325 = arith.mulf %309, %317 : vector<1x128xf32>
    %326 = arith.addf %324, %325 : vector<1x128xf32>
    %327 = math.tanh %326 : vector<1x128xf32>
    %328 = arith.mulf %323, %327 : vector<1x128xf32>
    %329 = arith.index_cast %c7_i32 : i32 to index
    %c0_83 = arith.constant 0 : index
    %330 = vector.load %arg19[%329, %c0_83] : memref<8x128xf32, #tpu.memory_space<vmem>>, vector<1x128xf32>
    tpu.vector_store %arg19[%329, %c0_83], %328 {strides = array<i32>} : memref<8x128xf32, #tpu.memory_space<vmem>>, vector<1x128xf32>,
    %c8_i32 = arith.constant 8 : i32
    %c0_84 = arith.constant 0 : index
    %c0_85 = arith.constant 0 : index
    %331 = vector.load %arg19[%c0_84, %c0_85] : memref<8x128xf32, #tpu.memory_space<vmem>>, vector<8x128xf32>
    %c0_86 = arith.constant 0 : index
    %c0_87 = arith.constant 0 : index
    %332 = vector.load %arg10[%c0_86, %c0_87] : memref<128x8xf32, #tpu.memory_space<vmem>>, vector<128x8xf32>
    %cst_88 = arith.constant dense<0.000000e+00> : vector<8x8xf32>
    %333 = tpu.matmul %331, %332, %cst_88 {dimension_numbers = #tpu.dot_dimension_numbers<[1], [0], [0], [1], [0, 0, 1, 1], [], []>} : vector<8x128xf32>, vector<128x8xf32>, vector<8x8xf32> -> vector<8x8xf32>
    %c0_89 = arith.constant 0 : index
    %c0_90 = arith.constant 0 : index
    %334 = vector.load %arg11[%c0_89, %c0_90] : memref<1x8xf32, #tpu.memory_space<vmem>>, vector<1x8xf32>
    %335 = vector.broadcast %334 : vector<1x8xf32> to vector<8x8xf32>
    %336 = arith.addf %333, %335 : vector<8x8xf32>
    %cst_91 = arith.constant dense<0xFF800000> : vector<8xf32>
    %337 = vector.multi_reduction <maximumf>, %336, %cst_91 [1] : vector<8x8xf32> to vector<8xf32>
    %338 = vector.shape_cast %337 : vector<8xf32> to vector<8x1xf32>
    %339 = vector.broadcast %338 : vector<8x1xf32> to vector<8x8xf32>
    %340 = arith.subf %336, %339 : vector<8x8xf32>
    %341 = math.exp %340 : vector<8x8xf32>
    %cst_92 = arith.constant dense<0.000000e+00> : vector<8xf32>
    %342 = vector.multi_reduction <add>, %341, %cst_92 [1] : vector<8x8xf32> to vector<8xf32>
    %343 = vector.shape_cast %342 : vector<8xf32> to vector<8x1xf32>
    %344 = vector.broadcast %343 : vector<8x1xf32> to vector<8x8xf32>
    %345 = arith.divf %341, %344 : vector<8x8xf32>
    %c0_93 = arith.constant 0 : index
    %c0_94 = arith.constant 0 : index
    %c0_95 = arith.constant 0 : index
    %346 = vector.load %arg14[%c0_93, %c0_94, %c0_95] : memref<1x8x8xf32, #tpu.memory_space<vmem>>, vector<1x8x8xf32>
    %347 = vector.shape_cast %346 : vector<1x8x8xf32> to vector<8x8xf32>
    %348 = vector.shape_cast %345 : vector<8x8xf32> to vector<1x8x8xf32>
    tpu.vector_store %arg14[%c0_93, %c0_94, %c0_95], %348 {strides = array<i32>} : memref<1x8x8xf32, #tpu.memory_space<vmem>>, vector<1x8x8xf32>,
    %c0_96 = arith.constant 0 : index
    %c0_97 = arith.constant 0 : index
    %349 = vector.load %arg12[%c0_96, %c0_97] : memref<128x1xf32, #tpu.memory_space<vmem>>, vector<128x1xf32>
    %cst_98 = arith.constant dense<0.000000e+00> : vector<8x1xf32>
    %350 = tpu.matmul %331, %349, %cst_98 {dimension_numbers = #tpu.dot_dimension_numbers<[1], [0], [0], [1], [0, 0, 1, 1], [], []>} : vector<8x128xf32>, vector<128x1xf32>, vector<8x1xf32> -> vector<8x1xf32>
    %c0_99 = arith.constant 0 : index
    %c0_100 = arith.constant 0 : index
    %351 = vector.load %arg13[%c0_99, %c0_100] : memref<1x1xf32, #tpu.memory_space<vmem>>, vector<1x1xf32>
    %352 = vector.broadcast %351 : vector<1x1xf32> to vector<8x1xf32>
    %353 = arith.addf %350, %352 : vector<8x1xf32>
    %c0_101 = arith.constant 0 : index
    %c0_102 = arith.constant 0 : index
    %c0_103 = arith.constant 0 : index
    %354 = vector.load %arg15[%c0_101, %c0_102, %c0_103] : memref<1x8x1xf32, #tpu.memory_space<vmem>>, vector<1x8x1xf32>
    %355 = vector.shape_cast %354 : vector<1x8x1xf32> to vector<8x1xf32>
    %356 = vector.shape_cast %353 : vector<8x1xf32> to vector<1x8x1xf32>
    tpu.vector_store %arg15[%c0_101, %c0_102, %c0_103], %356 {strides = array<i32>} : memref<1x8x1xf32, #tpu.memory_space<vmem>>, vector<1x8x1xf32>,
    %c0_104 = arith.constant 0 : index
    %c0_105 = arith.constant 0 : index
    %c0_106 = arith.constant 0 : index
    %357 = vector.load %arg16[%c0_104, %c0_105, %c0_106] : memref<1x1x128xf32, #tpu.memory_space<vmem>>, vector<1x1x128xf32>
    %358 = vector.shape_cast %357 : vector<1x1x128xf32> to vector<1x128xf32>
    %359 = vector.shape_cast %328 : vector<1x128xf32> to vector<1x1x128xf32>
    tpu.vector_store %arg16[%c0_104, %c0_105, %c0_106], %359 {strides = array<i32>} : memref<1x1x128xf32, #tpu.memory_space<vmem>>, vector<1x1x128xf32>,
    %c0_107 = arith.constant 0 : index
    %c0_108 = arith.constant 0 : index
    %c0_109 = arith.constant 0 : index
    %360 = vector.load %arg17[%c0_107, %c0_108, %c0_109] : memref<1x1x128xf32, #tpu.memory_space<vmem>>, vector<1x1x128xf32>
    %361 = vector.shape_cast %360 : vector<1x1x128xf32> to vector<1x128xf32>
    %362 = vector.shape_cast %326 : vector<1x128xf32> to vector<1x1x128xf32>
    tpu.vector_store %arg17[%c0_107, %c0_108, %c0_109], %362 {strides = array<i32>} : memref<1x1x128xf32, #tpu.memory_space<vmem>>, vector<1x1x128xf32>,
    return
  }
  func.func @transform_0(%arg0: i32) -> (i32, i32) {
    %c0_i32 = arith.constant 0 : i32
    %c0_i32_0 = arith.constant 0 : i32
    %c0_i32_1 = arith.constant 0 : i32
    return %c0_i32, %c0_i32_0 : i32, i32
  }
  func.func @transform_1(%arg0: i32) -> (i32, i32, i32) {
    %c0_i32 = arith.constant 0 : i32
    %c0_i32_0 = arith.constant 0 : i32
    %c0_i32_1 = arith.constant 0 : i32
    return %arg0, %c0_i32, %c0_i32_0 : i32, i32, i32
  }
  func.func @transform_2(%arg0: i32) -> (i32, i32, i32) {
    %c0_i32 = arith.constant 0 : i32
    %c0_i32_0 = arith.constant 0 : i32
    %c0_i32_1 = arith.constant 0 : i32
    return %arg0, %c0_i32, %c0_i32_0 : i32, i32, i32
  }
  func.func @transform_3(%arg0: i32) -> (i32, i32, i32) {
    %c0_i32 = arith.constant 0 : i32
    %c0_i32_0 = arith.constant 0 : i32
    %c0_i32_1 = arith.constant 0 : i32
    return %arg0, %c0_i32, %c0_i32_0 : i32, i32, i32
  }
  func.func @transform_4(%arg0: i32) -> (i32, i32) {
    %c0_i32 = arith.constant 0 : i32
    %c0_i32_0 = arith.constant 0 : i32
    %c0_i32_1 = arith.constant 0 : i32
    return %c0_i32, %c0_i32_0 : i32, i32
  }
  func.func @transform_5(%arg0: i32) -> (i32, i32) {
    %c0_i32 = arith.constant 0 : i32
    %c0_i32_0 = arith.constant 0 : i32
    %c0_i32_1 = arith.constant 0 : i32
    return %c0_i32, %c0_i32_0 : i32, i32
  }
  func.func @transform_6(%arg0: i32) -> (i32, i32) {
    %c0_i32 = arith.constant 0 : i32
    %c0_i32_0 = arith.constant 0 : i32
    %c0_i32_1 = arith.constant 0 : i32
    return %c0_i32, %c0_i32_0 : i32, i32
  }
  func.func @transform_7(%arg0: i32) -> (i32, i32) {
    %c0_i32 = arith.constant 0 : i32
    %c0_i32_0 = arith.constant 0 : i32
    %c0_i32_1 = arith.constant 0 : i32
    return %c0_i32, %c0_i32_0 : i32, i32
  }
  func.func @transform_8(%arg0: i32) -> (i32, i32) {
    %c0_i32 = arith.constant 0 : i32
    %c0_i32_0 = arith.constant 0 : i32
    %c0_i32_1 = arith.constant 0 : i32
    return %c0_i32, %c0_i32_0 : i32, i32
  }
  func.func @transform_9(%arg0: i32) -> (i32, i32) {
    %c0_i32 = arith.constant 0 : i32
    %c0_i32_0 = arith.constant 0 : i32
    %c0_i32_1 = arith.constant 0 : i32
    return %c0_i32, %c0_i32_0 : i32, i32
  }
  func.func @transform_10(%arg0: i32) -> (i32, i32) {
    %c0_i32 = arith.constant 0 : i32
    %c0_i32_0 = arith.constant 0 : i32
    %c0_i32_1 = arith.constant 0 : i32
    return %c0_i32, %c0_i32_0 : i32, i32
  }
  func.func @transform_11(%arg0: i32) -> (i32, i32) {
    %c0_i32 = arith.constant 0 : i32
    %c0_i32_0 = arith.constant 0 : i32
    %c0_i32_1 = arith.constant 0 : i32
    return %c0_i32, %c0_i32_0 : i32, i32
  }
  func.func @transform_12(%arg0: i32) -> (i32, i32) {
    %c0_i32 = arith.constant 0 : i32
    %c0_i32_0 = arith.constant 0 : i32
    %c0_i32_1 = arith.constant 0 : i32
    return %c0_i32, %c0_i32_0 : i32, i32
  }
  func.func @transform_13(%arg0: i32) -> (i32, i32, i32) {
    %c0_i32 = arith.constant 0 : i32
    %c0_i32_0 = arith.constant 0 : i32
    %c0_i32_1 = arith.constant 0 : i32
    return %arg0, %c0_i32, %c0_i32_0 : i32, i32, i32
  }
  func.func @transform_14(%arg0: i32) -> (i32, i32, i32) {
    %c0_i32 = arith.constant 0 : i32
    %c0_i32_0 = arith.constant 0 : i32
    %c0_i32_1 = arith.constant 0 : i32
    return %arg0, %c0_i32, %c0_i32_0 : i32, i32, i32
  }
  func.func @transform_15(%arg0: i32) -> (i32, i32, i32) {
    %c0_i32 = arith.constant 0 : i32
    %c0_i32_0 = arith.constant 0 : i32
    %c0_i32_1 = arith.constant 0 : i32
    return %arg0, %c0_i32, %c0_i32_0 : i32, i32, i32
  }
  func.func @transform_16(%arg0: i32) -> (i32, i32, i32) {
    %c0_i32 = arith.constant 0 : i32
    %c0_i32_0 = arith.constant 0 : i32
    %c0_i32_1 = arith.constant 0 : i32
    return %arg0, %c0_i32, %c0_i32_0 : i32, i32, i32
  }
}

</mosaic_0001>

<llo_original>
// kernel: tpu_custom_call.1
$region0: #{tpu_custom_call.1}
  #allocation0 [shape = 'u32[]', space=smem, size = 0x4, offset = 0x4, fixed_abs, tag = 'smem constant byte address 0x4 - core index']
  #allocation1 [shape = 'u32[144,128]{1,0:T(1,128)}', space=vmem, size = 0x12000, scoped, tag = 'internal scratch']
  #allocation2 [shape = 'f32[8,512]{1,0:T(8,128)}', space=vmem, size = 0x4000, scoped, tag = 'scratch operand']
  #allocation3 [shape = 'f32[8,128]{1,0:T(8,128)}', space=vmem, size = 0x1000, scoped, tag = 'scratch operand']
  #allocation4 [shape = 'f32[1,1]{1,0:T(1,128)S(1)}', space=vmem, size = 0x200, scoped, tag = 'scoped memory for tpu_custom_call.1']
  %s0 = inlined_call_operand.hbm [shape: f32[2,8], index: 0, kind: input, shape index: {}]
  %s1 = inlined_call_operand.vmem [shape: f32[2,8,16], index: 1, kind: input, shape index: {}]
  %s2 = inlined_call_operand.hbm [shape: f32[2,1,128], index: 2, kind: input, shape index: {}]
  %s3 = inlined_call_operand.hbm [shape: f32[2,1,128], index: 3, kind: input, shape index: {}]
  %s4 = inlined_call_operand.hbm [shape: f32[16,64], index: 4, kind: input, shape index: {}]
  %s5 = inlined_call_operand.vmem [shape: f32[1,64], index: 5, kind: input, shape index: {}]
  %s6 = inlined_call_operand.vmem [shape: f32[64,512], index: 6, kind: input, shape index: {}]
  %s7 = inlined_call_operand.hbm [shape: f32[1,512], index: 7, kind: input, shape index: {}]
  %s8 = inlined_call_operand.hbm [shape: f32[128,512], index: 8, kind: input, shape index: {}]
  %s9 = inlined_call_operand.vmem [shape: f32[128,8], index: 9, kind: input, shape index: {}]
  %s10 = inlined_call_operand.vmem [shape: f32[1,8], index: 10, kind: input, shape index: {}]
  %s11 = inlined_call_operand.vmem [shape: f32[128,1], index: 11, kind: input, shape index: {}]
  %s12 = inlined_call_operand.<no memory space> [shape: f32[1,1], index: 12, kind: input, shape index: {}]
  %s13 = inlined_call_operand.hbm [shape: f32[2,8,8], index: 13, kind: output, shape index: {0}]
  %s14 = inlined_call_operand.vmem [shape: f32[2,8,1], index: 14, kind: output, shape index: {1}]
  %s15 = inlined_call_operand.hbm [shape: f32[2,1,128], index: 15, kind: output, shape index: {2}]
  %s16 = inlined_call_operand.hbm [shape: f32[2,1,128], index: 16, kind: output, shape index: {3}]
  %17 = xla_tuple %s13, %s14, %s15, %s16
  %s18 = sld [smem:[#allocation0]]
  $region133: #{tpu_custom_call.1} parent=0
    _
  %s20 = ssub.s32 1, %s18
  %s21 = scalar_select 0, %s20, %s18
  %v22 = vstv %s12
  %23 = vst [vmem:[#allocation4] sm:$0x1] %v22
  $region1: #{tpu_custom_call.1} parent=0
    #allocation5 [shape = 'u8[1024]{0}', space=smem, size = 0x400, scoped, tag = 'input window, operand 0, single buffered']
    #allocation6 [shape = 's32[2]{0}', space=sflag, size = 0x8, scoped, tag = 'scoped memory for tpu_custom_call.1']
    #allocation7 [shape = 's32[2]{0}', space=sflag, size = 0x8, scoped, tag = 'scoped memory for tpu_custom_call.1']
    #allocation8 [shape = 's32[2]{0}', space=sflag, size = 0x8, scoped, tag = 'scoped memory for tpu_custom_call.1']
    #allocation9 [shape = 'u8[1024]{0}', space=vmem, size = 0x400, scoped, tag = 'input window, operand 2']
    #allocation10 [shape = 'u8[1024]{0}', space=vmem, size = 0x400, scoped, tag = 'input window, operand 3']
    #allocation11 [shape = 's32[2]{0}', space=sflag, size = 0x8, scoped, tag = 'scoped memory for tpu_custom_call.1']
    #allocation12 [shape = 'u8[8192]{0}', space=vmem, size = 0x2000, scoped, tag = 'input window, operand 4, single buffered']
    #allocation13 [shape = 'u8[2048]{0}', space=vmem, size = 0x800, scoped, tag = 'input window, operand 7, single buffered']
    #allocation14 [shape = 's32[1]{0}', space=sflag, size = 0x4, scoped, tag = 'scoped memory for tpu_custom_call.1']
    #allocation15 [shape = 'u8[262144]{0}', space=vmem, size = 0x40000, scoped, tag = 'input window, operand 8, single buffered']
    #allocation16 [shape = 'u8[8192]{0}', space=vmem, size = 0x2000, scoped, tag = 'output window, operand 0']
    #allocation17 [shape = 'u8[1024]{0}', space=vmem, size = 0x400, scoped, tag = 'output window, operand 2']
    #allocation18 [shape = 's32[2]{0}', space=sflag, size = 0x8, scoped, tag = 'scoped memory for tpu_custom_call.1']
    #allocation19 [shape = 'u8[1024]{0}', space=vmem, size = 0x400, scoped, tag = 'output window, operand 3']
    %24 = vsyncpa [#allocation8], 0
    %25 = vsyncpa [#allocation6], 0
    %s26 = scalar_lea.sflag [#allocation6], 1
    %27 = vsyncpa %s26, 0
    %28 = vsyncpa [#allocation11], 0
    %s29 = scalar_lea.sflag [#allocation11], 1
    %30 = vsyncpa %s29, 0
    %31 = vsyncpa [#allocation14], 0
    %32 = vsyncpa [#allocation7], 0
    %s33 = scalar_lea.sflag [#allocation7], 1
    %34 = vsyncpa %s33, 0
    %35 = vsyncpa [#allocation18], 0
    %s36 = scalar_lea.sflag [#allocation18], 1
    %37 = vsyncpa %s36, 0
    loop: start=0, step=1, limit=4
    $region2: #{tpu_custom_call.1} parent=1 // loop_pre_header
      _
    $region3: #{tpu_custom_call.1} parent=1 // loop_header
      %s39 = sphi 0, %s43
      %p40 = scmp.ge.s32.totalorder %s39, 4
      %s47 = sphi 0, %s47
      %s49 = sphi 0, %s47
      %s50 = sphi 0, %s49
      %s64 = sphi 0, %s50
      %s70 = sphi 0, %s72
      %s73 = sphi 0, %s70
      %s74 = sphi 0, %s73
      %s90 = sphi 0, %s74
      %s96 = sphi 0, %s98
      %s99 = sphi 0, %s96
      %s100 = sphi 0, %s99
      %s116 = sphi 0, %s100
      %s122 = sphi 0, %s124
      %s125 = sphi 0, %s122
      %s126 = sphi 0, %s125
      %s142 = sphi 0, %s126
      %s146 = sphi 0, %s146
      %s148 = sphi 0, %s146
      %s149 = sphi 0, %s148
      %s163 = sphi 0, %s149
      %s167 = sphi 0, %s167
      %s169 = sphi 0, %s167
      %s170 = sphi 0, %s169
      %s184 = sphi 0, %s170
      %s188 = sphi 0, %s188
      %s190 = sphi 0, %s188
      %s191 = sphi 0, %s190
      %s205 = sphi 0, %s191
      %s209 = sphi 0, %s209
      %s211 = sphi 0, %s209
      %s212 = sphi 0, %s211
      %s226 = sphi 0, %s212
      %s230 = sphi 0, %s230
      %s232 = sphi 0, %s230
      %s233 = sphi 0, %s232
      %s247 = sphi 0, %s233
      %s251 = sphi 0, %s251
      %s253 = sphi 0, %s251
      %s254 = sphi 0, %s253
      %s268 = sphi 0, %s254
      %s272 = sphi 0, %s272
      %s274 = sphi 0, %s272
      %s275 = sphi 0, %s274
      %s289 = sphi 0, %s275
      %s293 = sphi 0, %s293
      %s295 = sphi 0, %s293
      %s296 = sphi 0, %s295
      %s310 = sphi 0, %s296
      %s314 = sphi 0, %s314
      %s316 = sphi 0, %s314
      %s317 = sphi 0, %s316
      %s331 = sphi 0, %s317
      %s337 = sphi 0, %s339
      %s340 = sphi 0, %s337
      %s341 = sphi 0, %s340
      %s357 = sphi 0, %s341
      %s363 = sphi 0, %s365
      %s366 = sphi 0, %s363
      %s367 = sphi 0, %s366
      %s383 = sphi 0, %s367
      %s389 = sphi 0, %s391
      %s392 = sphi 0, %s389
      %s393 = sphi 0, %s392
      %s409 = sphi 0, %s393
      %s415 = sphi 0, %s417
      %s418 = sphi 0, %s415
      %s419 = sphi 0, %s418
      %s435 = sphi 0, %s419
    $region4: #{tpu_custom_call.1} parent=1 // loop_header_branch
      %42 = sbr.rel (%p40) target = $region8
    $region5: #{tpu_custom_call.1} parent=1 // loop_body
      %s44 = ssub.s32 %s39, 1
      %s45 = ssub.s32 %s39, 2
      %s46 = sadd.s32 %s39, 1
      %s48 = sadd.s32 %s47, 1
      %p51 = scmp.eq.s32.totalorder %s39, 1
      %p52 = scmp.ne.s32.totalorder %s47, %s49
      %p53 = scmp.eq.s32.totalorder %s39, 0
      %p54 = por %p52, %p53
      %p55 = scmp.ne.s32.totalorder %s47, %s49
      %p56 = scmp.eq.s32.totalorder %s44, 1
      %p57 = por %p55, %p56
      %p58 = scmp.ne.s32.totalorder %s49, %s50
      %p59 = scmp.eq.s32.totalorder %s44, 0
      %p60 = por %p58, %p59
      %p61 = scmp.ne.s32.totalorder %s49, %s50
      %p62 = scmp.eq.s32.totalorder %s45, 1
      %p63 = por %p61, %p62
      %p65 = scmp.ne.s32.totalorder %s50, %s64
      %p66 = scmp.eq.s32.totalorder %s45, 0
      %p67 = por %p65, %p66
      %s68 = ssub.s32 %s39, %s46
      %p69 = scmp.eq.s32.totalorder %s68, 0
      %s71 = sadd.s32 %s70, 1
      %s72 = scalar_select %p69, %s70, %s71
      %p75 = pneg %p69
      %p76 = scmp.eq.s32.totalorder %s39, 1
      %p77 = por %p75, %p76
      %p78 = scmp.ne.s32.totalorder %s70, %s73
      %p79 = scmp.eq.s32.totalorder %s39, 0
      %p80 = por %p78, %p79
      %p81 = scmp.ne.s32.totalorder %s70, %s73
      %p82 = scmp.eq.s32.totalorder %s44, 1
      %p83 = por %p81, %p82
      %p84 = scmp.ne.s32.totalorder %s73, %s74
      %p85 = scmp.eq.s32.totalorder %s44, 0
      %p86 = por %p84, %p85
      %p87 = scmp.ne.s32.totalorder %s73, %s74
      %p88 = scmp.eq.s32.totalorder %s45, 1
      %p89 = por %p87, %p88
      %p91 = scmp.ne.s32.totalorder %s74, %s90
      %p92 = scmp.eq.s32.totalorder %s45, 0
      %p93 = por %p91, %p92
      %s94 = ssub.s32 %s39, %s46
      %p95 = scmp.eq.s32.totalorder %s94, 0
      %s97 = sadd.s32 %s96, 1
      %s98 = scalar_select %p95, %s96, %s97
      %p101 = pneg %p95
      %p102 = scmp.eq.s32.totalorder %s39, 1
      %p103 = por %p101, %p102
      %p104 = scmp.ne.s32.totalorder %s96, %s99
      %p105 = scmp.eq.s32.totalorder %s39, 0
      %p106 = por %p104, %p105
      %p107 = scmp.ne.s32.totalorder %s96, %s99
      %p108 = scmp.eq.s32.totalorder %s44, 1
      %p109 = por %p107, %p108
      %p110 = scmp.ne.s32.totalorder %s99, %s100
      %p111 = scmp.eq.s32.totalorder %s44, 0
      %p112 = por %p110, %p111
      %p113 = scmp.ne.s32.totalorder %s99, %s100
      %p114 = scmp.eq.s32.totalorder %s45, 1
      %p115 = por %p113, %p114
      %p117 = scmp.ne.s32.totalorder %s100, %s116
      %p118 = scmp.eq.s32.totalorder %s45, 0
      %p119 = por %p117, %p118
      %s120 = ssub.s32 %s39, %s46
      %p121 = scmp.eq.s32.totalorder %s120, 0
      %s123 = sadd.s32 %s122, 1
      %s124 = scalar_select %p121, %s122, %s123
      %p127 = pneg %p121
      %p128 = scmp.eq.s32.totalorder %s39, 1
      %p129 = por %p127, %p128
      %p130 = scmp.ne.s32.totalorder %s122, %s125
      %p131 = scmp.eq.s32.totalorder %s39, 0
      %p132 = por %p130, %p131
      %p133 = scmp.ne.s32.totalorder %s122, %s125
      %p134 = scmp.eq.s32.totalorder %s44, 1
      %p135 = por %p133, %p134
      %p136 = scmp.ne.s32.totalorder %s125, %s126
      %p137 = scmp.eq.s32.totalorder %s44, 0
      %p138 = por %p136, %p137
      %p139 = scmp.ne.s32.totalorder %s125, %s126
      %p140 = scmp.eq.s32.totalorder %s45, 1
      %p141 = por %p139, %p140
      %p143 = scmp.ne.s32.totalorder %s126, %s142
      %p144 = scmp.eq.s32.totalorder %s45, 0
      %p145 = por %p143, %p144
      %s147 = sadd.s32 %s146, 1
      %p150 = scmp.eq.s32.totalorder %s39, 1
      %p151 = scmp.ne.s32.totalorder %s146, %s148
      %p152 = scmp.eq.s32.totalorder %s39, 0
      %p153 = por %p151, %p152
      %p154 = scmp.ne.s32.totalorder %s146, %s148
      %p155 = scmp.eq.s32.totalorder %s44, 1
      %p156 = por %p154, %p155
      %p157 = scmp.ne.s32.totalorder %s148, %s149
      %p158 = scmp.eq.s32.totalorder %s44, 0
      %p159 = por %p157, %p158
      %p160 = scmp.ne.s32.totalorder %s148, %s149
      %p161 = scmp.eq.s32.totalorder %s45, 1
      %p162 = por %p160, %p161
      %p164 = scmp.ne.s32.totalorder %s149, %s163
      %p165 = scmp.eq.s32.totalorder %s45, 0
      %p166 = por %p164, %p165
      %s168 = sadd.s32 %s167, 1
      %p171 = scmp.eq.s32.totalorder %s39, 1
      %p172 = scmp.ne.s32.totalorder %s167, %s169
      %p173 = scmp.eq.s32.totalorder %s39, 0
      %p174 = por %p172, %p173
      %p175 = scmp.ne.s32.totalorder %s167, %s169
      %p176 = scmp.eq.s32.totalorder %s44, 1
      %p177 = por %p175, %p176
      %p178 = scmp.ne.s32.totalorder %s169, %s170
      %p179 = scmp.eq.s32.totalorder %s44, 0
      %p180 = por %p178, %p179
      %p181 = scmp.ne.s32.totalorder %s169, %s170
      %p182 = scmp.eq.s32.totalorder %s45, 1
      %p183 = por %p181, %p182
      %p185 = scmp.ne.s32.totalorder %s170, %s184
      %p186 = scmp.eq.s32.totalorder %s45, 0
      %p187 = por %p185, %p186
      %s189 = sadd.s32 %s188, 1
      %p192 = scmp.eq.s32.totalorder %s39, 1
      %p193 = scmp.ne.s32.totalorder %s188, %s190
      %p194 = scmp.eq.s32.totalorder %s39, 0
      %p195 = por %p193, %p194
      %p196 = scmp.ne.s32.totalorder %s188, %s190
      %p197 = scmp.eq.s32.totalorder %s44, 1
      %p198 = por %p196, %p197
      %p199 = scmp.ne.s32.totalorder %s190, %s191
      %p200 = scmp.eq.s32.totalorder %s44, 0
      %p201 = por %p199, %p200
      %p202 = scmp.ne.s32.totalorder %s190, %s191
      %p203 = scmp.eq.s32.totalorder %s45, 1
      %p204 = por %p202, %p203
      %p206 = scmp.ne.s32.totalorder %s191, %s205
      %p207 = scmp.eq.s32.totalorder %s45, 0
      %p208 = por %p206, %p207
      %s210 = sadd.s32 %s209, 1
      %p213 = scmp.eq.s32.totalorder %s39, 1
      %p214 = scmp.ne.s32.totalorder %s209, %s211
      %p215 = scmp.eq.s32.totalorder %s39, 0
      %p216 = por %p214, %p215
      %p217 = scmp.ne.s32.totalorder %s209, %s211
      %p218 = scmp.eq.s32.totalorder %s44, 1
      %p219 = por %p217, %p218
      %p220 = scmp.ne.s32.totalorder %s211, %s212
      %p221 = scmp.eq.s32.totalorder %s44, 0
      %p222 = por %p220, %p221
      %p223 = scmp.ne.s32.totalorder %s211, %s212
      %p224 = scmp.eq.s32.totalorder %s45, 1
      %p225 = por %p223, %p224
      %p227 = scmp.ne.s32.totalorder %s212, %s226
      %p228 = scmp.eq.s32.totalorder %s45, 0
      %p229 = por %p227, %p228
      %s231 = sadd.s32 %s230, 1
      %p234 = scmp.eq.s32.totalorder %s39, 1
      %p235 = scmp.ne.s32.totalorder %s230, %s232
      %p236 = scmp.eq.s32.totalorder %s39, 0
      %p237 = por %p235, %p236
      %p238 = scmp.ne.s32.totalorder %s230, %s232
      %p239 = scmp.eq.s32.totalorder %s44, 1
      %p240 = por %p238, %p239
      %p241 = scmp.ne.s32.totalorder %s232, %s233
      %p242 = scmp.eq.s32.totalorder %s44, 0
      %p243 = por %p241, %p242
      %p244 = scmp.ne.s32.totalorder %s232, %s233
      %p245 = scmp.eq.s32.totalorder %s45, 1
      %p246 = por %p244, %p245
      %p248 = scmp.ne.s32.totalorder %s233, %s247
      %p249 = scmp.eq.s32.totalorder %s45, 0
      %p250 = por %p248, %p249
      %s252 = sadd.s32 %s251, 1
      %p255 = scmp.eq.s32.totalorder %s39, 1
      %p256 = scmp.ne.s32.totalorder %s251, %s253
      %p257 = scmp.eq.s32.totalorder %s39, 0
      %p258 = por %p256, %p257
      %p259 = scmp.ne.s32.totalorder %s251, %s253
      %p260 = scmp.eq.s32.totalorder %s44, 1
      %p261 = por %p259, %p260
      %p262 = scmp.ne.s32.totalorder %s253, %s254
      %p263 = scmp.eq.s32.totalorder %s44, 0
      %p264 = por %p262, %p263
      %p265 = scmp.ne.s32.totalorder %s253, %s254
      %p266 = scmp.eq.s32.totalorder %s45, 1
      %p267 = por %p265, %p266
      %p269 = scmp.ne.s32.totalorder %s254, %s268
      %p270 = scmp.eq.s32.totalorder %s45, 0
      %p271 = por %p269, %p270
      %s273 = sadd.s32 %s272, 1
      %p276 = scmp.eq.s32.totalorder %s39, 1
      %p277 = scmp.ne.s32.totalorder %s272, %s274
      %p278 = scmp.eq.s32.totalorder %s39, 0
      %p279 = por %p277, %p278
      %p280 = scmp.ne.s32.totalorder %s272, %s274
      %p281 = scmp.eq.s32.totalorder %s44, 1
      %p282 = por %p280, %p281
      %p283 = scmp.ne.s32.totalorder %s274, %s275
      %p284 = scmp.eq.s32.totalorder %s44, 0
      %p285 = por %p283, %p284
      %p286 = scmp.ne.s32.totalorder %s274, %s275
      %p287 = scmp.eq.s32.totalorder %s45, 1
      %p288 = por %p286, %p287
      %p290 = scmp.ne.s32.totalorder %s275, %s289
      %p291 = scmp.eq.s32.totalorder %s45, 0
      %p292 = por %p290, %p291
      %s294 = sadd.s32 %s293, 1
      %p297 = scmp.eq.s32.totalorder %s39, 1
      %p298 = scmp.ne.s32.totalorder %s293, %s295
      %p299 = scmp.eq.s32.totalorder %s39, 0
      %p300 = por %p298, %p299
      %p301 = scmp.ne.s32.totalorder %s293, %s295
      %p302 = scmp.eq.s32.totalorder %s44, 1
      %p303 = por %p301, %p302
      %p304 = scmp.ne.s32.totalorder %s295, %s296
      %p305 = scmp.eq.s32.totalorder %s44, 0
      %p306 = por %p304, %p305
      %p307 = scmp.ne.s32.totalorder %s295, %s296
      %p308 = scmp.eq.s32.totalorder %s45, 1
      %p309 = por %p307, %p308
      %p311 = scmp.ne.s32.totalorder %s296, %s310
      %p312 = scmp.eq.s32.totalorder %s45, 0
      %p313 = por %p311, %p312
      %s315 = sadd.s32 %s314, 1
      %p318 = scmp.eq.s32.totalorder %s39, 1
      %p319 = scmp.ne.s32.totalorder %s314, %s316
      %p320 = scmp.eq.s32.totalorder %s39, 0
      %p321 = por %p319, %p320
      %p322 = scmp.ne.s32.totalorder %s314, %s316
      %p323 = scmp.eq.s32.totalorder %s44, 1
      %p324 = por %p322, %p323
      %p325 = scmp.ne.s32.totalorder %s316, %s317
      %p326 = scmp.eq.s32.totalorder %s44, 0
      %p327 = por %p325, %p326
      %p328 = scmp.ne.s32.totalorder %s316, %s317
      %p329 = scmp.eq.s32.totalorder %s45, 1
      %p330 = por %p328, %p329
      %p332 = scmp.ne.s32.totalorder %s317, %s331
      %p333 = scmp.eq.s32.totalorder %s45, 0
      %p334 = por %p332, %p333
      %s335 = ssub.s32 %s39, %s46
      %p336 = scmp.eq.s32.totalorder %s335, 0
      %s338 = sadd.s32 %s337, 1
      %s339 = scalar_select %p336, %s337, %s338
      %p342 = pneg %p336
      %p343 = scmp.eq.s32.totalorder %s39, 1
      %p344 = por %p342, %p343
      %p345 = scmp.ne.s32.totalorder %s337, %s340
      %p346 = scmp.eq.s32.totalorder %s39, 0
      %p347 = por %p345, %p346
      %p348 = scmp.ne.s32.totalorder %s337, %s340
      %p349 = scmp.eq.s32.totalorder %s44, 1
      %p350 = por %p348, %p349
      %p351 = scmp.ne.s32.totalorder %s340, %s341
      %p352 = scmp.eq.s32.totalorder %s44, 0
      %p353 = por %p351, %p352
      %p354 = scmp.ne.s32.totalorder %s340, %s341
      %p355 = scmp.eq.s32.totalorder %s45, 1
      %p356 = por %p354, %p355
      %p358 = scmp.ne.s32.totalorder %s341, %s357
      %p359 = scmp.eq.s32.totalorder %s45, 0
      %p360 = por %p358, %p359
      %s361 = ssub.s32 %s39, %s46
      %p362 = scmp.eq.s32.totalorder %s361, 0
      %s364 = sadd.s32 %s363, 1
      %s365 = scalar_select %p362, %s363, %s364
      %p368 = pneg %p362
      %p369 = scmp.eq.s32.totalorder %s39, 1
      %p370 = por %p368, %p369
      %p371 = scmp.ne.s32.totalorder %s363, %s366
      %p372 = scmp.eq.s32.totalorder %s39, 0
      %p373 = por %p371, %p372
      %p374 = scmp.ne.s32.totalorder %s363, %s366
      %p375 = scmp.eq.s32.totalorder %s44, 1
      %p376 = por %p374, %p375
      %p377 = scmp.ne.s32.totalorder %s366, %s367
      %p378 = scmp.eq.s32.totalorder %s44, 0
      %p379 = por %p377, %p378
      %p380 = scmp.ne.s32.totalorder %s366, %s367
      %p381 = scmp.eq.s32.totalorder %s45, 1
      %p382 = por %p380, %p381
      %p384 = scmp.ne.s32.totalorder %s367, %s383
      %p385 = scmp.eq.s32.totalorder %s45, 0
      %p386 = por %p384, %p385
      %s387 = ssub.s32 %s39, %s46
      %p388 = scmp.eq.s32.totalorder %s387, 0
      %s390 = sadd.s32 %s389, 1
      %s391 = scalar_select %p388, %s389, %s390
      %p394 = pneg %p388
      %p395 = scmp.eq.s32.totalorder %s39, 1
      %p396 = por %p394, %p395
      %p397 = scmp.ne.s32.totalorder %s389, %s392
      %p398 = scmp.eq.s32.totalorder %s39, 0
      %p399 = por %p397, %p398
      %p400 = scmp.ne.s32.totalorder %s389, %s392
      %p401 = scmp.eq.s32.totalorder %s44, 1
      %p402 = por %p400, %p401
      %p403 = scmp.ne.s32.totalorder %s392, %s393
      %p404 = scmp.eq.s32.totalorder %s44, 0
      %p405 = por %p403, %p404
      %p406 = scmp.ne.s32.totalorder %s392, %s393
      %p407 = scmp.eq.s32.totalorder %s45, 1
      %p408 = por %p406, %p407
      %p410 = scmp.ne.s32.totalorder %s393, %s409
      %p411 = scmp.eq.s32.totalorder %s45, 0
      %p412 = por %p410, %p411
      %s413 = ssub.s32 %s39, %s46
      %p414 = scmp.eq.s32.totalorder %s413, 0
      %s416 = sadd.s32 %s415, 1
      %s417 = scalar_select %p414, %s415, %s416
      %p420 = pneg %p414
      %p421 = scmp.eq.s32.totalorder %s39, 1
      %p422 = por %p420, %p421
      %p423 = scmp.ne.s32.totalorder %s415, %s418
      %p424 = scmp.eq.s32.totalorder %s39, 0
      %p425 = por %p423, %p424
      %p426 = scmp.ne.s32.totalorder %s415, %s418
      %p427 = scmp.eq.s32.totalorder %s44, 1
      %p428 = por %p426, %p427
      %p429 = scmp.ne.s32.totalorder %s418, %s419
      %p430 = scmp.eq.s32.totalorder %s44, 0
      %p431 = por %p429, %p430
      %p432 = scmp.ne.s32.totalorder %s418, %s419
      %p433 = scmp.eq.s32.totalorder %s45, 1
      %p434 = por %p432, %p433
      %p436 = scmp.ne.s32.totalorder %s419, %s435
      %p437 = scmp.eq.s32.totalorder %s45, 0
      %p438 = por %p436, %p437
      %p439 = scmp.le.s32.totalorder 1, %s39
      %p440 = scmp.lt.s32.totalorder %s39, 3
      %p441 = pnand %p439, %p440
      %p442 = pneg %p441
      // Predicated region
      $region9: #{tpu_custom_call.1} parent=5 // pred_check
        _
      $region10: #{tpu_custom_call.1} parent=5 // pred_check_branch
        %444 = sbr.rel (%p441) target = $region12
      $region11: #{tpu_custom_call.1} parent=5 // pred_region
        %s445 = ssub.s32 %s39, 1
        // Predicated region
        $region13: #{tpu_custom_call.1} parent=11 // pred_check
          %p446 = pneg %p60
        $region14: #{tpu_custom_call.1} parent=11 // pred_check_branch
          %448 = sbr.rel (%p446) target = $region16
        $region15: #{tpu_custom_call.1} parent=11 // pred_region
          %s450 = ssub.s32 32, 32
          %451 = vsyncadd [#allocation8], %s450
          %454 = dma.hbm_to_smem %s0, 32, [#allocation5], [#allocation8]
        $region16: #{tpu_custom_call.1} parent=11 // pred_fallthru
          _
        // Predicated region
        $region17: #{tpu_custom_call.1} parent=11 // pred_check
          %p455 = pneg %p159
        $region18: #{tpu_custom_call.1} parent=11 // pred_check_branch
          %457 = sbr.rel (%p455) target = $region20
        $region19: #{tpu_custom_call.1} parent=11 // pred_region
          %s459 = ssub.s32 256, 256
          %460 = vsyncadd [#allocation11], %s459
          %s461 = sshll.u32 [#allocation12], 4
          %s462 = int_to_ptr.vmem [resolvable:$true] %s461
          %467 = dma.hbm_to_vmem [thread:$0]  %s4, 256, %s462, [#allocation11], 128, 128, 8
        $region20: #{tpu_custom_call.1} parent=11 // pred_fallthru
          _
        // Predicated region
        $region21: #{tpu_custom_call.1} parent=11 // pred_check
          %p468 = pneg %p180
        $region22: #{tpu_custom_call.1} parent=11 // pred_check_branch
          %470 = sbr.rel (%p468) target = $region24
        $region23: #{tpu_custom_call.1} parent=11 // pred_region
          _
        $region24: #{tpu_custom_call.1} parent=11 // pred_fallthru
          _
        // Predicated region
        $region25: #{tpu_custom_call.1} parent=11 // pred_check
          %p471 = pneg %p201
        $region26: #{tpu_custom_call.1} parent=11 // pred_check_branch
          %473 = sbr.rel (%p471) target = $region28
        $region27: #{tpu_custom_call.1} parent=11 // pred_region
          _
        $region28: #{tpu_custom_call.1} parent=11 // pred_fallthru
          _
        // Predicated region
        $region29: #{tpu_custom_call.1} parent=11 // pred_check
          %p474 = pneg %p222
        $region30: #{tpu_custom_call.1} parent=11 // pred_check_branch
          %476 = sbr.rel (%p474) target = $region32
        $region31: #{tpu_custom_call.1} parent=11 // pred_region
          %s478 = ssub.s32 64, 64
          %479 = vsyncadd [#allocation14], %s478
          %s481 = sshll.u32 [#allocation13], 4
          %s482 = int_to_ptr.vmem [resolvable:$true] %s481
          %484 = dma.hbm_to_vmem [thread:$0]  %s7, 64, %s482, [#allocation14]
        $region32: #{tpu_custom_call.1} parent=11 // pred_fallthru
          _
        // Predicated region
        $region33: #{tpu_custom_call.1} parent=11 // pred_check
          %p485 = pneg %p243
        $region34: #{tpu_custom_call.1} parent=11 // pred_check_branch
          %487 = sbr.rel (%p485) target = $region36
        $region35: #{tpu_custom_call.1} parent=11 // pred_region
          %s489 = ssub.s32 8192, 8192
          %490 = vsyncadd [#allocation14], %s489
          %s491 = sshll.u32 [#allocation15], 4
          %s492 = int_to_ptr.vmem [resolvable:$true] %s491
          %497 = dma.hbm_to_vmem [thread:$0]  %s8, 8192, %s492, [#allocation14], 512, 512, 32
        $region36: #{tpu_custom_call.1} parent=11 // pred_fallthru
          _
        // Predicated region
        $region37: #{tpu_custom_call.1} parent=11 // pred_check
          %p498 = pneg %p264
        $region38: #{tpu_custom_call.1} parent=11 // pred_check_branch
          %500 = sbr.rel (%p498) target = $region40
        $region39: #{tpu_custom_call.1} parent=11 // pred_region
          _
        $region40: #{tpu_custom_call.1} parent=11 // pred_fallthru
          _
        // Predicated region
        $region41: #{tpu_custom_call.1} parent=11 // pred_check
          %p501 = pneg %p285
        $region42: #{tpu_custom_call.1} parent=11 // pred_check_branch
          %503 = sbr.rel (%p501) target = $region44
        $region43: #{tpu_custom_call.1} parent=11 // pred_region
          _
        $region44: #{tpu_custom_call.1} parent=11 // pred_fallthru
          _
        // Predicated region
        $region45: #{tpu_custom_call.1} parent=11 // pred_check
          %p504 = pneg %p306
        $region46: #{tpu_custom_call.1} parent=11 // pred_check_branch
          %506 = sbr.rel (%p504) target = $region48
        $region47: #{tpu_custom_call.1} parent=11 // pred_region
          _
        $region48: #{tpu_custom_call.1} parent=11 // pred_fallthru
          _
        // Predicated region
        $region49: #{tpu_custom_call.1} parent=11 // pred_check
          %p507 = pneg %p327
        $region50: #{tpu_custom_call.1} parent=11 // pred_check_branch
          %509 = sbr.rel (%p507) target = $region52
        $region51: #{tpu_custom_call.1} parent=11 // pred_region
          _
        $region52: #{tpu_custom_call.1} parent=11 // pred_fallthru
          _
      $region12: #{tpu_custom_call.1} parent=5 // pred_fallthru
        _
      %p510 = scmp.lt.s32.totalorder %s39, 2
      // Predicated region
      $region53: #{tpu_custom_call.1} parent=5 // pred_check
        %p511 = pneg %p510
      $region54: #{tpu_custom_call.1} parent=5 // pred_check_branch
        %513 = sbr.rel (%p511) target = $region56
      $region55: #{tpu_custom_call.1} parent=5 // pred_region
        // Predicated region
        $region57: #{tpu_custom_call.1} parent=55 // pred_check
          %p514 = pneg %p80
        $region58: #{tpu_custom_call.1} parent=55 // pred_check_branch
          %516 = sbr.rel (%p514) target = $region60
        $region59: #{tpu_custom_call.1} parent=55 // pred_region
          %p517 = scmp.lt.s32.totalorder %s39, 1
          %s518 = scalar_select %p517, %s39, 1
          %s519 = smul.addr %s518, 8
          %s520 = scalar_lea.vmem %s1, %s519
        $region60: #{tpu_custom_call.1} parent=55 // pred_fallthru
          _
        // Predicated region
        $region61: #{tpu_custom_call.1} parent=55 // pred_check
          %p521 = pneg %p106
        $region62: #{tpu_custom_call.1} parent=55 // pred_check_branch
          %523 = sbr.rel (%p521) target = $region64
        $region63: #{tpu_custom_call.1} parent=55 // pred_region
          %s524 = sand.u32 %s96, 1
          %s525 = scalar_lea.sflag [#allocation6], %s524
          %s526 = sand.u32 %s96, 1
          %s527 = scalar_lea.vmem [#allocation9], %s526
          %s529 = ssub.s32 16, 16
          %530 = vsyncadd %s525, %s529
          %s531 = smul.addr %s39, 16
          %s532 = scalar_lea.hbm %s2, %s531
          %s534 = sshll.u32 %s527, 4
          %s535 = int_to_ptr.vmem [resolvable:$true] %s534
          %537 = dma.hbm_to_vmem [thread:$0]  %s532, 16, %s535, %s525
        $region64: #{tpu_custom_call.1} parent=55 // pred_fallthru
          _
        // Predicated region
        $region65: #{tpu_custom_call.1} parent=55 // pred_check
          %p538 = pneg %p132
        $region66: #{tpu_custom_call.1} parent=55 // pred_check_branch
          %540 = sbr.rel (%p538) target = $region68
        $region67: #{tpu_custom_call.1} parent=55 // pred_region
          %s541 = sand.u32 %s39, 1
          %s542 = scalar_lea.sflag [#allocation11], %s541
          %s543 = sand.u32 %s122, 1
          %s544 = scalar_lea.vmem [#allocation10], %s543
          %s546 = ssub.s32 16, 16
          %547 = vsyncadd %s542, %s546
          %s548 = smul.addr %s39, 16
          %s549 = scalar_lea.hbm %s3, %s548
          %s551 = sshll.u32 %s544, 4
          %s552 = int_to_ptr.vmem [resolvable:$true] %s551
          %554 = dma.hbm_to_vmem [thread:$0]  %s549, 16, %s552, %s542
        $region68: #{tpu_custom_call.1} parent=55 // pred_fallthru
          _
      $region56: #{tpu_custom_call.1} parent=5 // pred_fallthru
        _
      %p555 = scmp.le.s32.totalorder 1, %s39
      %p556 = scmp.lt.s32.totalorder %s39, 3
      %p557 = pnand %p555, %p556
      %p558 = pneg %p557
      // Predicated region
      $region69: #{tpu_custom_call.1} parent=5 // pred_check
        _
      $region70: #{tpu_custom_call.1} parent=5 // pred_check_branch
        %560 = sbr.rel (%p557) target = $region72
      $region71: #{tpu_custom_call.1} parent=5 // pred_region
        %s561 = ssub.s32 %s39, 1
        // Predicated region
        $region73: #{tpu_custom_call.1} parent=71 // pred_check
          %p562 = pneg %p60
        $region74: #{tpu_custom_call.1} parent=71 // pred_check_branch
          %564 = sbr.rel (%p562) target = $region76
        $region75: #{tpu_custom_call.1} parent=71 // pred_region
          %565 = dma.done [#allocation8], 32
        $region76: #{tpu_custom_call.1} parent=71 // pred_fallthru
          _
        %s566 = sand.u32 %s99, 1
        %s567 = scalar_lea.sflag [#allocation6], %s566
        %s568 = sand.u32 %s99, 1
        %s569 = scalar_lea.vmem [#allocation9], %s568
        // Predicated region
        $region77: #{tpu_custom_call.1} parent=71 // pred_check
          %p570 = pneg %p112
        $region78: #{tpu_custom_call.1} parent=71 // pred_check_branch
          %572 = sbr.rel (%p570) target = $region80
        $region79: #{tpu_custom_call.1} parent=71 // pred_region
          %573 = dma.done %s567, 16
        $region80: #{tpu_custom_call.1} parent=71 // pred_fallthru
          _
        %s574 = sand.u32 %s44, 1
        %s575 = scalar_lea.sflag [#allocation11], %s574
        %s576 = sand.u32 %s125, 1
        %s577 = scalar_lea.vmem [#allocation10], %s576
        // Predicated region
        $region81: #{tpu_custom_call.1} parent=71 // pred_check
          %p578 = pneg %p138
        $region82: #{tpu_custom_call.1} parent=71 // pred_check_branch
          %580 = sbr.rel (%p578) target = $region84
        $region83: #{tpu_custom_call.1} parent=71 // pred_region
          %581 = dma.done %s575, 16
        $region84: #{tpu_custom_call.1} parent=71 // pred_fallthru
          _
        // Predicated region
        $region85: #{tpu_custom_call.1} parent=71 // pred_check
          %p582 = pneg %p159
        $region86: #{tpu_custom_call.1} parent=71 // pred_check_branch
          %584 = sbr.rel (%p582) target = $region88
        $region87: #{tpu_custom_call.1} parent=71 // pred_region
          %585 = dma.done [#allocation11], 256
        $region88: #{tpu_custom_call.1} parent=71 // pred_fallthru
          _
        // Predicated region
        $region89: #{tpu_custom_call.1} parent=71 // pred_check
          %p586 = pneg %p222
        $region90: #{tpu_custom_call.1} parent=71 // pred_check_branch
          %588 = sbr.rel (%p586) target = $region92
        $region91: #{tpu_custom_call.1} parent=71 // pred_region
          %589 = dma.done [#allocation14], 64
        $region92: #{tpu_custom_call.1} parent=71 // pred_fallthru
          _
        // Predicated region
        $region93: #{tpu_custom_call.1} parent=71 // pred_check
          %p590 = pneg %p243
        $region94: #{tpu_custom_call.1} parent=71 // pred_check_branch
          %592 = sbr.rel (%p590) target = $region96
        $region95: #{tpu_custom_call.1} parent=71 // pred_region
          %593 = dma.done [#allocation14], 8192
        $region96: #{tpu_custom_call.1} parent=71 // pred_fallthru
          _
        %594 = sfence
        %p595 = pneg %p60
        %p596 = pneg %p57
        %p597 = scmp.lt.s32.totalorder %s44, 1
        %s598 = scalar_select %p597, %s44, 1
        %s599 = smul.addr %s598, 8
        %s600 = scalar_lea.vmem %s1, %s599
        %p601 = pneg %p86
        %p602 = pneg %p83
        %s603 = sand.u32 %s99, 1
        %s604 = scalar_lea.sflag [#allocation6], %s603
        %s605 = sand.u32 %s99, 1
        %s606 = scalar_lea.vmem [#allocation9], %s605
        %p607 = pneg %p112
        %p608 = pneg %p109
        %s609 = sand.u32 %s44, 1
        %s610 = scalar_lea.sflag [#allocation11], %s609
        %s611 = sand.u32 %s125, 1
        %s612 = scalar_lea.vmem [#allocation10], %s611
        %p613 = pneg %p138
        %p614 = pneg %p135
        %p615 = pneg %p159
        %p616 = pneg %p156
        %p617 = pneg %p180
        %p618 = pneg %p177
        %p619 = pneg %p201
        %p620 = pneg %p198
        %p621 = pneg %p222
        %p622 = pneg %p219
        %p623 = pneg %p243
        %p624 = pneg %p240
        %p625 = pneg %p264
        %p626 = pneg %p261
        %p627 = pneg %p285
        %p628 = pneg %p282
        %p629 = pneg %p306
        %p630 = pneg %p303
        %p631 = pneg %p327
        %p632 = pneg %p324
        %p633 = pneg %p353
        %p634 = pneg %p350
        %s635 = sand.u32 %s340, 1
        %s636 = scalar_lea.sflag [#allocation7], %s635
        %s637 = sand.u32 %s340, 1
        %s638 = smul.addr %s637, 8
        %s639 = scalar_lea.vmem [#allocation16], %s638
        %p640 = pneg %p379
        %p641 = pneg %p376
        %p642 = scmp.lt.s32.totalorder %s44, 1
        %s643 = scalar_select %p642, %s44, 1
        %s644 = smul.addr %s643, 8
        %s645 = scalar_lea.vmem %s14, %s644
        %p646 = pneg %p405
        %p647 = pneg %p402
        %s648 = sand.u32 %s44, 1
        %s649 = scalar_lea.sflag [#allocation18], %s648
        %s650 = sand.u32 %s392, 1
        %s651 = scalar_lea.vmem [#allocation17], %s650
        %p652 = pneg %p431
        %p653 = pneg %p428
        %s654 = sand.u32 %s44, 1
        %s655 = scalar_lea.sflag [#allocation18], %s654
        %s656 = sand.u32 %s418, 1
        %s657 = scalar_lea.vmem [#allocation19], %s656
        %p658 = scmp.lt.s32.totalorder %s44, 1
        %s659 = scalar_select %p658, %s44, 1
        %s660 = smul.addr %s659, 8
        %s661 = scalar_lea.vmem %s1, %s660
        %p662 = scmp.lt.s32.totalorder %s44, 1
        %s663 = scalar_select %p662, %s44, 1
        %s664 = smul.addr %s663, 8
        %s665 = scalar_lea.vmem %s14, %s664
        %v666 = vld [vmem:[%s661] sm:$0xff]
        %v667 = vld [vmem:[#allocation12] sm:$0xff]
        %v668 = vld [vmem:[#allocation12 + $0x8] sm:$0xff]
        %v669 = vld [vmem:[%s5] sm:$0x1]
        %v671 = vlaneseq
        %v672 = vshrl.u32 %v671, 7
        %v673 = vsub.s32 0, %v672
        %v674 = vrot.slane %v669, %v673
        %vm676 = vcmask 130048
        %v678 = vsel %vm676, %v666, 0
        %680 = vmatprep.subr.mxu0 0.0
        %681 = vmatpush1.msra.mxu0 0.0
        %682 = vmatprep.subr.mxu0 0.0
        %683 = vmatpush1.msra.mxu0 0.0
        %684 = vmatprep.subr.mxu0 0.0
        %685 = vmatpush1.msra.mxu0 0.0
        %686 = vmatprep.subr.mxu0 0.0
        %687 = vmatpush1.msra.mxu0 0.0
        %688 = vmatprep.subr.mxu0 0.0
        %689 = vmatpush1.msra.mxu0 0.0
        %690 = vmatprep.subr.mxu0 0.0
        %691 = vmatpush1.msra.mxu0 0.0
        %692 = vmatprep.subr.mxu0 0.0
        %693 = vmatpush1.msra.mxu0 0.0
        %694 = vmatprep.subr.mxu0 0.0
        %695 = vmatpush1.msra.mxu0 0.0
        %696 = vmatprep.subr.mxu0 0.0
        %697 = vmatpush1.msra.mxu0 0.0
        %698 = vmatprep.subr.mxu0 0.0
        %699 = vmatpush1.msra.mxu0 0.0
        %700 = vmatprep.subr.mxu0 0.0
        %701 = vmatpush1.msra.mxu0 0.0
        %702 = vmatprep.subr.mxu0 0.0
        %703 = vmatpush1.msra.mxu0 0.0
        %704 = vmatprep.subr.mxu0 0.0
        %705 = vmatpush1.msra.mxu0 0.0
        %706 = vmatprep.subr.mxu0 0.0
        %707 = vmatpush1.msra.mxu0 0.0
        %708 = vmatprep.subr.mxu0 0.0
        %709 = vmatpush1.msra.mxu0 %v668
        %710 = vmatprep.subr.mxu0 0.0
        %711 = vmatpush1.msra.mxu0 %v667
        %712 = vmatprep.subr.mxu0 0.0
        %713 = vmatpush2.msra.mxu0 0.0
        %714 = vmatprep.subr.mxu0 0.0
        %715 = vmatpush2.msra.mxu0 0.0
        %716 = vmatprep.subr.mxu0 0.0
        %717 = vmatpush2.msra.mxu0 0.0
        %718 = vmatprep.subr.mxu0 0.0
        %719 = vmatpush2.msra.mxu0 0.0
        %720 = vmatprep.subr.mxu0 0.0
        %721 = vmatpush2.msra.mxu0 0.0
        %722 = vmatprep.subr.mxu0 0.0
        %723 = vmatpush2.msra.mxu0 0.0
        %724 = vmatprep.subr.mxu0 0.0
        %725 = vmatpush2.msra.mxu0 0.0
        %726 = vmatprep.subr.mxu0 0.0
        %727 = vmatpush2.msra.mxu0 0.0
        %728 = vmatprep.subr.mxu0 0.0
        %729 = vmatpush2.msra.mxu0 0.0
        %730 = vmatprep.subr.mxu0 0.0
        %731 = vmatpush2.msra.mxu0 0.0
        %732 = vmatprep.subr.mxu0 0.0
        %733 = vmatpush2.msra.mxu0 0.0
        %734 = vmatprep.subr.mxu0 0.0
        %735 = vmatpush2.msra.mxu0 0.0
        %736 = vmatprep.subr.mxu0 0.0
        %737 = vmatpush2.msra.mxu0 0.0
        %738 = vmatprep.subr.mxu0 0.0
        %739 = vmatpush2.msra.mxu0 0.0
        %740 = vmatprep.subr.mxu0 0.0
        %741 = vmatpush2.msra.mxu0 0.0
        %742 = vmatprep.subr.mxu0 0.0
        %743 = vmatpush2.msra.mxu0 0.0
        %744 = vmatprep.mubr.f32.mxu0 0.0
        %745 = vmatmul.mubr.f32.gmra.mxu0 %v678
        %v746 = vpop.f32.mrf.mxu0
        %v747 = vadd.f32 %v674, %v746
        %v748 = vpop.f32.mrf.mxu0
        %749 = vdwg.mxu0
        %v750 = vmax.f32 %v747, 0.0
        %v751 = vld [vmem:[%s6] sm:$0xff]
        %v752 = vld [vmem:[%s6 + $0x8] sm:$0xff]
        %v753 = vld [vmem:[%s6 + $0x10] sm:$0xff]
        %v754 = vld [vmem:[%s6 + $0x18] sm:$0xff]
        %v755 = vld [vmem:[%s6 + $0x20] sm:$0xff]
        %v756 = vld [vmem:[%s6 + $0x28] sm:$0xff]
        %v757 = vld [vmem:[%s6 + $0x30] sm:$0xff]
        %v758 = vld [vmem:[%s6 + $0x38] sm:$0xff]
        %v759 = vld [vmem:[%s6 + $0x40] sm:$0xff]
        %v760 = vld [vmem:[%s6 + $0x48] sm:$0xff]
        %v761 = vld [vmem:[%s6 + $0x50] sm:$0xff]
        %v762 = vld [vmem:[%s6 + $0x58] sm:$0xff]
        %v763 = vld [vmem:[%s6 + $0x60] sm:$0xff]
        %v764 = vld [vmem:[%s6 + $0x68] sm:$0xff]
        %v765 = vld [vmem:[%s6 + $0x70] sm:$0xff]
        %v766 = vld [vmem:[%s6 + $0x78] sm:$0xff]
        %v767 = vld [vmem:[%s6 + $0x80] sm:$0xff]
        %v768 = vld [vmem:[%s6 + $0x88] sm:$0xff]
        %v769 = vld [vmem:[%s6 + $0x90] sm:$0xff]
        %v770 = vld [vmem:[%s6 + $0x98] sm:$0xff]
        %v771 = vld [vmem:[%s6 + $0xa0] sm:$0xff]
        %v772 = vld [vmem:[%s6 + $0xa8] sm:$0xff]
        %v773 = vld [vmem:[%s6 + $0xb0] sm:$0xff]
        %v774 = vld [vmem:[%s6 + $0xb8] sm:$0xff]
        %v775 = vld [vmem:[%s6 + $0xc0] sm:$0xff]
        %v776 = vld [vmem:[%s6 + $0xc8] sm:$0xff]
        %v777 = vld [vmem:[%s6 + $0xd0] sm:$0xff]
        %v778 = vld [vmem:[%s6 + $0xd8] sm:$0xff]
        %v779 = vld [vmem:[%s6 + $0xe0] sm:$0xff]
        %v780 = vld [vmem:[%s6 + $0xe8] sm:$0xff]
        %v781 = vld [vmem:[%s6 + $0xf0] sm:$0xff]
        %v782 = vld [vmem:[%s6 + $0xf8] sm:$0xff]
        %v783 = vld [vmem:[#allocation13] sm:$0xf]
        %v785 = vlaneseq
        %v786 = vshrl.u32 %v785, 7
        %v787 = vsub.s32 0, %v786
        %v788 = vrot.slane %v783, %v787
        %v789 = vlaneseq
        %v790 = vshrl.u32 %v789, 7
        %v791 = vsub.s32 1, %v790
        %v792 = vrot.slane %v783, %v791
        %v793 = vlaneseq
        %v794 = vshrl.u32 %v793, 7
        %v795 = vsub.s32 2, %v794
        %v796 = vrot.slane %v783, %v795
        %v797 = vlaneseq
        %v798 = vshrl.u32 %v797, 7
        %v799 = vsub.s32 3, %v798
        %v800 = vrot.slane %v783, %v799
        %vm805 = vcmask 523264
        %v807 = vsel %vm805, %v750, 0
        %809 = vmatprep.subr.mxu0 0.0
        %810 = vmatpush1.msra.mxu0 0.0
        %811 = vmatprep.subr.mxu0 0.0
        %812 = vmatpush1.msra.mxu0 0.0
        %813 = vmatprep.subr.mxu0 0.0
        %814 = vmatpush1.msra.mxu0 0.0
        %815 = vmatprep.subr.mxu0 0.0
        %816 = vmatpush1.msra.mxu0 0.0
        %817 = vmatprep.subr.mxu0 0.0
        %818 = vmatpush1.msra.mxu0 0.0
        %819 = vmatprep.subr.mxu0 0.0
        %820 = vmatpush1.msra.mxu0 0.0
        %821 = vmatprep.subr.mxu0 0.0
        %822 = vmatpush1.msra.mxu0 0.0
        %823 = vmatprep.subr.mxu0 0.0
        %824 = vmatpush1.msra.mxu0 0.0
        %825 = vmatprep.subr.mxu0 %v780
        %826 = vmatpush1.msra.mxu0 %v779
        %827 = vmatprep.subr.mxu0 %v776
        %828 = vmatpush1.msra.mxu0 %v775
        %829 = vmatprep.subr.mxu0 %v772
        %830 = vmatpush1.msra.mxu0 %v771
        %831 = vmatprep.subr.mxu0 %v768
        %832 = vmatpush1.msra.mxu0 %v767
        %833 = vmatprep.subr.mxu0 %v764
        %834 = vmatpush1.msra.mxu0 %v763
        %835 = vmatprep.subr.mxu0 %v760
        %836 = vmatpush1.msra.mxu0 %v759
        %837 = vmatprep.subr.mxu0 %v756
        %838 = vmatpush1.msra.mxu0 %v755
        %839 = vmatprep.subr.mxu0 %v752
        %840 = vmatpush1.msra.mxu0 %v751
        %841 = vmatprep.subr.mxu0 0.0
        %842 = vmatpush2.msra.mxu0 0.0
        %843 = vmatprep.subr.mxu0 0.0
        %844 = vmatpush2.msra.mxu0 0.0
        %845 = vmatprep.subr.mxu0 0.0
        %846 = vmatpush2.msra.mxu0 0.0
        %847 = vmatprep.subr.mxu0 0.0
        %848 = vmatpush2.msra.mxu0 0.0
        %849 = vmatprep.subr.mxu0 0.0
        %850 = vmatpush2.msra.mxu0 0.0
        %851 = vmatprep.subr.mxu0 0.0
        %852 = vmatpush2.msra.mxu0 0.0
        %853 = vmatprep.subr.mxu0 0.0
        %854 = vmatpush2.msra.mxu0 0.0
        %855 = vmatprep.subr.mxu0 0.0
        %856 = vmatpush2.msra.mxu0 0.0
        %857 = vmatprep.subr.mxu0 0.0
        %858 = vmatpush2.msra.mxu0 0.0
        %859 = vmatprep.subr.mxu0 0.0
        %860 = vmatpush2.msra.mxu0 0.0
        %861 = vmatprep.subr.mxu0 0.0
        %862 = vmatpush2.msra.mxu0 0.0
        %863 = vmatprep.subr.mxu0 0.0
        %864 = vmatpush2.msra.mxu0 0.0
        %865 = vmatprep.subr.mxu0 0.0
        %866 = vmatpush2.msra.mxu0 0.0
        %867 = vmatprep.subr.mxu0 0.0
        %868 = vmatpush2.msra.mxu0 0.0
        %869 = vmatprep.subr.mxu0 0.0
        %870 = vmatpush2.msra.mxu0 0.0
        %871 = vmatprep.subr.mxu0 0.0
        %872 = vmatpush2.msra.mxu0 0.0
        %873 = vmatprep.mubr.f32.mxu0 0.0
        %874 = vmatmul.mubr.f32.gmra.mxu0 %v807
        %v875 = vpop.f32.mrf.mxu0
        %v876 = vadd.f32 %v788, %v875
        %v877 = vpop.f32.mrf.mxu0
        %v878 = vadd.f32 %v792, %v877
        %879 = vdwg.mxu0
        %880 = vmatprep.subr.mxu0 0.0
        %881 = vmatpush1.msra.mxu0 0.0
        %882 = vmatprep.subr.mxu0 0.0
        %883 = vmatpush1.msra.mxu0 0.0
        %884 = vmatprep.subr.mxu0 0.0
        %885 = vmatpush1.msra.mxu0 0.0
        %886 = vmatprep.subr.mxu0 0.0
        %887 = vmatpush1.msra.mxu0 0.0
        %888 = vmatprep.subr.mxu0 0.0
        %889 = vmatpush1.msra.mxu0 0.0
        %890 = vmatprep.subr.mxu0 0.0
        %891 = vmatpush1.msra.mxu0 0.0
        %892 = vmatprep.subr.mxu0 0.0
        %893 = vmatpush1.msra.mxu0 0.0
        %894 = vmatprep.subr.mxu0 0.0
        %895 = vmatpush1.msra.mxu0 0.0
        %896 = vmatprep.subr.mxu0 %v782
        %897 = vmatpush1.msra.mxu0 %v781
        %898 = vmatprep.subr.mxu0 %v778
        %899 = vmatpush1.msra.mxu0 %v777
        %900 = vmatprep.subr.mxu0 %v774
        %901 = vmatpush1.msra.mxu0 %v773
        %902 = vmatprep.subr.mxu0 %v770
        %903 = vmatpush1.msra.mxu0 %v769
        %904 = vmatprep.subr.mxu0 %v766
        %905 = vmatpush1.msra.mxu0 %v765
        %906 = vmatprep.subr.mxu0 %v762
        %907 = vmatpush1.msra.mxu0 %v761
        %908 = vmatprep.subr.mxu0 %v758
        %909 = vmatpush1.msra.mxu0 %v757
        %910 = vmatprep.subr.mxu0 %v754
        %911 = vmatpush1.msra.mxu0 %v753
        %912 = vmatprep.subr.mxu0 0.0
        %913 = vmatpush2.msra.mxu0 0.0
        %914 = vmatprep.subr.mxu0 0.0
        %915 = vmatpush2.msra.mxu0 0.0
        %916 = vmatprep.subr.mxu0 0.0
        %917 = vmatpush2.msra.mxu0 0.0
        %918 = vmatprep.subr.mxu0 0.0
        %919 = vmatpush2.msra.mxu0 0.0
        %920 = vmatprep.subr.mxu0 0.0
        %921 = vmatpush2.msra.mxu0 0.0
        %922 = vmatprep.subr.mxu0 0.0
        %923 = vmatpush2.msra.mxu0 0.0
        %924 = vmatprep.subr.mxu0 0.0
        %925 = vmatpush2.msra.mxu0 0.0
        %926 = vmatprep.subr.mxu0 0.0
        %927 = vmatpush2.msra.mxu0 0.0
        %928 = vmatprep.subr.mxu0 0.0
        %929 = vmatpush2.msra.mxu0 0.0
        %930 = vmatprep.subr.mxu0 0.0
        %931 = vmatpush2.msra.mxu0 0.0
        %932 = vmatprep.subr.mxu0 0.0
        %933 = vmatpush2.msra.mxu0 0.0
        %934 = vmatprep.subr.mxu0 0.0
        %935 = vmatpush2.msra.mxu0 0.0
        %936 = vmatprep.subr.mxu0 0.0
        %937 = vmatpush2.msra.mxu0 0.0
        %938 = vmatprep.subr.mxu0 0.0
        %939 = vmatpush2.msra.mxu0 0.0
        %940 = vmatprep.subr.mxu0 0.0
        %941 = vmatpush2.msra.mxu0 0.0
        %942 = vmatprep.subr.mxu0 0.0
        %943 = vmatpush2.msra.mxu0 0.0
        %944 = vmatprep.mubr.f32.mxu0 0.0
        %945 = vmatmul.mubr.f32.gmra.mxu0 %v807
        %v946 = vpop.f32.mrf.mxu0
        %v947 = vadd.f32 %v796, %v946
        %v948 = vpop.f32.mrf.mxu0
        %v949 = vadd.f32 %v800, %v948
        %950 = vdwg.mxu0
        %951 = vst [vmem:[#allocation2] sm:$0xff] %v876
        %952 = vst [vmem:[#allocation2 + $0x8] sm:$0xff] %v878
        %953 = vst [vmem:[#allocation2 + $0x10] sm:$0xff] %v947
        %954 = vst [vmem:[#allocation2 + $0x18] sm:$0xff] %v949
        %v955 = vld [vmem:[%s569] sm:$0x1]
        %v956 = vld [vmem:[%s577] sm:$0x1]
        %s957 = smul.u32 %s44, 128
        %s958 = sld [smem:[#allocation5 + %s957]]
        %v959 = vstv %s958
        %v960 = vmul.f32 %v955, %v959
        %v961 = vmul.f32 %v956, %v959
        %v962 = vld [vmem:[#allocation2] ss:$8 sm:$0xf]
        %v963 = vld [vmem:[#allocation15] sm:$0xff]
        %v964 = vld [vmem:[#allocation15 + $0x8] sm:$0xff]
        %v965 = vld [vmem:[#allocation15 + $0x10] sm:$0xff]
        %v966 = vld [vmem:[#allocation15 + $0x18] sm:$0xff]
        %v967 = vld [vmem:[#allocation15 + $0x20] sm:$0xff]
        %v968 = vld [vmem:[#allocation15 + $0x28] sm:$0xff]
        %v969 = vld [vmem:[#allocation15 + $0x30] sm:$0xff]
        %v970 = vld [vmem:[#allocation15 + $0x38] sm:$0xff]
        %v971 = vld [vmem:[#allocation15 + $0x40] sm:$0xff]
        %v972 = vld [vmem:[#allocation15 + $0x48] sm:$0xff]
        %v973 = vld [vmem:[#allocation15 + $0x50] sm:$0xff]
        %v974 = vld [vmem:[#allocation15 + $0x58] sm:$0xff]
        %v975 = vld [vmem:[#allocation15 + $0x60] sm:$0xff]
        %v976 = vld [vmem:[#allocation15 + $0x68] sm:$0xff]
        %v977 = vld [vmem:[#allocation15 + $0x70] sm:$0xff]
        %v978 = vld [vmem:[#allocation15 + $0x78] sm:$0xff]
        %v979 = vld [vmem:[#allocation15 + $0x80] sm:$0xff]
        %v980 = vld [vmem:[#allocation15 + $0x88] sm:$0xff]
        %v981 = vld [vmem:[#allocation15 + $0x90] sm:$0xff]
        %v982 = vld [vmem:[#allocation15 + $0x98] sm:$0xff]
        %v983 = vld [vmem:[#allocation15 + $0xa0] sm:$0xff]
        %v984 = vld [vmem:[#allocation15 + $0xa8] sm:$0xff]
        %v985 = vld [vmem:[#allocation15 + $0xb0] sm:$0xff]
        %v986 = vld [vmem:[#allocation15 + $0xb8] sm:$0xff]
        %v987 = vld [vmem:[#allocation15 + $0xc0] sm:$0xff]
        %v988 = vld [vmem:[#allocation15 + $0xc8] sm:$0xff]
        %v989 = vld [vmem:[#allocation15 + $0xd0] sm:$0xff]
        %v990 = vld [vmem:[#allocation15 + $0xd8] sm:$0xff]
        %v991 = vld [vmem:[#allocation15 + $0xe0] sm:$0xff]
        %v992 = vld [vmem:[#allocation15 + $0xe8] sm:$0xff]
        %v993 = vld [vmem:[#allocation15 + $0xf0] sm:$0xff]
        %v994 = vld [vmem:[#allocation15 + $0xf8] sm:$0xff]
        %v995 = vld [vmem:[#allocation15 + $0x100] sm:$0xff]
        %v996 = vld [vmem:[#allocation15 + $0x108] sm:$0xff]
        %v997 = vld [vmem:[#allocation15 + $0x110] sm:$0xff]
        %v998 = vld [vmem:[#allocation15 + $0x118] sm:$0xff]
        %v999 = vld [vmem:[#allocation15 + $0x120] sm:$0xff]
        %v1000 = vld [vmem:[#allocation15 + $0x128] sm:$0xff]
        %v1001 = vld [vmem:[#allocation15 + $0x130] sm:$0xff]
        %v1002 = vld [vmem:[#allocation15 + $0x138] sm:$0xff]
        %v1003 = vld [vmem:[#allocation15 + $0x140] sm:$0xff]
        %v1004 = vld [vmem:[#allocation15 + $0x148] sm:$0xff]
        %v1005 = vld [vmem:[#allocation15 + $0x150] sm:$0xff]
        %v1006 = vld [vmem:[#allocation15 + $0x158] sm:$0xff]
        %v1007 = vld [vmem:[#allocation15 + $0x160] sm:$0xff]
        %v1008 = vld [vmem:[#allocation15 + $0x168] sm:$0xff]
        %v1009 = vld [vmem:[#allocation15 + $0x170] sm:$0xff]
        %v1010 = vld [vmem:[#allocation15 + $0x178] sm:$0xff]
        %v1011 = vld [vmem:[#allocation15 + $0x180] sm:$0xff]
        %v1012 = vld [vmem:[#allocation15 + $0x188] sm:$0xff]
        %v1013 = vld [vmem:[#allocation15 + $0x190] sm:$0xff]
        %v1014 = vld [vmem:[#allocation15 + $0x198] sm:$0xff]
        %v1015 = vld [vmem:[#allocation15 + $0x1a0] sm:$0xff]
        %v1016 = vld [vmem:[#allocation15 + $0x1a8] sm:$0xff]
        %v1017 = vld [vmem:[#allocation15 + $0x1b0] sm:$0xff]
        %v1018 = vld [vmem:[#allocation15 + $0x1b8] sm:$0xff]
        %v1019 = vld [vmem:[#allocation15 + $0x1c0] sm:$0xff]
        %v1020 = vld [vmem:[#allocation15 + $0x1c8] sm:$0xff]
        %v1021 = vld [vmem:[#allocation15 + $0x1d0] sm:$0xff]
        %v1022 = vld [vmem:[#allocation15 + $0x1d8] sm:$0xff]
        %v1023 = vld [vmem:[#allocation15 + $0x1e0] sm:$0xff]
        %v1024 = vld [vmem:[#allocation15 + $0x1e8] sm:$0xff]
        %v1025 = vld [vmem:[#allocation15 + $0x1f0] sm:$0xff]
        %v1026 = vld [vmem:[#allocation15 + $0x1f8] sm:$0xff]
        %1027 = vmatprep.subr.mxu0 %v1024
        %1028 = vmatpush1.msra.mxu0 %v1023
        %1029 = vmatprep.subr.mxu0 %v1020
        %1030 = vmatpush1.msra.mxu0 %v1019
        %1031 = vmatprep.subr.mxu0 %v1016
        %1032 = vmatpush1.msra.mxu0 %v1015
        %1033 = vmatprep.subr.mxu0 %v1012
        %1034 = vmatpush1.msra.mxu0 %v1011
        %1035 = vmatprep.subr.mxu0 %v1008
        %1036 = vmatpush1.msra.mxu0 %v1007
        %1037 = vmatprep.subr.mxu0 %v1004
        %1038 = vmatpush1.msra.mxu0 %v1003
        %1039 = vmatprep.subr.mxu0 %v1000
        %1040 = vmatpush1.msra.mxu0 %v999
        %1041 = vmatprep.subr.mxu0 %v996
        %1042 = vmatpush1.msra.mxu0 %v995
        %1043 = vmatprep.subr.mxu0 %v992
        %1044 = vmatpush1.msra.mxu0 %v991
        %1045 = vmatprep.subr.mxu0 %v988
        %1046 = vmatpush1.msra.mxu0 %v987
        %1047 = vmatprep.subr.mxu0 %v984
        %1048 = vmatpush1.msra.mxu0 %v983
        %1049 = vmatprep.subr.mxu0 %v980
        %1050 = vmatpush1.msra.mxu0 %v979
        %1051 = vmatprep.subr.mxu0 %v976
        %1052 = vmatpush1.msra.mxu0 %v975
        %1053 = vmatprep.subr.mxu0 %v972
        %1054 = vmatpush1.msra.mxu0 %v971
        %1055 = vmatprep.subr.mxu0 %v968
        %1056 = vmatpush1.msra.mxu0 %v967
        %1057 = vmatprep.subr.mxu0 %v964
        %1058 = vmatpush1.msra.mxu0 %v963
        %1059 = vmatprep.subr.mxu0 0.0
        %1060 = vmatpush2.msra.mxu0 0.0
        %1061 = vmatprep.subr.mxu0 0.0
        %1062 = vmatpush2.msra.mxu0 0.0
        %1063 = vmatprep.subr.mxu0 0.0
        %1064 = vmatpush2.msra.mxu0 0.0
        %1065 = vmatprep.subr.mxu0 0.0
        %1066 = vmatpush2.msra.mxu0 0.0
        %1067 = vmatprep.subr.mxu0 0.0
        %1068 = vmatpush2.msra.mxu0 0.0
        %1069 = vmatprep.subr.mxu0 0.0
        %1070 = vmatpush2.msra.mxu0 0.0
        %1071 = vmatprep.subr.mxu0 0.0
        %1072 = vmatpush2.msra.mxu0 0.0
        %1073 = vmatprep.subr.mxu0 0.0
        %1074 = vmatpush2.msra.mxu0 0.0
        %1075 = vmatprep.subr.mxu0 0.0
        %1076 = vmatpush2.msra.mxu0 0.0
        %1077 = vmatprep.subr.mxu0 0.0
        %1078 = vmatpush2.msra.mxu0 0.0
        %1079 = vmatprep.subr.mxu0 0.0
        %1080 = vmatpush2.msra.mxu0 0.0
        %1081 = vmatprep.subr.mxu0 0.0
        %1082 = vmatpush2.msra.mxu0 0.0
        %1083 = vmatprep.subr.mxu0 0.0
        %1084 = vmatpush2.msra.mxu0 0.0
        %1085 = vmatprep.subr.mxu0 0.0
        %1086 = vmatpush2.msra.mxu0 0.0
        %1087 = vmatprep.subr.mxu0 0.0
        %1088 = vmatpush2.msra.mxu0 0.0
        %1089 = vmatprep.subr.mxu0 0.0
        %1090 = vmatpush2.msra.mxu0 0.0
        %1091 = vmatprep.mubr.f32.mxu0 0.0
        %1092 = vmatmul.mubr.f32.gmra.mxu0 %v960
        %v1093 = vpop.f32.mrf.mxu0
        %v1094 = vadd.f32 0.0, %v1093
        %v1095 = vpop.f32.mrf.mxu0
        %v1096 = vadd.f32 0.0, %v1095
        %1097 = vdwg.mxu0
        %1098 = vmatprep.subr.mxu0 %v1026
        %1099 = vmatpush1.msra.mxu0 %v1025
        %1100 = vmatprep.subr.mxu0 %v1022
        %1101 = vmatpush1.msra.mxu0 %v1021
        %1102 = vmatprep.subr.mxu0 %v1018
        %1103 = vmatpush1.msra.mxu0 %v1017
        %1104 = vmatprep.subr.mxu0 %v1014
        %1105 = vmatpush1.msra.mxu0 %v1013
        %1106 = vmatprep.subr.mxu0 %v1010
        %1107 = vmatpush1.msra.mxu0 %v1009
        %1108 = vmatprep.subr.mxu0 %v1006
        %1109 = vmatpush1.msra.mxu0 %v1005
        %1110 = vmatprep.subr.mxu0 %v1002
        %1111 = vmatpush1.msra.mxu0 %v1001
        %1112 = vmatprep.subr.mxu0 %v998
        %1113 = vmatpush1.msra.mxu0 %v997
        %1114 = vmatprep.subr.mxu0 %v994
        %1115 = vmatpush1.msra.mxu0 %v993
        %1116 = vmatprep.subr.mxu0 %v990
        %1117 = vmatpush1.msra.mxu0 %v989
        %1118 = vmatprep.subr.mxu0 %v986
        %1119 = vmatpush1.msra.mxu0 %v985
        %1120 = vmatprep.subr.mxu0 %v982
        %1121 = vmatpush1.msra.mxu0 %v981
        %1122 = vmatprep.subr.mxu0 %v978
        %1123 = vmatpush1.msra.mxu0 %v977
        %1124 = vmatprep.subr.mxu0 %v974
        %1125 = vmatpush1.msra.mxu0 %v973
        %1126 = vmatprep.subr.mxu0 %v970
        %1127 = vmatpush1.msra.mxu0 %v969
        %1128 = vmatprep.subr.mxu0 %v966
        %1129 = vmatpush1.msra.mxu0 %v965
        %1130 = vmatprep.subr.mxu0 0.0
        %1131 = vmatpush2.msra.mxu0 0.0
        %1132 = vmatprep.subr.mxu0 0.0
        %1133 = vmatpush2.msra.mxu0 0.0
        %1134 = vmatprep.subr.mxu0 0.0
        %1135 = vmatpush2.msra.mxu0 0.0
        %1136 = vmatprep.subr.mxu0 0.0
        %1137 = vmatpush2.msra.mxu0 0.0
        %1138 = vmatprep.subr.mxu0 0.0
        %1139 = vmatpush2.msra.mxu0 0.0
        %1140 = vmatprep.subr.mxu0 0.0
        %1141 = vmatpush2.msra.mxu0 0.0
        %1142 = vmatprep.subr.mxu0 0.0
        %1143 = vmatpush2.msra.mxu0 0.0
        %1144 = vmatprep.subr.mxu0 0.0
        %1145 = vmatpush2.msra.mxu0 0.0
        %1146 = vmatprep.subr.mxu0 0.0
        %1147 = vmatpush2.msra.mxu0 0.0
        %1148 = vmatprep.subr.mxu0 0.0
        %1149 = vmatpush2.msra.mxu0 0.0
        %1150 = vmatprep.subr.mxu0 0.0
        %1151 = vmatpush2.msra.mxu0 0.0
        %1152 = vmatprep.subr.mxu0 0.0
        %1153 = vmatpush2.msra.mxu0 0.0
        %1154 = vmatprep.subr.mxu0 0.0
        %1155 = vmatpush2.msra.mxu0 0.0
        %1156 = vmatprep.subr.mxu0 0.0
        %1157 = vmatpush2.msra.mxu0 0.0
        %1158 = vmatprep.subr.mxu0 0.0
        %1159 = vmatpush2.msra.mxu0 0.0
        %1160 = vmatprep.subr.mxu0 0.0
        %1161 = vmatpush2.msra.mxu0 0.0
        %1162 = vmatprep.mubr.f32.mxu0 0.0
        %1163 = vmatmul.mubr.f32.gmra.mxu0 %v960
        %v1164 = vpop.f32.mrf.mxu0
        %v1165 = vadd.f32 0.0, %v1164
        %v1166 = vpop.f32.mrf.mxu0
        %v1167 = vadd.f32 0.0, %v1166
        %1168 = vdwg.mxu0
        %v1173 = vcombine.low %v1094, %v1096
        %v1174 = vcombine.low %v1165, %v1167
        %v1176 = vunpack.c.l.s4 1966171168
        %v1177 = vunpack.c.0.s8 %v1176
        %v1178 = vlaneseq
        %v1179 = vshrl.u32 %v1178, 7
        %v1180 = vsub.s32 %v1177, %v1179
        %v1181 = vrot.slane %v1173, %v1180
        %v1183 = vunpack.c.l.s4 1966171168
        %v1184 = vunpack.c.0.s8 %v1183
        %v1185 = vlaneseq
        %v1186 = vshrl.u32 %v1185, 7
        %v1187 = vsub.s32 %v1184, %v1186
        %v1188 = vrot.slane %v1174, %v1187
        %v1189 = vcombine.low %v1181, %v1188
        %v1191 = vunpack.c.l.s4 1966171168
        %v1192 = vunpack.c.0.s8 %v1191
        %v1193 = vlaneseq
        %v1194 = vshrl.u32 %v1193, 7
        %v1195 = vsub.s32 %v1192, %v1194
        %v1196 = vrot.slane %v1189, %v1195
        %v1198 = vadd.f32 %v962, %v1196
        %v1199 = vxor.u32 %v1198, 2147483648
        %v1200 = vmul.f32 %v1199, 1.442695
        %v1201 = vpow.pop %v1200
        %v1202 = vadd.f32 %v1201, 1.0
        %v1203 = vrcp.pop %v1202
        %v1204 = vmul.f32 1.0, %v1203
        %v1206 = vrot.slane %v1198, 1
        %v1208 = vxor.u32 %v1206, 2147483648
        %v1209 = vmul.f32 %v1208, 1.442695
        %v1210 = vpow.pop %v1209
        %v1211 = vadd.f32 %v1210, 1.0
        %v1212 = vrcp.pop %v1211
        %v1213 = vmul.f32 1.0, %v1212
        %v1214 = vrot.slane %v1198, 2
        %v1216 = vtanh.pop %v1214
        %v1217 = vrot.slane %v1198, 3
        %v1219 = vxor.u32 %v1217, 2147483648
        %v1220 = vmul.f32 %v1219, 1.442695
        %v1221 = vpow.pop %v1220
        %v1222 = vadd.f32 %v1221, 1.0
        %v1223 = vrcp.pop %v1222
        %v1224 = vmul.f32 1.0, %v1223
        %v1225 = vmul.f32 %v1213, %v961
        %v1226 = vmul.f32 %v1204, %v1216
        %v1227 = vadd.f32 %v1225, %v1226
        %v1228 = vtanh.pop %v1227
        %v1229 = vmul.f32 %v1224, %v1228
        %1230 = vst [vmem:[#allocation3] sm:$0x1] %v1229
        %s1231 = sadd.s32 %s957, 1
        %s1232 = sld [smem:[#allocation5 + %s1231]]
        %v1233 = vstv %s1232
        %v1234 = vmul.f32 %v1229, %v1233
        %v1235 = vmul.f32 %v1227, %v1233
        %s1236 = scalar_lea.vmem [#allocation2], 1
        %v1237 = vld [vmem:[%s1236] ss:$8 sm:$0xf]
        %v1238 = vld [vmem:[#allocation15] sm:$0xff]
        %v1239 = vld [vmem:[#allocation15 + $0x8] sm:$0xff]
        %v1240 = vld [vmem:[#allocation15 + $0x10] sm:$0xff]
        %v1241 = vld [vmem:[#allocation15 + $0x18] sm:$0xff]
        %v1242 = vld [vmem:[#allocation15 + $0x20] sm:$0xff]
        %v1243 = vld [vmem:[#allocation15 + $0x28] sm:$0xff]
        %v1244 = vld [vmem:[#allocation15 + $0x30] sm:$0xff]
        %v1245 = vld [vmem:[#allocation15 + $0x38] sm:$0xff]
        %v1246 = vld [vmem:[#allocation15 + $0x40] sm:$0xff]
        %v1247 = vld [vmem:[#allocation15 + $0x48] sm:$0xff]
        %v1248 = vld [vmem:[#allocation15 + $0x50] sm:$0xff]
        %v1249 = vld [vmem:[#allocation15 + $0x58] sm:$0xff]
        %v1250 = vld [vmem:[#allocation15 + $0x60] sm:$0xff]
        %v1251 = vld [vmem:[#allocation15 + $0x68] sm:$0xff]
        %v1252 = vld [vmem:[#allocation15 + $0x70] sm:$0xff]
        %v1253 = vld [vmem:[#allocation15 + $0x78] sm:$0xff]
        %v1254 = vld [vmem:[#allocation15 + $0x80] sm:$0xff]
        %v1255 = vld [vmem:[#allocation15 + $0x88] sm:$0xff]
        %v1256 = vld [vmem:[#allocation15 + $0x90] sm:$0xff]
        %v1257 = vld [vmem:[#allocation15 + $0x98] sm:$0xff]
        %v1258 = vld [vmem:[#allocation15 + $0xa0] sm:$0xff]
        %v1259 = vld [vmem:[#allocation15 + $0xa8] sm:$0xff]
        %v1260 = vld [vmem:[#allocation15 + $0xb0] sm:$0xff]
        %v1261 = vld [vmem:[#allocation15 + $0xb8] sm:$0xff]
        %v1262 = vld [vmem:[#allocation15 + $0xc0] sm:$0xff]
        %v1263 = vld [vmem:[#allocation15 + $0xc8] sm:$0xff]
        %v1264 = vld [vmem:[#allocation15 + $0xd0] sm:$0xff]
        %v1265 = vld [vmem:[#allocation15 + $0xd8] sm:$0xff]
        %v1266 = vld [vmem:[#allocation15 + $0xe0] sm:$0xff]
        %v1267 = vld [vmem:[#allocation15 + $0xe8] sm:$0xff]
        %v1268 = vld [vmem:[#allocation15 + $0xf0] sm:$0xff]
        %v1269 = vld [vmem:[#allocation15 + $0xf8] sm:$0xff]
        %v1270 = vld [vmem:[#allocation15 + $0x100] sm:$0xff]
        %v1271 = vld [vmem:[#allocation15 + $0x108] sm:$0xff]
        %v1272 = vld [vmem:[#allocation15 + $0x110] sm:$0xff]
        %v1273 = vld [vmem:[#allocation15 + $0x118] sm:$0xff]
        %v1274 = vld [vmem:[#allocation15 + $0x120] sm:$0xff]
        %v1275 = vld [vmem:[#allocation15 + $0x128] sm:$0xff]
        %v1276 = vld [vmem:[#allocation15 + $0x130] sm:$0xff]
        %v1277 = vld [vmem:[#allocation15 + $0x138] sm:$0xff]
        %v1278 = vld [vmem:[#allocation15 + $0x140] sm:$0xff]
        %v1279 = vld [vmem:[#allocation15 + $0x148] sm:$0xff]
        %v1280 = vld [vmem:[#allocation15 + $0x150] sm:$0xff]
        %v1281 = vld [vmem:[#allocation15 + $0x158] sm:$0xff]
        %v1282 = vld [vmem:[#allocation15 + $0x160] sm:$0xff]
        %v1283 = vld [vmem:[#allocation15 + $0x168] sm:$0xff]
        %v1284 = vld [vmem:[#allocation15 + $0x170] sm:$0xff]
        %v1285 = vld [vmem:[#allocation15 + $0x178] sm:$0xff]
        %v1286 = vld [vmem:[#allocation15 + $0x180] sm:$0xff]
        %v1287 = vld [vmem:[#allocation15 + $0x188] sm:$0xff]
        %v1288 = vld [vmem:[#allocation15 + $0x190] sm:$0xff]
        %v1289 = vld [vmem:[#allocation15 + $0x198] sm:$0xff]
        %v1290 = vld [vmem:[#allocation15 + $0x1a0] sm:$0xff]
        %v1291 = vld [vmem:[#allocation15 + $0x1a8] sm:$0xff]
        %v1292 = vld [vmem:[#allocation15 + $0x1b0] sm:$0xff]
        %v1293 = vld [vmem:[#allocation15 + $0x1b8] sm:$0xff]
        %v1294 = vld [vmem:[#allocation15 + $0x1c0] sm:$0xff]
        %v1295 = vld [vmem:[#allocation15 + $0x1c8] sm:$0xff]
        %v1296 = vld [vmem:[#allocation15 + $0x1d0] sm:$0xff]
        %v1297 = vld [vmem:[#allocation15 + $0x1d8] sm:$0xff]
        %v1298 = vld [vmem:[#allocation15 + $0x1e0] sm:$0xff]
        %v1299 = vld [vmem:[#allocation15 + $0x1e8] sm:$0xff]
        %v1300 = vld [vmem:[#allocation15 + $0x1f0] sm:$0xff]
        %v1301 = vld [vmem:[#allocation15 + $0x1f8] sm:$0xff]
        %1302 = vmatprep.subr.mxu0 %v1299
        %1303 = vmatpush1.msra.mxu0 %v1298
        %1304 = vmatprep.subr.mxu0 %v1295
        %1305 = vmatpush1.msra.mxu0 %v1294
        %1306 = vmatprep.subr.mxu0 %v1291
        %1307 = vmatpush1.msra.mxu0 %v1290
        %1308 = vmatprep.subr.mxu0 %v1287
        %1309 = vmatpush1.msra.mxu0 %v1286
        %1310 = vmatprep.subr.mxu0 %v1283
        %1311 = vmatpush1.msra.mxu0 %v1282
        %1312 = vmatprep.subr.mxu0 %v1279
        %1313 = vmatpush1.msra.mxu0 %v1278
        %1314 = vmatprep.subr.mxu0 %v1275
        %1315 = vmatpush1.msra.mxu0 %v1274
        %1316 = vmatprep.subr.mxu0 %v1271
        %1317 = vmatpush1.msra.mxu0 %v1270
        %1318 = vmatprep.subr.mxu0 %v1267
        %1319 = vmatpush1.msra.mxu0 %v1266
        %1320 = vmatprep.subr.mxu0 %v1263
        %1321 = vmatpush1.msra.mxu0 %v1262
        %1322 = vmatprep.subr.mxu0 %v1259
        %1323 = vmatpush1.msra.mxu0 %v1258
        %1324 = vmatprep.subr.mxu0 %v1255
        %1325 = vmatpush1.msra.mxu0 %v1254
        %1326 = vmatprep.subr.mxu0 %v1251
        %1327 = vmatpush1.msra.mxu0 %v1250
        %1328 = vmatprep.subr.mxu0 %v1247
        %1329 = vmatpush1.msra.mxu0 %v1246
        %1330 = vmatprep.subr.mxu0 %v1243
        %1331 = vmatpush1.msra.mxu0 %v1242
        %1332 = vmatprep.subr.mxu0 %v1239
        %1333 = vmatpush1.msra.mxu0 %v1238
        %1334 = vmatprep.subr.mxu0 0.0
        %1335 = vmatpush2.msra.mxu0 0.0
        %1336 = vmatprep.subr.mxu0 0.0
        %1337 = vmatpush2.msra.mxu0 0.0
        %1338 = vmatprep.subr.mxu0 0.0
        %1339 = vmatpush2.msra.mxu0 0.0
        %1340 = vmatprep.subr.mxu0 0.0
        %1341 = vmatpush2.msra.mxu0 0.0
        %1342 = vmatprep.subr.mxu0 0.0
        %1343 = vmatpush2.msra.mxu0 0.0
        %1344 = vmatprep.subr.mxu0 0.0
        %1345 = vmatpush2.msra.mxu0 0.0
        %1346 = vmatprep.subr.mxu0 0.0
        %1347 = vmatpush2.msra.mxu0 0.0
        %1348 = vmatprep.subr.mxu0 0.0
        %1349 = vmatpush2.msra.mxu0 0.0
        %1350 = vmatprep.subr.mxu0 0.0
        %1351 = vmatpush2.msra.mxu0 0.0
        %1352 = vmatprep.subr.mxu0 0.0
        %1353 = vmatpush2.msra.mxu0 0.0
        %1354 = vmatprep.subr.mxu0 0.0
        %1355 = vmatpush2.msra.mxu0 0.0
        %1356 = vmatprep.subr.mxu0 0.0
        %1357 = vmatpush2.msra.mxu0 0.0
        %1358 = vmatprep.subr.mxu0 0.0
        %1359 = vmatpush2.msra.mxu0 0.0
        %1360 = vmatprep.subr.mxu0 0.0
        %1361 = vmatpush2.msra.mxu0 0.0
        %1362 = vmatprep.subr.mxu0 0.0
        %1363 = vmatpush2.msra.mxu0 0.0
        %1364 = vmatprep.subr.mxu0 0.0
        %1365 = vmatpush2.msra.mxu0 0.0
        %1366 = vmatprep.mubr.f32.mxu0 0.0
        %1367 = vmatmul.mubr.f32.gmra.mxu0 %v1234
        %v1368 = vpop.f32.mrf.mxu0
        %v1369 = vadd.f32 0.0, %v1368
        %v1370 = vpop.f32.mrf.mxu0
        %v1371 = vadd.f32 0.0, %v1370
        %1372 = vdwg.mxu0
        %1373 = vmatprep.subr.mxu0 %v1301
        %1374 = vmatpush1.msra.mxu0 %v1300
        %1375 = vmatprep.subr.mxu0 %v1297
        %1376 = vmatpush1.msra.mxu0 %v1296
        %1377 = vmatprep.subr.mxu0 %v1293
        %1378 = vmatpush1.msra.mxu0 %v1292
        %1379 = vmatprep.subr.mxu0 %v1289
        %1380 = vmatpush1.msra.mxu0 %v1288
        %1381 = vmatprep.subr.mxu0 %v1285
        %1382 = vmatpush1.msra.mxu0 %v1284
        %1383 = vmatprep.subr.mxu0 %v1281
        %1384 = vmatpush1.msra.mxu0 %v1280
        %1385 = vmatprep.subr.mxu0 %v1277
        %1386 = vmatpush1.msra.mxu0 %v1276
        %1387 = vmatprep.subr.mxu0 %v1273
        %1388 = vmatpush1.msra.mxu0 %v1272
        %1389 = vmatprep.subr.mxu0 %v1269
        %1390 = vmatpush1.msra.mxu0 %v1268
        %1391 = vmatprep.subr.mxu0 %v1265
        %1392 = vmatpush1.msra.mxu0 %v1264
        %1393 = vmatprep.subr.mxu0 %v1261
        %1394 = vmatpush1.msra.mxu0 %v1260
        %1395 = vmatprep.subr.mxu0 %v1257
        %1396 = vmatpush1.msra.mxu0 %v1256
        %1397 = vmatprep.subr.mxu0 %v1253
        %1398 = vmatpush1.msra.mxu0 %v1252
        %1399 = vmatprep.subr.mxu0 %v1249
        %1400 = vmatpush1.msra.mxu0 %v1248
        %1401 = vmatprep.subr.mxu0 %v1245
        %1402 = vmatpush1.msra.mxu0 %v1244
        %1403 = vmatprep.subr.mxu0 %v1241
        %1404 = vmatpush1.msra.mxu0 %v1240
        %1405 = vmatprep.subr.mxu0 0.0
        %1406 = vmatpush2.msra.mxu0 0.0
        %1407 = vmatprep.subr.mxu0 0.0
        %1408 = vmatpush2.msra.mxu0 0.0
        %1409 = vmatprep.subr.mxu0 0.0
        %1410 = vmatpush2.msra.mxu0 0.0
        %1411 = vmatprep.subr.mxu0 0.0
        %1412 = vmatpush2.msra.mxu0 0.0
        %1413 = vmatprep.subr.mxu0 0.0
        %1414 = vmatpush2.msra.mxu0 0.0
        %1415 = vmatprep.subr.mxu0 0.0
        %1416 = vmatpush2.msra.mxu0 0.0
        %1417 = vmatprep.subr.mxu0 0.0
        %1418 = vmatpush2.msra.mxu0 0.0
        %1419 = vmatprep.subr.mxu0 0.0
        %1420 = vmatpush2.msra.mxu0 0.0
        %1421 = vmatprep.subr.mxu0 0.0
        %1422 = vmatpush2.msra.mxu0 0.0
        %1423 = vmatprep.subr.mxu0 0.0
        %1424 = vmatpush2.msra.mxu0 0.0
        %1425 = vmatprep.subr.mxu0 0.0
        %1426 = vmatpush2.msra.mxu0 0.0
        %1427 = vmatprep.subr.mxu0 0.0
        %1428 = vmatpush2.msra.mxu0 0.0
        %1429 = vmatprep.subr.mxu0 0.0
        %1430 = vmatpush2.msra.mxu0 0.0
        %1431 = vmatprep.subr.mxu0 0.0
        %1432 = vmatpush2.msra.mxu0 0.0
        %1433 = vmatprep.subr.mxu0 0.0
        %1434 = vmatpush2.msra.mxu0 0.0
        %1435 = vmatprep.subr.mxu0 0.0
        %1436 = vmatpush2.msra.mxu0 0.0
        %1437 = vmatprep.mubr.f32.mxu0 0.0
        %1438 = vmatmul.mubr.f32.gmra.mxu0 %v1234
        %v1439 = vpop.f32.mrf.mxu0
        %v1440 = vadd.f32 0.0, %v1439
        %v1441 = vpop.f32.mrf.mxu0
        %v1442 = vadd.f32 0.0, %v1441
        %1443 = vdwg.mxu0
        %v1448 = vcombine.low %v1369, %v1371
        %v1449 = vcombine.low %v1440, %v1442
        %v1451 = vunpack.c.l.s4 1966171168
        %v1452 = vunpack.c.0.s8 %v1451
        %v1453 = vlaneseq
        %v1454 = vshrl.u32 %v1453, 7
        %v1455 = vsub.s32 %v1452, %v1454
        %v1456 = vrot.slane %v1448, %v1455
        %v1458 = vunpack.c.l.s4 1966171168
        %v1459 = vunpack.c.0.s8 %v1458
        %v1460 = vlaneseq
        %v1461 = vshrl.u32 %v1460, 7
        %v1462 = vsub.s32 %v1459, %v1461
        %v1463 = vrot.slane %v1449, %v1462
        %v1464 = vcombine.low %v1456, %v1463
        %v1466 = vunpack.c.l.s4 1966171168
        %v1467 = vunpack.c.0.s8 %v1466
        %v1468 = vlaneseq
        %v1469 = vshrl.u32 %v1468, 7
        %v1470 = vsub.s32 %v1467, %v1469
        %v1471 = vrot.slane %v1464, %v1470
        %v1473 = vadd.f32 %v1237, %v1471
        %v1474 = vxor.u32 %v1473, 2147483648
        %v1475 = vmul.f32 %v1474, 1.442695
        %v1476 = vpow.pop %v1475
        %v1477 = vadd.f32 %v1476, 1.0
        %v1478 = vrcp.pop %v1477
        %v1479 = vmul.f32 1.0, %v1478
        %v1481 = vrot.slane %v1473, 1
        %v1483 = vxor.u32 %v1481, 2147483648
        %v1484 = vmul.f32 %v1483, 1.442695
        %v1485 = vpow.pop %v1484
        %v1486 = vadd.f32 %v1485, 1.0
        %v1487 = vrcp.pop %v1486
        %v1488 = vmul.f32 1.0, %v1487
        %v1489 = vrot.slane %v1473, 2
        %v1491 = vtanh.pop %v1489
        %v1492 = vrot.slane %v1473, 3
        %v1494 = vxor.u32 %v1492, 2147483648
        %v1495 = vmul.f32 %v1494, 1.442695
        %v1496 = vpow.pop %v1495
        %v1497 = vadd.f32 %v1496, 1.0
        %v1498 = vrcp.pop %v1497
        %v1499 = vmul.f32 1.0, %v1498
        %v1500 = vmul.f32 %v1488, %v1235
        %v1501 = vmul.f32 %v1479, %v1491
        %v1502 = vadd.f32 %v1500, %v1501
        %v1503 = vtanh.pop %v1502
        %v1504 = vmul.f32 %v1499, %v1503
        %1505 = vst [vmem:[#allocation3 + $0x1] sm:$0x1] %v1504
        %s1506 = sadd.s32 %s957, 2
        %s1507 = sld [smem:[#allocation5 + %s1506]]
        %v1508 = vstv %s1507
        %v1509 = vmul.f32 %v1504, %v1508
        %v1510 = vmul.f32 %v1502, %v1508
        %s1511 = scalar_lea.vmem [#allocation2], 2
        %v1512 = vld [vmem:[%s1511] ss:$8 sm:$0xf]
        %v1513 = vld [vmem:[#allocation15] sm:$0xff]
        %v1514 = vld [vmem:[#allocation15 + $0x8] sm:$0xff]
        %v1515 = vld [vmem:[#allocation15 + $0x10] sm:$0xff]
        %v1516 = vld [vmem:[#allocation15 + $0x18] sm:$0xff]
        %v1517 = vld [vmem:[#allocation15 + $0x20] sm:$0xff]
        %v1518 = vld [vmem:[#allocation15 + $0x28] sm:$0xff]
        %v1519 = vld [vmem:[#allocation15 + $0x30] sm:$0xff]
        %v1520 = vld [vmem:[#allocation15 + $0x38] sm:$0xff]
        %v1521 = vld [vmem:[#allocation15 + $0x40] sm:$0xff]
        %v1522 = vld [vmem:[#allocation15 + $0x48] sm:$0xff]
        %v1523 = vld [vmem:[#allocation15 + $0x50] sm:$0xff]
        %v1524 = vld [vmem:[#allocation15 + $0x58] sm:$0xff]
        %v1525 = vld [vmem:[#allocation15 + $0x60] sm:$0xff]
        %v1526 = vld [vmem:[#allocation15 + $0x68] sm:$0xff]
        %v1527 = vld [vmem:[#allocation15 + $0x70] sm:$0xff]
        %v1528 = vld [vmem:[#allocation15 + $0x78] sm:$0xff]
        %v1529 = vld [vmem:[#allocation15 + $0x80] sm:$0xff]
        %v1530 = vld [vmem:[#allocation15 + $0x88] sm:$0xff]
        %v1531 = vld [vmem:[#allocation15 + $0x90] sm:$0xff]
        %v1532 = vld [vmem:[#allocation15 + $0x98] sm:$0xff]
        %v1533 = vld [vmem:[#allocation15 + $0xa0] sm:$0xff]
        %v1534 = vld [vmem:[#allocation15 + $0xa8] sm:$0xff]
        %v1535 = vld [vmem:[#allocation15 + $0xb0] sm:$0xff]
        %v1536 = vld [vmem:[#allocation15 + $0xb8] sm:$0xff]
        %v1537 = vld [vmem:[#allocation15 + $0xc0] sm:$0xff]
        %v1538 = vld [vmem:[#allocation15 + $0xc8] sm:$0xff]
        %v1539 = vld [vmem:[#allocation15 + $0xd0] sm:$0xff]
        %v1540 = vld [vmem:[#allocation15 + $0xd8] sm:$0xff]
        %v1541 = vld [vmem:[#allocation15 + $0xe0] sm:$0xff]
        %v1542 = vld [vmem:[#allocation15 + $0xe8] sm:$0xff]
        %v1543 = vld [vmem:[#allocation15 + $0xf0] sm:$0xff]
        %v1544 = vld [vmem:[#allocation15 + $0xf8] sm:$0xff]
        %v1545 = vld [vmem:[#allocation15 + $0x100] sm:$0xff]
        %v1546 = vld [vmem:[#allocation15 + $0x108] sm:$0xff]
        %v1547 = vld [vmem:[#allocation15 + $0x110] sm:$0xff]
        %v1548 = vld [vmem:[#allocation15 + $0x118] sm:$0xff]
        %v1549 = vld [vmem:[#allocation15 + $0x120] sm:$0xff]
        %v1550 = vld [vmem:[#allocation15 + $0x128] sm:$0xff]
        %v1551 = vld [vmem:[#allocation15 + $0x130] sm:$0xff]
        %v1552 = vld [vmem:[#allocation15 + $0x138] sm:$0xff]
        %v1553 = vld [vmem:[#allocation15 + $0x140] sm:$0xff]
        %v1554 = vld [vmem:[#allocation15 + $0x148] sm:$0xff]
        %v1555 = vld [vmem:[#allocation15 + $0x150] sm:$0xff]
        %v1556 = vld [vmem:[#allocation15 + $0x158] sm:$0xff]
        %v1557 = vld [vmem:[#allocation15 + $0x160] sm:$0xff]
        %v1558 = vld [vmem:[#allocation15 + $0x168] sm:$0xff]
        %v1559 = vld [vmem:[#allocation15 + $0x170] sm:$0xff]
        %v1560 = vld [vmem:[#allocation15 + $0x178] sm:$0xff]
        %v1561 = vld [vmem:[#allocation15 + $0x180] sm:$0xff]
        %v1562 = vld [vmem:[#allocation15 + $0x188] sm:$0xff]
        %v1563 = vld [vmem:[#allocation15 + $0x190] sm:$0xff]
        %v1564 = vld [vmem:[#allocation15 + $0x198] sm:$0xff]
        %v1565 = vld [vmem:[#allocation15 + $0x1a0] sm:$0xff]
        %v1566 = vld [vmem:[#allocation15 + $0x1a8] sm:$0xff]
        %v1567 = vld [vmem:[#allocation15 + $0x1b0] sm:$0xff]
        %v1568 = vld [vmem:[#allocation15 + $0x1b8] sm:$0xff]
        %v1569 = vld [vmem:[#allocation15 + $0x1c0] sm:$0xff]
        %v1570 = vld [vmem:[#allocation15 + $0x1c8] sm:$0xff]
        %v1571 = vld [vmem:[#allocation15 + $0x1d0] sm:$0xff]
        %v1572 = vld [vmem:[#allocation15 + $0x1d8] sm:$0xff]
        %v1573 = vld [vmem:[#allocation15 + $0x1e0] sm:$0xff]
        %v1574 = vld [vmem:[#allocation15 + $0x1e8] sm:$0xff]
        %v1575 = vld [vmem:[#allocation15 + $0x1f0] sm:$0xff]
        %v1576 = vld [vmem:[#allocation15 + $0x1f8] sm:$0xff]
        %1577 = vmatprep.subr.mxu0 %v1574
        %1578 = vmatpush1.msra.mxu0 %v1573
        %1579 = vmatprep.subr.mxu0 %v1570
        %1580 = vmatpush1.msra.mxu0 %v1569
        %1581 = vmatprep.subr.mxu0 %v1566
        %1582 = vmatpush1.msra.mxu0 %v1565
        %1583 = vmatprep.subr.mxu0 %v1562
        %1584 = vmatpush1.msra.mxu0 %v1561
        %1585 = vmatprep.subr.mxu0 %v1558
        %1586 = vmatpush1.msra.mxu0 %v1557
        %1587 = vmatprep.subr.mxu0 %v1554
        %1588 = vmatpush1.msra.mxu0 %v1553
        %1589 = vmatprep.subr.mxu0 %v1550
        %1590 = vmatpush1.msra.mxu0 %v1549
        %1591 = vmatprep.subr.mxu0 %v1546
        %1592 = vmatpush1.msra.mxu0 %v1545
        %1593 = vmatprep.subr.mxu0 %v1542
        %1594 = vmatpush1.msra.mxu0 %v1541
        %1595 = vmatprep.subr.mxu0 %v1538
        %1596 = vmatpush1.msra.mxu0 %v1537
        %1597 = vmatprep.subr.mxu0 %v1534
        %1598 = vmatpush1.msra.mxu0 %v1533
        %1599 = vmatprep.subr.mxu0 %v1530
        %1600 = vmatpush1.msra.mxu0 %v1529
        %1601 = vmatprep.subr.mxu0 %v1526
        %1602 = vmatpush1.msra.mxu0 %v1525
        %1603 = vmatprep.subr.mxu0 %v1522
        %1604 = vmatpush1.msra.mxu0 %v1521
        %1605 = vmatprep.subr.mxu0 %v1518
        %1606 = vmatpush1.msra.mxu0 %v1517
        %1607 = vmatprep.subr.mxu0 %v1514
        %1608 = vmatpush1.msra.mxu0 %v1513
        %1609 = vmatprep.subr.mxu0 0.0
        %1610 = vmatpush2.msra.mxu0 0.0
        %1611 = vmatprep.subr.mxu0 0.0
        %1612 = vmatpush2.msra.mxu0 0.0
        %1613 = vmatprep.subr.mxu0 0.0
        %1614 = vmatpush2.msra.mxu0 0.0
        %1615 = vmatprep.subr.mxu0 0.0
        %1616 = vmatpush2.msra.mxu0 0.0
        %1617 = vmatprep.subr.mxu0 0.0
        %1618 = vmatpush2.msra.mxu0 0.0
        %1619 = vmatprep.subr.mxu0 0.0
        %1620 = vmatpush2.msra.mxu0 0.0
        %1621 = vmatprep.subr.mxu0 0.0
        %1622 = vmatpush2.msra.mxu0 0.0
        %1623 = vmatprep.subr.mxu0 0.0
        %1624 = vmatpush2.msra.mxu0 0.0
        %1625 = vmatprep.subr.mxu0 0.0
        %1626 = vmatpush2.msra.mxu0 0.0
        %1627 = vmatprep.subr.mxu0 0.0
        %1628 = vmatpush2.msra.mxu0 0.0
        %1629 = vmatprep.subr.mxu0 0.0
        %1630 = vmatpush2.msra.mxu0 0.0
        %1631 = vmatprep.subr.mxu0 0.0
        %1632 = vmatpush2.msra.mxu0 0.0
        %1633 = vmatprep.subr.mxu0 0.0
        %1634 = vmatpush2.msra.mxu0 0.0
        %1635 = vmatprep.subr.mxu0 0.0
        %1636 = vmatpush2.msra.mxu0 0.0
        %1637 = vmatprep.subr.mxu0 0.0
        %1638 = vmatpush2.msra.mxu0 0.0
        %1639 = vmatprep.subr.mxu0 0.0
        %1640 = vmatpush2.msra.mxu0 0.0
        %1641 = vmatprep.mubr.f32.mxu0 0.0
        %1642 = vmatmul.mubr.f32.gmra.mxu0 %v1509
        %v1643 = vpop.f32.mrf.mxu0
        %v1644 = vadd.f32 0.0, %v1643
        %v1645 = vpop.f32.mrf.mxu0
        %v1646 = vadd.f32 0.0, %v1645
        %1647 = vdwg.mxu0
        %1648 = vmatprep.subr.mxu0 %v1576
        %1649 = vmatpush1.msra.mxu0 %v1575
        %1650 = vmatprep.subr.mxu0 %v1572
        %1651 = vmatpush1.msra.mxu0 %v1571
        %1652 = vmatprep.subr.mxu0 %v1568
        %1653 = vmatpush1.msra.mxu0 %v1567
        %1654 = vmatprep.subr.mxu0 %v1564
        %1655 = vmatpush1.msra.mxu0 %v1563
        %1656 = vmatprep.subr.mxu0 %v1560
        %1657 = vmatpush1.msra.mxu0 %v1559
        %1658 = vmatprep.subr.mxu0 %v1556
        %1659 = vmatpush1.msra.mxu0 %v1555
        %1660 = vmatprep.subr.mxu0 %v1552
        %1661 = vmatpush1.msra.mxu0 %v1551
        %1662 = vmatprep.subr.mxu0 %v1548
        %1663 = vmatpush1.msra.mxu0 %v1547
        %1664 = vmatprep.subr.mxu0 %v1544
        %1665 = vmatpush1.msra.mxu0 %v1543
        %1666 = vmatprep.subr.mxu0 %v1540
        %1667 = vmatpush1.msra.mxu0 %v1539
        %1668 = vmatprep.subr.mxu0 %v1536
        %1669 = vmatpush1.msra.mxu0 %v1535
        %1670 = vmatprep.subr.mxu0 %v1532
        %1671 = vmatpush1.msra.mxu0 %v1531
        %1672 = vmatprep.subr.mxu0 %v1528
        %1673 = vmatpush1.msra.mxu0 %v1527
        %1674 = vmatprep.subr.mxu0 %v1524
        %1675 = vmatpush1.msra.mxu0 %v1523
        %1676 = vmatprep.subr.mxu0 %v1520
        %1677 = vmatpush1.msra.mxu0 %v1519
        %1678 = vmatprep.subr.mxu0 %v1516
        %1679 = vmatpush1.msra.mxu0 %v1515
        %1680 = vmatprep.subr.mxu0 0.0
        %1681 = vmatpush2.msra.mxu0 0.0
        %1682 = vmatprep.subr.mxu0 0.0
        %1683 = vmatpush2.msra.mxu0 0.0
        %1684 = vmatprep.subr.mxu0 0.0
        %1685 = vmatpush2.msra.mxu0 0.0
        %1686 = vmatprep.subr.mxu0 0.0
        %1687 = vmatpush2.msra.mxu0 0.0
        %1688 = vmatprep.subr.mxu0 0.0
        %1689 = vmatpush2.msra.mxu0 0.0
        %1690 = vmatprep.subr.mxu0 0.0
        %1691 = vmatpush2.msra.mxu0 0.0
        %1692 = vmatprep.subr.mxu0 0.0
        %1693 = vmatpush2.msra.mxu0 0.0
        %1694 = vmatprep.subr.mxu0 0.0
        %1695 = vmatpush2.msra.mxu0 0.0
        %1696 = vmatprep.subr.mxu0 0.0
        %1697 = vmatpush2.msra.mxu0 0.0
        %1698 = vmatprep.subr.mxu0 0.0
        %1699 = vmatpush2.msra.mxu0 0.0
        %1700 = vmatprep.subr.mxu0 0.0
        %1701 = vmatpush2.msra.mxu0 0.0
        %1702 = vmatprep.subr.mxu0 0.0
        %1703 = vmatpush2.msra.mxu0 0.0
        %1704 = vmatprep.subr.mxu0 0.0
        %1705 = vmatpush2.msra.mxu0 0.0
        %1706 = vmatprep.subr.mxu0 0.0
        %1707 = vmatpush2.msra.mxu0 0.0
        %1708 = vmatprep.subr.mxu0 0.0
        %1709 = vmatpush2.msra.mxu0 0.0
        %1710 = vmatprep.subr.mxu0 0.0
        %1711 = vmatpush2.msra.mxu0 0.0
        %1712 = vmatprep.mubr.f32.mxu0 0.0
        %1713 = vmatmul.mubr.f32.gmra.mxu0 %v1509
        %v1714 = vpop.f32.mrf.mxu0
        %v1715 = vadd.f32 0.0, %v1714
        %v1716 = vpop.f32.mrf.mxu0
        %v1717 = vadd.f32 0.0, %v1716
        %1718 = vdwg.mxu0
        %v1723 = vcombine.low %v1644, %v1646
        %v1724 = vcombine.low %v1715, %v1717
        %v1726 = vunpack.c.l.s4 1966171168
        %v1727 = vunpack.c.0.s8 %v1726
        %v1728 = vlaneseq
        %v1729 = vshrl.u32 %v1728, 7
        %v1730 = vsub.s32 %v1727, %v1729
        %v1731 = vrot.slane %v1723, %v1730
        %v1733 = vunpack.c.l.s4 1966171168
        %v1734 = vunpack.c.0.s8 %v1733
        %v1735 = vlaneseq
        %v1736 = vshrl.u32 %v1735, 7
        %v1737 = vsub.s32 %v1734, %v1736
        %v1738 = vrot.slane %v1724, %v1737
        %v1739 = vcombine.low %v1731, %v1738
        %v1741 = vunpack.c.l.s4 1966171168
        %v1742 = vunpack.c.0.s8 %v1741
        %v1743 = vlaneseq
        %v1744 = vshrl.u32 %v1743, 7
        %v1745 = vsub.s32 %v1742, %v1744
        %v1746 = vrot.slane %v1739, %v1745
        %v1748 = vadd.f32 %v1512, %v1746
        %v1749 = vxor.u32 %v1748, 2147483648
        %v1750 = vmul.f32 %v1749, 1.442695
        %v1751 = vpow.pop %v1750
        %v1752 = vadd.f32 %v1751, 1.0
        %v1753 = vrcp.pop %v1752
        %v1754 = vmul.f32 1.0, %v1753
        %v1756 = vrot.slane %v1748, 1
        %v1758 = vxor.u32 %v1756, 2147483648
        %v1759 = vmul.f32 %v1758, 1.442695
        %v1760 = vpow.pop %v1759
        %v1761 = vadd.f32 %v1760, 1.0
        %v1762 = vrcp.pop %v1761
        %v1763 = vmul.f32 1.0, %v1762
        %v1764 = vrot.slane %v1748, 2
        %v1766 = vtanh.pop %v1764
        %v1767 = vrot.slane %v1748, 3
        %v1769 = vxor.u32 %v1767, 2147483648
        %v1770 = vmul.f32 %v1769, 1.442695
        %v1771 = vpow.pop %v1770
        %v1772 = vadd.f32 %v1771, 1.0
        %v1773 = vrcp.pop %v1772
        %v1774 = vmul.f32 1.0, %v1773
        %v1775 = vmul.f32 %v1763, %v1510
        %v1776 = vmul.f32 %v1754, %v1766
        %v1777 = vadd.f32 %v1775, %v1776
        %v1778 = vtanh.pop %v1777
        %v1779 = vmul.f32 %v1774, %v1778
        %1780 = vst [vmem:[#allocation3 + $0x2] sm:$0x1] %v1779
        %s1781 = sadd.s32 %s957, 3
        %s1782 = sld [smem:[#allocation5 + %s1781]]
        %v1783 = vstv %s1782
        %v1784 = vmul.f32 %v1779, %v1783
        %v1785 = vmul.f32 %v1777, %v1783
        %s1786 = scalar_lea.vmem [#allocation2], 3
        %v1787 = vld [vmem:[%s1786] ss:$8 sm:$0xf]
        %v1788 = vld [vmem:[#allocation15] sm:$0xff]
        %v1789 = vld [vmem:[#allocation15 + $0x8] sm:$0xff]
        %v1790 = vld [vmem:[#allocation15 + $0x10] sm:$0xff]
        %v1791 = vld [vmem:[#allocation15 + $0x18] sm:$0xff]
        %v1792 = vld [vmem:[#allocation15 + $0x20] sm:$0xff]
        %v1793 = vld [vmem:[#allocation15 + $0x28] sm:$0xff]
        %v1794 = vld [vmem:[#allocation15 + $0x30] sm:$0xff]
        %v1795 = vld [vmem:[#allocation15 + $0x38] sm:$0xff]
        %v1796 = vld [vmem:[#allocation15 + $0x40] sm:$0xff]
        %v1797 = vld [vmem:[#allocation15 + $0x48] sm:$0xff]
        %v1798 = vld [vmem:[#allocation15 + $0x50] sm:$0xff]
        %v1799 = vld [vmem:[#allocation15 + $0x58] sm:$0xff]
        %v1800 = vld [vmem:[#allocation15 + $0x60] sm:$0xff]
        %v1801 = vld [vmem:[#allocation15 + $0x68] sm:$0xff]
        %v1802 = vld [vmem:[#allocation15 + $0x70] sm:$0xff]
        %v1803 = vld [vmem:[#allocation15 + $0x78] sm:$0xff]
        %v1804 = vld [vmem:[#allocation15 + $0x80] sm:$0xff]
        %v1805 = vld [vmem:[#allocation15 + $0x88] sm:$0xff]
        %v1806 = vld [vmem:[#allocation15 + $0x90] sm:$0xff]
        %v1807 = vld [vmem:[#allocation15 + $0x98] sm:$0xff]
        %v1808 = vld [vmem:[#allocation15 + $0xa0] sm:$0xff]
        %v1809 = vld [vmem:[#allocation15 + $0xa8] sm:$0xff]
        %v1810 = vld [vmem:[#allocation15 + $0xb0] sm:$0xff]
        %v1811 = vld [vmem:[#allocation15 + $0xb8] sm:$0xff]
        %v1812 = vld [vmem:[#allocation15 + $0xc0] sm:$0xff]
        %v1813 = vld [vmem:[#allocation15 + $0xc8] sm:$0xff]
        %v1814 = vld [vmem:[#allocation15 + $0xd0] sm:$0xff]
        %v1815 = vld [vmem:[#allocation15 + $0xd8] sm:$0xff]
        %v1816 = vld [vmem:[#allocation15 + $0xe0] sm:$0xff]
        %v1817 = vld [vmem:[#allocation15 + $0xe8] sm:$0xff]
        %v1818 = vld [vmem:[#allocation15 + $0xf0] sm:$0xff]
        %v1819 = vld [vmem:[#allocation15 + $0xf8] sm:$0xff]
        %v1820 = vld [vmem:[#allocation15 + $0x100] sm:$0xff]
        %v1821 = vld [vmem:[#allocation15 + $0x108] sm:$0xff]
        %v1822 = vld [vmem:[#allocation15 + $0x110] sm:$0xff]
        %v1823 = vld [vmem:[#allocation15 + $0x118] sm:$0xff]
        %v1824 = vld [vmem:[#allocation15 + $0x120] sm:$0xff]
        %v1825 = vld [vmem:[#allocation15 + $0x128] sm:$0xff]
        %v1826 = vld [vmem:[#allocation15 + $0x130] sm:$0xff]
        %v1827 = vld [vmem:[#allocation15 + $0x138] sm:$0xff]
        %v1828 = vld [vmem:[#allocation15 + $0x140] sm:$0xff]
        %v1829 = vld [vmem:[#allocation15 + $0x148] sm:$0xff]
        %v1830 = vld [vmem:[#allocation15 + $0x150] sm:$0xff]
        %v1831 = vld [vmem:[#allocation15 + $0x158] sm:$0xff]
        %v1832 = vld [vmem:[#allocation15 + $0x160] sm:$0xff]
        %v1833 = vld [vmem:[#allocation15 + $0x168] sm:$0xff]
        %v1834 = vld [vmem:[#allocation15 + $0x170] sm:$0xff]
        %v1835 = vld [vmem:[#allocation15 + $0x178] sm:$0xff]
        %v1836 = vld [vmem:[#allocation15 + $0x180] sm:$0xff]
        %v1837 = vld [vmem:[#allocation15 + $0x188] sm:$0xff]
        %v1838 = vld [vmem:[#allocation15 + $0x190] sm:$0xff]
        %v1839 = vld [vmem:[#allocation15 + $0x198] sm:$0xff]
        %v1840 = vld [vmem:[#allocation15 + $0x1a0] sm:$0xff]
        %v1841 = vld [vmem:[#allocation15 + $0x1a8] sm:$0xff]
        %v1842 = vld [vmem:[#allocation15 + $0x1b0] sm:$0xff]
        %v1843 = vld [vmem:[#allocation15 + $0x1b8] sm:$0xff]
        %v1844 = vld [vmem:[#allocation15 + $0x1c0] sm:$0xff]
        %v1845 = vld [vmem:[#allocation15 + $0x1c8] sm:$0xff]
        %v1846 = vld [vmem:[#allocation15 + $0x1d0] sm:$0xff]
        %v1847 = vld [vmem:[#allocation15 + $0x1d8] sm:$0xff]
        %v1848 = vld [vmem:[#allocation15 + $0x1e0] sm:$0xff]
        %v1849 = vld [vmem:[#allocation15 + $0x1e8] sm:$0xff]
        %v1850 = vld [vmem:[#allocation15 + $0x1f0] sm:$0xff]
        %v1851 = vld [vmem:[#allocation15 + $0x1f8] sm:$0xff]
        %1852 = vmatprep.subr.mxu0 %v1849
        %1853 = vmatpush1.msra.mxu0 %v1848
        %1854 = vmatprep.subr.mxu0 %v1845
        %1855 = vmatpush1.msra.mxu0 %v1844
        %1856 = vmatprep.subr.mxu0 %v1841
        %1857 = vmatpush1.msra.mxu0 %v1840
        %1858 = vmatprep.subr.mxu0 %v1837
        %1859 = vmatpush1.msra.mxu0 %v1836
        %1860 = vmatprep.subr.mxu0 %v1833
        %1861 = vmatpush1.msra.mxu0 %v1832
        %1862 = vmatprep.subr.mxu0 %v1829
        %1863 = vmatpush1.msra.mxu0 %v1828
        %1864 = vmatprep.subr.mxu0 %v1825
        %1865 = vmatpush1.msra.mxu0 %v1824
        %1866 = vmatprep.subr.mxu0 %v1821
        %1867 = vmatpush1.msra.mxu0 %v1820
        %1868 = vmatprep.subr.mxu0 %v1817
        %1869 = vmatpush1.msra.mxu0 %v1816
        %1870 = vmatprep.subr.mxu0 %v1813
        %1871 = vmatpush1.msra.mxu0 %v1812
        %1872 = vmatprep.subr.mxu0 %v1809
        %1873 = vmatpush1.msra.mxu0 %v1808
        %1874 = vmatprep.subr.mxu0 %v1805
        %1875 = vmatpush1.msra.mxu0 %v1804
        %1876 = vmatprep.subr.mxu0 %v1801
        %1877 = vmatpush1.msra.mxu0 %v1800
        %1878 = vmatprep.subr.mxu0 %v1797
        %1879 = vmatpush1.msra.mxu0 %v1796
        %1880 = vmatprep.subr.mxu0 %v1793
        %1881 = vmatpush1.msra.mxu0 %v1792
        %1882 = vmatprep.subr.mxu0 %v1789
        %1883 = vmatpush1.msra.mxu0 %v1788
        %1884 = vmatprep.subr.mxu0 0.0
        %1885 = vmatpush2.msra.mxu0 0.0
        %1886 = vmatprep.subr.mxu0 0.0
        %1887 = vmatpush2.msra.mxu0 0.0
        %1888 = vmatprep.subr.mxu0 0.0
        %1889 = vmatpush2.msra.mxu0 0.0
        %1890 = vmatprep.subr.mxu0 0.0
        %1891 = vmatpush2.msra.mxu0 0.0
        %1892 = vmatprep.subr.mxu0 0.0
        %1893 = vmatpush2.msra.mxu0 0.0
        %1894 = vmatprep.subr.mxu0 0.0
        %1895 = vmatpush2.msra.mxu0 0.0
        %1896 = vmatprep.subr.mxu0 0.0
        %1897 = vmatpush2.msra.mxu0 0.0
        %1898 = vmatprep.subr.mxu0 0.0
        %1899 = vmatpush2.msra.mxu0 0.0
        %1900 = vmatprep.subr.mxu0 0.0
        %1901 = vmatpush2.msra.mxu0 0.0
        %1902 = vmatprep.subr.mxu0 0.0
        %1903 = vmatpush2.msra.mxu0 0.0
        %1904 = vmatprep.subr.mxu0 0.0
        %1905 = vmatpush2.msra.mxu0 0.0
        %1906 = vmatprep.subr.mxu0 0.0
        %1907 = vmatpush2.msra.mxu0 0.0
        %1908 = vmatprep.subr.mxu0 0.0
        %1909 = vmatpush2.msra.mxu0 0.0
        %1910 = vmatprep.subr.mxu0 0.0
        %1911 = vmatpush2.msra.mxu0 0.0
        %1912 = vmatprep.subr.mxu0 0.0
        %1913 = vmatpush2.msra.mxu0 0.0
        %1914 = vmatprep.subr.mxu0 0.0
        %1915 = vmatpush2.msra.mxu0 0.0
        %1916 = vmatprep.mubr.f32.mxu0 0.0
        %1917 = vmatmul.mubr.f32.gmra.mxu0 %v1784
        %v1918 = vpop.f32.mrf.mxu0
        %v1919 = vadd.f32 0.0, %v1918
        %v1920 = vpop.f32.mrf.mxu0
        %v1921 = vadd.f32 0.0, %v1920
        %1922 = vdwg.mxu0
        %1923 = vmatprep.subr.mxu0 %v1851
        %1924 = vmatpush1.msra.mxu0 %v1850
        %1925 = vmatprep.subr.mxu0 %v1847
        %1926 = vmatpush1.msra.mxu0 %v1846
        %1927 = vmatprep.subr.mxu0 %v1843
        %1928 = vmatpush1.msra.mxu0 %v1842
        %1929 = vmatprep.subr.mxu0 %v1839
        %1930 = vmatpush1.msra.mxu0 %v1838
        %1931 = vmatprep.subr.mxu0 %v1835
        %1932 = vmatpush1.msra.mxu0 %v1834
        %1933 = vmatprep.subr.mxu0 %v1831
        %1934 = vmatpush1.msra.mxu0 %v1830
        %1935 = vmatprep.subr.mxu0 %v1827
        %1936 = vmatpush1.msra.mxu0 %v1826
        %1937 = vmatprep.subr.mxu0 %v1823
        %1938 = vmatpush1.msra.mxu0 %v1822
        %1939 = vmatprep.subr.mxu0 %v1819
        %1940 = vmatpush1.msra.mxu0 %v1818
        %1941 = vmatprep.subr.mxu0 %v1815
        %1942 = vmatpush1.msra.mxu0 %v1814
        %1943 = vmatprep.subr.mxu0 %v1811
        %1944 = vmatpush1.msra.mxu0 %v1810
        %1945 = vmatprep.subr.mxu0 %v1807
        %1946 = vmatpush1.msra.mxu0 %v1806
        %1947 = vmatprep.subr.mxu0 %v1803
        %1948 = vmatpush1.msra.mxu0 %v1802
        %1949 = vmatprep.subr.mxu0 %v1799
        %1950 = vmatpush1.msra.mxu0 %v1798
        %1951 = vmatprep.subr.mxu0 %v1795
        %1952 = vmatpush1.msra.mxu0 %v1794
        %1953 = vmatprep.subr.mxu0 %v1791
        %1954 = vmatpush1.msra.mxu0 %v1790
        %1955 = vmatprep.subr.mxu0 0.0
        %1956 = vmatpush2.msra.mxu0 0.0
        %1957 = vmatprep.subr.mxu0 0.0
        %1958 = vmatpush2.msra.mxu0 0.0
        %1959 = vmatprep.subr.mxu0 0.0
        %1960 = vmatpush2.msra.mxu0 0.0
        %1961 = vmatprep.subr.mxu0 0.0
        %1962 = vmatpush2.msra.mxu0 0.0
        %1963 = vmatprep.subr.mxu0 0.0
        %1964 = vmatpush2.msra.mxu0 0.0
        %1965 = vmatprep.subr.mxu0 0.0
        %1966 = vmatpush2.msra.mxu0 0.0
        %1967 = vmatprep.subr.mxu0 0.0
        %1968 = vmatpush2.msra.mxu0 0.0
        %1969 = vmatprep.subr.mxu0 0.0
        %1970 = vmatpush2.msra.mxu0 0.0
        %1971 = vmatprep.subr.mxu0 0.0
        %1972 = vmatpush2.msra.mxu0 0.0
        %1973 = vmatprep.subr.mxu0 0.0
        %1974 = vmatpush2.msra.mxu0 0.0
        %1975 = vmatprep.subr.mxu0 0.0
        %1976 = vmatpush2.msra.mxu0 0.0
        %1977 = vmatprep.subr.mxu0 0.0
        %1978 = vmatpush2.msra.mxu0 0.0
        %1979 = vmatprep.subr.mxu0 0.0
        %1980 = vmatpush2.msra.mxu0 0.0
        %1981 = vmatprep.subr.mxu0 0.0
        %1982 = vmatpush2.msra.mxu0 0.0
        %1983 = vmatprep.subr.mxu0 0.0
        %1984 = vmatpush2.msra.mxu0 0.0
        %1985 = vmatprep.subr.mxu0 0.0
        %1986 = vmatpush2.msra.mxu0 0.0
        %1987 = vmatprep.mubr.f32.mxu0 0.0
        %1988 = vmatmul.mubr.f32.gmra.mxu0 %v1784
        %v1989 = vpop.f32.mrf.mxu0
        %v1990 = vadd.f32 0.0, %v1989
        %v1991 = vpop.f32.mrf.mxu0
        %v1992 = vadd.f32 0.0, %v1991
        %1993 = vdwg.mxu0
        %v1998 = vcombine.low %v1919, %v1921
        %v1999 = vcombine.low %v1990, %v1992
        %v2001 = vunpack.c.l.s4 1966171168
        %v2002 = vunpack.c.0.s8 %v2001
        %v2003 = vlaneseq
        %v2004 = vshrl.u32 %v2003, 7
        %v2005 = vsub.s32 %v2002, %v2004
        %v2006 = vrot.slane %v1998, %v2005
        %v2008 = vunpack.c.l.s4 1966171168
        %v2009 = vunpack.c.0.s8 %v2008
        %v2010 = vlaneseq
        %v2011 = vshrl.u32 %v2010, 7
        %v2012 = vsub.s32 %v2009, %v2011
        %v2013 = vrot.slane %v1999, %v2012
        %v2014 = vcombine.low %v2006, %v2013
        %v2016 = vunpack.c.l.s4 1966171168
        %v2017 = vunpack.c.0.s8 %v2016
        %v2018 = vlaneseq
        %v2019 = vshrl.u32 %v2018, 7
        %v2020 = vsub.s32 %v2017, %v2019
        %v2021 = vrot.slane %v2014, %v2020
        %v2023 = vadd.f32 %v1787, %v2021
        %v2024 = vxor.u32 %v2023, 2147483648
        %v2025 = vmul.f32 %v2024, 1.442695
        %v2026 = vpow.pop %v2025
        %v2027 = vadd.f32 %v2026, 1.0
        %v2028 = vrcp.pop %v2027
        %v2029 = vmul.f32 1.0, %v2028
        %v2031 = vrot.slane %v2023, 1
        %v2033 = vxor.u32 %v2031, 2147483648
        %v2034 = vmul.f32 %v2033, 1.442695
        %v2035 = vpow.pop %v2034
        %v2036 = vadd.f32 %v2035, 1.0
        %v2037 = vrcp.pop %v2036
        %v2038 = vmul.f32 1.0, %v2037
        %v2039 = vrot.slane %v2023, 2
        %v2041 = vtanh.pop %v2039
        %v2042 = vrot.slane %v2023, 3
        %v2044 = vxor.u32 %v2042, 2147483648
        %v2045 = vmul.f32 %v2044, 1.442695
        %v2046 = vpow.pop %v2045
        %v2047 = vadd.f32 %v2046, 1.0
        %v2048 = vrcp.pop %v2047
        %v2049 = vmul.f32 1.0, %v2048
        %v2050 = vmul.f32 %v2038, %v1785
        %v2051 = vmul.f32 %v2029, %v2041
        %v2052 = vadd.f32 %v2050, %v2051
        %v2053 = vtanh.pop %v2052
        %v2054 = vmul.f32 %v2049, %v2053
        %2055 = vst [vmem:[#allocation3 + $0x3] sm:$0x1] %v2054
        %s2056 = sadd.s32 %s957, 4
        %s2057 = sld [smem:[#allocation5 + %s2056]]
        %v2058 = vstv %s2057
        %v2059 = vmul.f32 %v2054, %v2058
        %v2060 = vmul.f32 %v2052, %v2058
        %s2061 = scalar_lea.vmem [#allocation2], 4
        %v2062 = vld [vmem:[%s2061] ss:$8 sm:$0xf]
        %v2063 = vld [vmem:[#allocation15] sm:$0xff]
        %v2064 = vld [vmem:[#allocation15 + $0x8] sm:$0xff]
        %v2065 = vld [vmem:[#allocation15 + $0x10] sm:$0xff]
        %v2066 = vld [vmem:[#allocation15 + $0x18] sm:$0xff]
        %v2067 = vld [vmem:[#allocation15 + $0x20] sm:$0xff]
        %v2068 = vld [vmem:[#allocation15 + $0x28] sm:$0xff]
        %v2069 = vld [vmem:[#allocation15 + $0x30] sm:$0xff]
        %v2070 = vld [vmem:[#allocation15 + $0x38] sm:$0xff]
        %v2071 = vld [vmem:[#allocation15 + $0x40] sm:$0xff]
        %v2072 = vld [vmem:[#allocation15 + $0x48] sm:$0xff]
        %v2073 = vld [vmem:[#allocation15 + $0x50] sm:$0xff]
        %v2074 = vld [vmem:[#allocation15 + $0x58] sm:$0xff]
        %v2075 = vld [vmem:[#allocation15 + $0x60] sm:$0xff]
        %v2076 = vld [vmem:[#allocation15 + $0x68] sm:$0xff]
        %v2077 = vld [vmem:[#allocation15 + $0x70] sm:$0xff]
        %v2078 = vld [vmem:[#allocation15 + $0x78] sm:$0xff]
        %v2079 = vld [vmem:[#allocation15 + $0x80] sm:$0xff]
        %v2080 = vld [vmem:[#allocation15 + $0x88] sm:$0xff]
        %v2081 = vld [vmem:[#allocation15 + $0x90] sm:$0xff]
        %v2082 = vld [vmem:[#allocation15 + $0x98] sm:$0xff]
        %v2083 = vld [vmem:[#allocation15 + $0xa0] sm:$0xff]
        %v2084 = vld [vmem:[#allocation15 + $0xa8] sm:$0xff]
        %v2085 = vld [vmem:[#allocation15 + $0xb0] sm:$0xff]
        %v2086 = vld [vmem:[#allocation15 + $0xb8] sm:$0xff]
        %v2087 = vld [vmem:[#allocation15 + $0xc0] sm:$0xff]
        %v2088 = vld [vmem:[#allocation15 + $0xc8] sm:$0xff]
        %v2089 = vld [vmem:[#allocation15 + $0xd0] sm:$0xff]
        %v2090 = vld [vmem:[#allocation15 + $0xd8] sm:$0xff]
        %v2091 = vld [vmem:[#allocation15 + $0xe0] sm:$0xff]
        %v2092 = vld [vmem:[#allocation15 + $0xe8] sm:$0xff]
        %v2093 = vld [vmem:[#allocation15 + $0xf0] sm:$0xff]
        %v2094 = vld [vmem:[#allocation15 + $0xf8] sm:$0xff]
        %v2095 = vld [vmem:[#allocation15 + $0x100] sm:$0xff]
        %v2096 = vld [vmem:[#allocation15 + $0x108] sm:$0xff]
        %v2097 = vld [vmem:[#allocation15 + $0x110] sm:$0xff]
        %v2098 = vld [vmem:[#allocation15 + $0x118] sm:$0xff]
        %v2099 = vld [vmem:[#allocation15 + $0x120] sm:$0xff]
        %v2100 = vld [vmem:[#allocation15 + $0x128] sm:$0xff]
        %v2101 = vld [vmem:[#allocation15 + $0x130] sm:$0xff]
        %v2102 = vld [vmem:[#allocation15 + $0x138] sm:$0xff]
        %v2103 = vld [vmem:[#allocation15 + $0x140] sm:$0xff]
        %v2104 = vld [vmem:[#allocation15 + $0x148] sm:$0xff]
        %v2105 = vld [vmem:[#allocation15 + $0x150] sm:$0xff]
        %v2106 = vld [vmem:[#allocation15 + $0x158] sm:$0xff]
        %v2107 = vld [vmem:[#allocation15 + $0x160] sm:$0xff]
        %v2108 = vld [vmem:[#allocation15 + $0x168] sm:$0xff]
        %v2109 = vld [vmem:[#allocation15 + $0x170] sm:$0xff]
        %v2110 = vld [vmem:[#allocation15 + $0x178] sm:$0xff]
        %v2111 = vld [vmem:[#allocation15 + $0x180] sm:$0xff]
        %v2112 = vld [vmem:[#allocation15 + $0x188] sm:$0xff]
        %v2113 = vld [vmem:[#allocation15 + $0x190] sm:$0xff]
        %v2114 = vld [vmem:[#allocation15 + $0x198] sm:$0xff]
        %v2115 = vld [vmem:[#allocation15 + $0x1a0] sm:$0xff]
        %v2116 = vld [vmem:[#allocation15 + $0x1a8] sm:$0xff]
        %v2117 = vld [vmem:[#allocation15 + $0x1b0] sm:$0xff]
        %v2118 = vld [vmem:[#allocation15 + $0x1b8] sm:$0xff]
        %v2119 = vld [vmem:[#allocation15 + $0x1c0] sm:$0xff]
        %v2120 = vld [vmem:[#allocation15 + $0x1c8] sm:$0xff]
        %v2121 = vld [vmem:[#allocation15 + $0x1d0] sm:$0xff]
        %v2122 = vld [vmem:[#allocation15 + $0x1d8] sm:$0xff]
        %v2123 = vld [vmem:[#allocation15 + $0x1e0] sm:$0xff]
        %v2124 = vld [vmem:[#allocation15 + $0x1e8] sm:$0xff]
        %v2125 = vld [vmem:[#allocation15 + $0x1f0] sm:$0xff]
        %v2126 = vld [vmem:[#allocation15 + $0x1f8] sm:$0xff]
        %2127 = vmatprep.subr.mxu0 %v2124
        %2128 = vmatpush1.msra.mxu0 %v2123
        %2129 = vmatprep.subr.mxu0 %v2120
        %2130 = vmatpush1.msra.mxu0 %v2119
        %2131 = vmatprep.subr.mxu0 %v2116
        %2132 = vmatpush1.msra.mxu0 %v2115
        %2133 = vmatprep.subr.mxu0 %v2112
        %2134 = vmatpush1.msra.mxu0 %v2111
        %2135 = vmatprep.subr.mxu0 %v2108
        %2136 = vmatpush1.msra.mxu0 %v2107
        %2137 = vmatprep.subr.mxu0 %v2104
        %2138 = vmatpush1.msra.mxu0 %v2103
        %2139 = vmatprep.subr.mxu0 %v2100
        %2140 = vmatpush1.msra.mxu0 %v2099
        %2141 = vmatprep.subr.mxu0 %v2096
        %2142 = vmatpush1.msra.mxu0 %v2095
        %2143 = vmatprep.subr.mxu0 %v2092
        %2144 = vmatpush1.msra.mxu0 %v2091
        %2145 = vmatprep.subr.mxu0 %v2088
        %2146 = vmatpush1.msra.mxu0 %v2087
        %2147 = vmatprep.subr.mxu0 %v2084
        %2148 = vmatpush1.msra.mxu0 %v2083
        %2149 = vmatprep.subr.mxu0 %v2080
        %2150 = vmatpush1.msra.mxu0 %v2079
        %2151 = vmatprep.subr.mxu0 %v2076
        %2152 = vmatpush1.msra.mxu0 %v2075
        %2153 = vmatprep.subr.mxu0 %v2072
        %2154 = vmatpush1.msra.mxu0 %v2071
        %2155 = vmatprep.subr.mxu0 %v2068
        %2156 = vmatpush1.msra.mxu0 %v2067
        %2157 = vmatprep.subr.mxu0 %v2064
        %2158 = vmatpush1.msra.mxu0 %v2063
        %2159 = vmatprep.subr.mxu0 0.0
        %2160 = vmatpush2.msra.mxu0 0.0
        %2161 = vmatprep.subr.mxu0 0.0
        %2162 = vmatpush2.msra.mxu0 0.0
        %2163 = vmatprep.subr.mxu0 0.0
        %2164 = vmatpush2.msra.mxu0 0.0
        %2165 = vmatprep.subr.mxu0 0.0
        %2166 = vmatpush2.msra.mxu0 0.0
        %2167 = vmatprep.subr.mxu0 0.0
        %2168 = vmatpush2.msra.mxu0 0.0
        %2169 = vmatprep.subr.mxu0 0.0
        %2170 = vmatpush2.msra.mxu0 0.0
        %2171 = vmatprep.subr.mxu0 0.0
        %2172 = vmatpush2.msra.mxu0 0.0
        %2173 = vmatprep.subr.mxu0 0.0
        %2174 = vmatpush2.msra.mxu0 0.0
        %2175 = vmatprep.subr.mxu0 0.0
        %2176 = vmatpush2.msra.mxu0 0.0
        %2177 = vmatprep.subr.mxu0 0.0
        %2178 = vmatpush2.msra.mxu0 0.0
        %2179 = vmatprep.subr.mxu0 0.0
        %2180 = vmatpush2.msra.mxu0 0.0
        %2181 = vmatprep.subr.mxu0 0.0
        %2182 = vmatpush2.msra.mxu0 0.0
        %2183 = vmatprep.subr.mxu0 0.0
        %2184 = vmatpush2.msra.mxu0 0.0
        %2185 = vmatprep.subr.mxu0 0.0
        %2186 = vmatpush2.msra.mxu0 0.0
        %2187 = vmatprep.subr.mxu0 0.0
        %2188 = vmatpush2.msra.mxu0 0.0
        %2189 = vmatprep.subr.mxu0 0.0
        %2190 = vmatpush2.msra.mxu0 0.0
        %2191 = vmatprep.mubr.f32.mxu0 0.0
        %2192 = vmatmul.mubr.f32.gmra.mxu0 %v2059
        %v2193 = vpop.f32.mrf.mxu0
        %v2194 = vadd.f32 0.0, %v2193
        %v2195 = vpop.f32.mrf.mxu0
        %v2196 = vadd.f32 0.0, %v2195
        %2197 = vdwg.mxu0
        %2198 = vmatprep.subr.mxu0 %v2126
        %2199 = vmatpush1.msra.mxu0 %v2125
        %2200 = vmatprep.subr.mxu0 %v2122
        %2201 = vmatpush1.msra.mxu0 %v2121
        %2202 = vmatprep.subr.mxu0 %v2118
        %2203 = vmatpush1.msra.mxu0 %v2117
        %2204 = vmatprep.subr.mxu0 %v2114
        %2205 = vmatpush1.msra.mxu0 %v2113
        %2206 = vmatprep.subr.mxu0 %v2110
        %2207 = vmatpush1.msra.mxu0 %v2109
        %2208 = vmatprep.subr.mxu0 %v2106
        %2209 = vmatpush1.msra.mxu0 %v2105
        %2210 = vmatprep.subr.mxu0 %v2102
        %2211 = vmatpush1.msra.mxu0 %v2101
        %2212 = vmatprep.subr.mxu0 %v2098
        %2213 = vmatpush1.msra.mxu0 %v2097
        %2214 = vmatprep.subr.mxu0 %v2094
        %2215 = vmatpush1.msra.mxu0 %v2093
        %2216 = vmatprep.subr.mxu0 %v2090
        %2217 = vmatpush1.msra.mxu0 %v2089
        %2218 = vmatprep.subr.mxu0 %v2086
        %2219 = vmatpush1.msra.mxu0 %v2085
        %2220 = vmatprep.subr.mxu0 %v2082
        %2221 = vmatpush1.msra.mxu0 %v2081
        %2222 = vmatprep.subr.mxu0 %v2078
        %2223 = vmatpush1.msra.mxu0 %v2077
        %2224 = vmatprep.subr.mxu0 %v2074
        %2225 = vmatpush1.msra.mxu0 %v2073
        %2226 = vmatprep.subr.mxu0 %v2070
        %2227 = vmatpush1.msra.mxu0 %v2069
        %2228 = vmatprep.subr.mxu0 %v2066
        %2229 = vmatpush1.msra.mxu0 %v2065
        %2230 = vmatprep.subr.mxu0 0.0
        %2231 = vmatpush2.msra.mxu0 0.0
        %2232 = vmatprep.subr.mxu0 0.0
        %2233 = vmatpush2.msra.mxu0 0.0
        %2234 = vmatprep.subr.mxu0 0.0
        %2235 = vmatpush2.msra.mxu0 0.0
        %2236 = vmatprep.subr.mxu0 0.0
        %2237 = vmatpush2.msra.mxu0 0.0
        %2238 = vmatprep.subr.mxu0 0.0
        %2239 = vmatpush2.msra.mxu0 0.0
        %2240 = vmatprep.subr.mxu0 0.0
        %2241 = vmatpush2.msra.mxu0 0.0
        %2242 = vmatprep.subr.mxu0 0.0
        %2243 = vmatpush2.msra.mxu0 0.0
        %2244 = vmatprep.subr.mxu0 0.0
        %2245 = vmatpush2.msra.mxu0 0.0
        %2246 = vmatprep.subr.mxu0 0.0
        %2247 = vmatpush2.msra.mxu0 0.0
        %2248 = vmatprep.subr.mxu0 0.0
        %2249 = vmatpush2.msra.mxu0 0.0
        %2250 = vmatprep.subr.mxu0 0.0
        %2251 = vmatpush2.msra.mxu0 0.0
        %2252 = vmatprep.subr.mxu0 0.0
        %2253 = vmatpush2.msra.mxu0 0.0
        %2254 = vmatprep.subr.mxu0 0.0
        %2255 = vmatpush2.msra.mxu0 0.0
        %2256 = vmatprep.subr.mxu0 0.0
        %2257 = vmatpush2.msra.mxu0 0.0
        %2258 = vmatprep.subr.mxu0 0.0
        %2259 = vmatpush2.msra.mxu0 0.0
        %2260 = vmatprep.subr.mxu0 0.0
        %2261 = vmatpush2.msra.mxu0 0.0
        %2262 = vmatprep.mubr.f32.mxu0 0.0
        %2263 = vmatmul.mubr.f32.gmra.mxu0 %v2059
        %v2264 = vpop.f32.mrf.mxu0
        %v2265 = vadd.f32 0.0, %v2264
        %v2266 = vpop.f32.mrf.mxu0
        %v2267 = vadd.f32 0.0, %v2266
        %2268 = vdwg.mxu0
        %v2273 = vcombine.low %v2194, %v2196
        %v2274 = vcombine.low %v2265, %v2267
        %v2276 = vunpack.c.l.s4 1966171168
        %v2277 = vunpack.c.0.s8 %v2276
        %v2278 = vlaneseq
        %v2279 = vshrl.u32 %v2278, 7
        %v2280 = vsub.s32 %v2277, %v2279
        %v2281 = vrot.slane %v2273, %v2280
        %v2283 = vunpack.c.l.s4 1966171168
        %v2284 = vunpack.c.0.s8 %v2283
        %v2285 = vlaneseq
        %v2286 = vshrl.u32 %v2285, 7
        %v2287 = vsub.s32 %v2284, %v2286
        %v2288 = vrot.slane %v2274, %v2287
        %v2289 = vcombine.low %v2281, %v2288
        %v2291 = vunpack.c.l.s4 1966171168
        %v2292 = vunpack.c.0.s8 %v2291
        %v2293 = vlaneseq
        %v2294 = vshrl.u32 %v2293, 7
        %v2295 = vsub.s32 %v2292, %v2294
        %v2296 = vrot.slane %v2289, %v2295
        %v2298 = vadd.f32 %v2062, %v2296
        %v2299 = vxor.u32 %v2298, 2147483648
        %v2300 = vmul.f32 %v2299, 1.442695
        %v2301 = vpow.pop %v2300
        %v2302 = vadd.f32 %v2301, 1.0
        %v2303 = vrcp.pop %v2302
        %v2304 = vmul.f32 1.0, %v2303
        %v2306 = vrot.slane %v2298, 1
        %v2308 = vxor.u32 %v2306, 2147483648
        %v2309 = vmul.f32 %v2308, 1.442695
        %v2310 = vpow.pop %v2309
        %v2311 = vadd.f32 %v2310, 1.0
        %v2312 = vrcp.pop %v2311
        %v2313 = vmul.f32 1.0, %v2312
        %v2314 = vrot.slane %v2298, 2
        %v2316 = vtanh.pop %v2314
        %v2317 = vrot.slane %v2298, 3
        %v2319 = vxor.u32 %v2317, 2147483648
        %v2320 = vmul.f32 %v2319, 1.442695
        %v2321 = vpow.pop %v2320
        %v2322 = vadd.f32 %v2321, 1.0
        %v2323 = vrcp.pop %v2322
        %v2324 = vmul.f32 1.0, %v2323
        %v2325 = vmul.f32 %v2313, %v2060
        %v2326 = vmul.f32 %v2304, %v2316
        %v2327 = vadd.f32 %v2325, %v2326
        %v2328 = vtanh.pop %v2327
        %v2329 = vmul.f32 %v2324, %v2328
        %2330 = vst [vmem:[#allocation3 + $0x4] sm:$0x1] %v2329
        %s2331 = sadd.s32 %s957, 5
        %s2332 = sld [smem:[#allocation5 + %s2331]]
        %v2333 = vstv %s2332
        %v2334 = vmul.f32 %v2329, %v2333
        %v2335 = vmul.f32 %v2327, %v2333
        %s2336 = scalar_lea.vmem [#allocation2], 5
        %v2337 = vld [vmem:[%s2336] ss:$8 sm:$0xf]
        %v2338 = vld [vmem:[#allocation15] sm:$0xff]
        %v2339 = vld [vmem:[#allocation15 + $0x8] sm:$0xff]
        %v2340 = vld [vmem:[#allocation15 + $0x10] sm:$0xff]
        %v2341 = vld [vmem:[#allocation15 + $0x18] sm:$0xff]
        %v2342 = vld [vmem:[#allocation15 + $0x20] sm:$0xff]
        %v2343 = vld [vmem:[#allocation15 + $0x28] sm:$0xff]
        %v2344 = vld [vmem:[#allocation15 + $0x30] sm:$0xff]
        %v2345 = vld [vmem:[#allocation15 + $0x38] sm:$0xff]
        %v2346 = vld [vmem:[#allocation15 + $0x40] sm:$0xff]
        %v2347 = vld [vmem:[#allocation15 + $0x48] sm:$0xff]
        %v2348 = vld [vmem:[#allocation15 + $0x50] sm:$0xff]
        %v2349 = vld [vmem:[#allocation15 + $0x58] sm:$0xff]
        %v2350 = vld [vmem:[#allocation15 + $0x60] sm:$0xff]
        %v2351 = vld [vmem:[#allocation15 + $0x68] sm:$0xff]
        %v2352 = vld [vmem:[#allocation15 + $0x70] sm:$0xff]
        %v2353 = vld [vmem:[#allocation15 + $0x78] sm:$0xff]
        %v2354 = vld [vmem:[#allocation15 + $0x80] sm:$0xff]
        %v2355 = vld [vmem:[#allocation15 + $0x88] sm:$0xff]
        %v2356 = vld [vmem:[#allocation15 + $0x90] sm:$0xff]
        %v2357 = vld [vmem:[#allocation15 + $0x98] sm:$0xff]
        %v2358 = vld [vmem:[#allocation15 + $0xa0] sm:$0xff]
        %v2359 = vld [vmem:[#allocation15 + $0xa8] sm:$0xff]
        %v2360 = vld [vmem:[#allocation15 + $0xb0] sm:$0xff]
        %v2361 = vld [vmem:[#allocation15 + $0xb8] sm:$0xff]
        %v2362 = vld [vmem:[#allocation15 + $0xc0] sm:$0xff]
        %v2363 = vld [vmem:[#allocation15 + $0xc8] sm:$0xff]
        %v2364 = vld [vmem:[#allocation15 + $0xd0] sm:$0xff]
        %v2365 = vld [vmem:[#allocation15 + $0xd8] sm:$0xff]
        %v2366 = vld [vmem:[#allocation15 + $0xe0] sm:$0xff]
        %v2367 = vld [vmem:[#allocation15 + $0xe8] sm:$0xff]
        %v2368 = vld [vmem:[#allocation15 + $0xf0] sm:$0xff]
        %v2369 = vld [vmem:[#allocation15 + $0xf8] sm:$0xff]
        %v2370 = vld [vmem:[#allocation15 + $0x100] sm:$0xff]
        %v2371 = vld [vmem:[#allocation15 + $0x108] sm:$0xff]
        %v2372 = vld [vmem:[#allocation15 + $0x110] sm:$0xff]
        %v2373 = vld [vmem:[#allocation15 + $0x118] sm:$0xff]
        %v2374 = vld [vmem:[#allocation15 + $0x120] sm:$0xff]
        %v2375 = vld [vmem:[#allocation15 + $0x128] sm:$0xff]
        %v2376 = vld [vmem:[#allocation15 + $0x130] sm:$0xff]
        %v2377 = vld [vmem:[#allocation15 + $0x138] sm:$0xff]
        %v2378 = vld [vmem:[#allocation15 + $0x140] sm:$0xff]
        %v2379 = vld [vmem:[#allocation15 + $0x148] sm:$0xff]
        %v2380 = vld [vmem:[#allocation15 + $0x150] sm:$0xff]
        %v2381 = vld [vmem:[#allocation15 + $0x158] sm:$0xff]
        %v2382 = vld [vmem:[#allocation15 + $0x160] sm:$0xff]
        %v2383 = vld [vmem:[#allocation15 + $0x168] sm:$0xff]
        %v2384 = vld [vmem:[#allocation15 + $0x170] sm:$0xff]
        %v2385 = vld [vmem:[#allocation15 + $0x178] sm:$0xff]
        %v2386 = vld [vmem:[#allocation15 + $0x180] sm:$0xff]
        %v2387 = vld [vmem:[#allocation15 + $0x188] sm:$0xff]
        %v2388 = vld [vmem:[#allocation15 + $0x190] sm:$0xff]
        %v2389 = vld [vmem:[#allocation15 + $0x198] sm:$0xff]
        %v2390 = vld [vmem:[#allocation15 + $0x1a0] sm:$0xff]
        %v2391 = vld [vmem:[#allocation15 + $0x1a8] sm:$0xff]
        %v2392 = vld [vmem:[#allocation15 + $0x1b0] sm:$0xff]
        %v2393 = vld [vmem:[#allocation15 + $0x1b8] sm:$0xff]
        %v2394 = vld [vmem:[#allocation15 + $0x1c0] sm:$0xff]
        %v2395 = vld [vmem:[#allocation15 + $0x1c8] sm:$0xff]
        %v2396 = vld [vmem:[#allocation15 + $0x1d0] sm:$0xff]
        %v2397 = vld [vmem:[#allocation15 + $0x1d8] sm:$0xff]
        %v2398 = vld [vmem:[#allocation15 + $0x1e0] sm:$0xff]
        %v2399 = vld [vmem:[#allocation15 + $0x1e8] sm:$0xff]
        %v2400 = vld [vmem:[#allocation15 + $0x1f0] sm:$0xff]
        %v2401 = vld [vmem:[#allocation15 + $0x1f8] sm:$0xff]
        %2402 = vmatprep.subr.mxu0 %v2399
        %2403 = vmatpush1.msra.mxu0 %v2398
        %2404 = vmatprep.subr.mxu0 %v2395
        %2405 = vmatpush1.msra.mxu0 %v2394
        %2406 = vmatprep.subr.mxu0 %v2391
        %2407 = vmatpush1.msra.mxu0 %v2390
        %2408 = vmatprep.subr.mxu0 %v2387
        %2409 = vmatpush1.msra.mxu0 %v2386
        %2410 = vmatprep.subr.mxu0 %v2383
        %2411 = vmatpush1.msra.mxu0 %v2382
        %2412 = vmatprep.subr.mxu0 %v2379
        %2413 = vmatpush1.msra.mxu0 %v2378
        %2414 = vmatprep.subr.mxu0 %v2375
        %2415 = vmatpush1.msra.mxu0 %v2374
        %2416 = vmatprep.subr.mxu0 %v2371
        %2417 = vmatpush1.msra.mxu0 %v2370
        %2418 = vmatprep.subr.mxu0 %v2367
        %2419 = vmatpush1.msra.mxu0 %v2366
        %2420 = vmatprep.subr.mxu0 %v2363
        %2421 = vmatpush1.msra.mxu0 %v2362
        %2422 = vmatprep.subr.mxu0 %v2359
        %2423 = vmatpush1.msra.mxu0 %v2358
        %2424 = vmatprep.subr.mxu0 %v2355
        %2425 = vmatpush1.msra.mxu0 %v2354
        %2426 = vmatprep.subr.mxu0 %v2351
        %2427 = vmatpush1.msra.mxu0 %v2350
        %2428 = vmatprep.subr.mxu0 %v2347
        %2429 = vmatpush1.msra.mxu0 %v2346
        %2430 = vmatprep.subr.mxu0 %v2343
        %2431 = vmatpush1.msra.mxu0 %v2342
        %2432 = vmatprep.subr.mxu0 %v2339
        %2433 = vmatpush1.msra.mxu0 %v2338
        %2434 = vmatprep.subr.mxu0 0.0
        %2435 = vmatpush2.msra.mxu0 0.0
        %2436 = vmatprep.subr.mxu0 0.0
        %2437 = vmatpush2.msra.mxu0 0.0
        %2438 = vmatprep.subr.mxu0 0.0
        %2439 = vmatpush2.msra.mxu0 0.0
        %2440 = vmatprep.subr.mxu0 0.0
        %2441 = vmatpush2.msra.mxu0 0.0
        %2442 = vmatprep.subr.mxu0 0.0
        %2443 = vmatpush2.msra.mxu0 0.0
        %2444 = vmatprep.subr.mxu0 0.0
        %2445 = vmatpush2.msra.mxu0 0.0
        %2446 = vmatprep.subr.mxu0 0.0
        %2447 = vmatpush2.msra.mxu0 0.0
        %2448 = vmatprep.subr.mxu0 0.0
        %2449 = vmatpush2.msra.mxu0 0.0
        %2450 = vmatprep.subr.mxu0 0.0
        %2451 = vmatpush2.msra.mxu0 0.0
        %2452 = vmatprep.subr.mxu0 0.0
        %2453 = vmatpush2.msra.mxu0 0.0
        %2454 = vmatprep.subr.mxu0 0.0
        %2455 = vmatpush2.msra.mxu0 0.0
        %2456 = vmatprep.subr.mxu0 0.0
        %2457 = vmatpush2.msra.mxu0 0.0
        %2458 = vmatprep.subr.mxu0 0.0
        %2459 = vmatpush2.msra.mxu0 0.0
        %2460 = vmatprep.subr.mxu0 0.0
        %2461 = vmatpush2.msra.mxu0 0.0
        %2462 = vmatprep.subr.mxu0 0.0
        %2463 = vmatpush2.msra.mxu0 0.0
        %2464 = vmatprep.subr.mxu0 0.0
        %2465 = vmatpush2.msra.mxu0 0.0
        %2466 = vmatprep.mubr.f32.mxu0 0.0
        %2467 = vmatmul.mubr.f32.gmra.mxu0 %v2334
        %v2468 = vpop.f32.mrf.mxu0
        %v2469 = vadd.f32 0.0, %v2468
        %v2470 = vpop.f32.mrf.mxu0
        %v2471 = vadd.f32 0.0, %v2470
        %2472 = vdwg.mxu0
        %2473 = vmatprep.subr.mxu0 %v2401
        %2474 = vmatpush1.msra.mxu0 %v2400
        %2475 = vmatprep.subr.mxu0 %v2397
        %2476 = vmatpush1.msra.mxu0 %v2396
        %2477 = vmatprep.subr.mxu0 %v2393
        %2478 = vmatpush1.msra.mxu0 %v2392
        %2479 = vmatprep.subr.mxu0 %v2389
        %2480 = vmatpush1.msra.mxu0 %v2388
        %2481 = vmatprep.subr.mxu0 %v2385
        %2482 = vmatpush1.msra.mxu0 %v2384
        %2483 = vmatprep.subr.mxu0 %v2381
        %2484 = vmatpush1.msra.mxu0 %v2380
        %2485 = vmatprep.subr.mxu0 %v2377
        %2486 = vmatpush1.msra.mxu0 %v2376
        %2487 = vmatprep.subr.mxu0 %v2373
        %2488 = vmatpush1.msra.mxu0 %v2372
        %2489 = vmatprep.subr.mxu0 %v2369
        %2490 = vmatpush1.msra.mxu0 %v2368
        %2491 = vmatprep.subr.mxu0 %v2365
        %2492 = vmatpush1.msra.mxu0 %v2364
        %2493 = vmatprep.subr.mxu0 %v2361
        %2494 = vmatpush1.msra.mxu0 %v2360
        %2495 = vmatprep.subr.mxu0 %v2357
        %2496 = vmatpush1.msra.mxu0 %v2356
        %2497 = vmatprep.subr.mxu0 %v2353
        %2498 = vmatpush1.msra.mxu0 %v2352
        %2499 = vmatprep.subr.mxu0 %v2349
        %2500 = vmatpush1.msra.mxu0 %v2348
        %2501 = vmatprep.subr.mxu0 %v2345
        %2502 = vmatpush1.msra.mxu0 %v2344
        %2503 = vmatprep.subr.mxu0 %v2341
        %2504 = vmatpush1.msra.mxu0 %v2340
        %2505 = vmatprep.subr.mxu0 0.0
        %2506 = vmatpush2.msra.mxu0 0.0
        %2507 = vmatprep.subr.mxu0 0.0
        %2508 = vmatpush2.msra.mxu0 0.0
        %2509 = vmatprep.subr.mxu0 0.0
        %2510 = vmatpush2.msra.mxu0 0.0
        %2511 = vmatprep.subr.mxu0 0.0
        %2512 = vmatpush2.msra.mxu0 0.0
        %2513 = vmatprep.subr.mxu0 0.0
        %2514 = vmatpush2.msra.mxu0 0.0
        %2515 = vmatprep.subr.mxu0 0.0
        %2516 = vmatpush2.msra.mxu0 0.0
        %2517 = vmatprep.subr.mxu0 0.0
        %2518 = vmatpush2.msra.mxu0 0.0
        %2519 = vmatprep.subr.mxu0 0.0
        %2520 = vmatpush2.msra.mxu0 0.0
        %2521 = vmatprep.subr.mxu0 0.0
        %2522 = vmatpush2.msra.mxu0 0.0
        %2523 = vmatprep.subr.mxu0 0.0
        %2524 = vmatpush2.msra.mxu0 0.0
        %2525 = vmatprep.subr.mxu0 0.0
        %2526 = vmatpush2.msra.mxu0 0.0
        %2527 = vmatprep.subr.mxu0 0.0
        %2528 = vmatpush2.msra.mxu0 0.0
        %2529 = vmatprep.subr.mxu0 0.0
        %2530 = vmatpush2.msra.mxu0 0.0
        %2531 = vmatprep.subr.mxu0 0.0
        %2532 = vmatpush2.msra.mxu0 0.0
        %2533 = vmatprep.subr.mxu0 0.0
        %2534 = vmatpush2.msra.mxu0 0.0
        %2535 = vmatprep.subr.mxu0 0.0
        %2536 = vmatpush2.msra.mxu0 0.0
        %2537 = vmatprep.mubr.f32.mxu0 0.0
        %2538 = vmatmul.mubr.f32.gmra.mxu0 %v2334
        %v2539 = vpop.f32.mrf.mxu0
        %v2540 = vadd.f32 0.0, %v2539
        %v2541 = vpop.f32.mrf.mxu0
        %v2542 = vadd.f32 0.0, %v2541
        %2543 = vdwg.mxu0
        %v2548 = vcombine.low %v2469, %v2471
        %v2549 = vcombine.low %v2540, %v2542
        %v2551 = vunpack.c.l.s4 1966171168
        %v2552 = vunpack.c.0.s8 %v2551
        %v2553 = vlaneseq
        %v2554 = vshrl.u32 %v2553, 7
        %v2555 = vsub.s32 %v2552, %v2554
        %v2556 = vrot.slane %v2548, %v2555
        %v2558 = vunpack.c.l.s4 1966171168
        %v2559 = vunpack.c.0.s8 %v2558
        %v2560 = vlaneseq
        %v2561 = vshrl.u32 %v2560, 7
        %v2562 = vsub.s32 %v2559, %v2561
        %v2563 = vrot.slane %v2549, %v2562
        %v2564 = vcombine.low %v2556, %v2563
        %v2566 = vunpack.c.l.s4 1966171168
        %v2567 = vunpack.c.0.s8 %v2566
        %v2568 = vlaneseq
        %v2569 = vshrl.u32 %v2568, 7
        %v2570 = vsub.s32 %v2567, %v2569
        %v2571 = vrot.slane %v2564, %v2570
        %v2573 = vadd.f32 %v2337, %v2571
        %v2574 = vxor.u32 %v2573, 2147483648
        %v2575 = vmul.f32 %v2574, 1.442695
        %v2576 = vpow.pop %v2575
        %v2577 = vadd.f32 %v2576, 1.0
        %v2578 = vrcp.pop %v2577
        %v2579 = vmul.f32 1.0, %v2578
        %v2581 = vrot.slane %v2573, 1
        %v2583 = vxor.u32 %v2581, 2147483648
        %v2584 = vmul.f32 %v2583, 1.442695
        %v2585 = vpow.pop %v2584
        %v2586 = vadd.f32 %v2585, 1.0
        %v2587 = vrcp.pop %v2586
        %v2588 = vmul.f32 1.0, %v2587
        %v2589 = vrot.slane %v2573, 2
        %v2591 = vtanh.pop %v2589
        %v2592 = vrot.slane %v2573, 3
        %v2594 = vxor.u32 %v2592, 2147483648
        %v2595 = vmul.f32 %v2594, 1.442695
        %v2596 = vpow.pop %v2595
        %v2597 = vadd.f32 %v2596, 1.0
        %v2598 = vrcp.pop %v2597
        %v2599 = vmul.f32 1.0, %v2598
        %v2600 = vmul.f32 %v2588, %v2335
        %v2601 = vmul.f32 %v2579, %v2591
        %v2602 = vadd.f32 %v2600, %v2601
        %v2603 = vtanh.pop %v2602
        %v2604 = vmul.f32 %v2599, %v2603
        %2605 = vst [vmem:[#allocation3 + $0x5] sm:$0x1] %v2604
        %s2606 = sadd.s32 %s957, 6
        %s2607 = sld [smem:[#allocation5 + %s2606]]
        %v2608 = vstv %s2607
        %v2609 = vmul.f32 %v2604, %v2608
        %v2610 = vmul.f32 %v2602, %v2608
        %s2611 = scalar_lea.vmem [#allocation2], 6
        %v2612 = vld [vmem:[%s2611] ss:$8 sm:$0xf]
        %v2613 = vld [vmem:[#allocation15] sm:$0xff]
        %v2614 = vld [vmem:[#allocation15 + $0x8] sm:$0xff]
        %v2615 = vld [vmem:[#allocation15 + $0x10] sm:$0xff]
        %v2616 = vld [vmem:[#allocation15 + $0x18] sm:$0xff]
        %v2617 = vld [vmem:[#allocation15 + $0x20] sm:$0xff]
        %v2618 = vld [vmem:[#allocation15 + $0x28] sm:$0xff]
        %v2619 = vld [vmem:[#allocation15 + $0x30] sm:$0xff]
        %v2620 = vld [vmem:[#allocation15 + $0x38] sm:$0xff]
        %v2621 = vld [vmem:[#allocation15 + $0x40] sm:$0xff]
        %v2622 = vld [vmem:[#allocation15 + $0x48] sm:$0xff]
        %v2623 = vld [vmem:[#allocation15 + $0x50] sm:$0xff]
        %v2624 = vld [vmem:[#allocation15 + $0x58] sm:$0xff]
        %v2625 = vld [vmem:[#allocation15 + $0x60] sm:$0xff]
        %v2626 = vld [vmem:[#allocation15 + $0x68] sm:$0xff]
        %v2627 = vld [vmem:[#allocation15 + $0x70] sm:$0xff]
        %v2628 = vld [vmem:[#allocation15 + $0x78] sm:$0xff]
        %v2629 = vld [vmem:[#allocation15 + $0x80] sm:$0xff]
        %v2630 = vld [vmem:[#allocation15 + $0x88] sm:$0xff]
        %v2631 = vld [vmem:[#allocation15 + $0x90] sm:$0xff]
        %v2632 = vld [vmem:[#allocation15 + $0x98] sm:$0xff]
        %v2633 = vld [vmem:[#allocation15 + $0xa0] sm:$0xff]
        %v2634 = vld [vmem:[#allocation15 + $0xa8] sm:$0xff]
        %v2635 = vld [vmem:[#allocation15 + $0xb0] sm:$0xff]
        %v2636 = vld [vmem:[#allocation15 + $0xb8] sm:$0xff]
        %v2637 = vld [vmem:[#allocation15 + $0xc0] sm:$0xff]
        %v2638 = vld [vmem:[#allocation15 + $0xc8] sm:$0xff]
        %v2639 = vld [vmem:[#allocation15 + $0xd0] sm:$0xff]
        %v2640 = vld [vmem:[#allocation15 + $0xd8] sm:$0xff]
        %v2641 = vld [vmem:[#allocation15 + $0xe0] sm:$0xff]
        %v2642 = vld [vmem:[#allocation15 + $0xe8] sm:$0xff]
        %v2643 = vld [vmem:[#allocation15 + $0xf0] sm:$0xff]
        %v2644 = vld [vmem:[#allocation15 + $0xf8] sm:$0xff]
        %v2645 = vld [vmem:[#allocation15 + $0x100] sm:$0xff]
        %v2646 = vld [vmem:[#allocation15 + $0x108] sm:$0xff]
        %v2647 = vld [vmem:[#allocation15 + $0x110] sm:$0xff]
        %v2648 = vld [vmem:[#allocation15 + $0x118] sm:$0xff]
        %v2649 = vld [vmem:[#allocation15 + $0x120] sm:$0xff]
        %v2650 = vld [vmem:[#allocation15 + $0x128] sm:$0xff]
        %v2651 = vld [vmem:[#allocation15 + $0x130] sm:$0xff]
        %v2652 = vld [vmem:[#allocation15 + $0x138] sm:$0xff]
        %v2653 = vld [vmem:[#allocation15 + $0x140] sm:$0xff]
        %v2654 = vld [vmem:[#allocation15 + $0x148] sm:$0xff]
        %v2655 = vld [vmem:[#allocation15 + $0x150] sm:$0xff]
        %v2656 = vld [vmem:[#allocation15 + $0x158] sm:$0xff]
        %v2657 = vld [vmem:[#allocation15 + $0x160] sm:$0xff]
        %v2658 = vld [vmem:[#allocation15 + $0x168] sm:$0xff]
        %v2659 = vld [vmem:[#allocation15 + $0x170] sm:$0xff]
        %v2660 = vld [vmem:[#allocation15 + $0x178] sm:$0xff]
        %v2661 = vld [vmem:[#allocation15 + $0x180] sm:$0xff]
        %v2662 = vld [vmem:[#allocation15 + $0x188] sm:$0xff]
        %v2663 = vld [vmem:[#allocation15 + $0x190] sm:$0xff]
        %v2664 = vld [vmem:[#allocation15 + $0x198] sm:$0xff]
        %v2665 = vld [vmem:[#allocation15 + $0x1a0] sm:$0xff]
        %v2666 = vld [vmem:[#allocation15 + $0x1a8] sm:$0xff]
        %v2667 = vld [vmem:[#allocation15 + $0x1b0] sm:$0xff]
        %v2668 = vld [vmem:[#allocation15 + $0x1b8] sm:$0xff]
        %v2669 = vld [vmem:[#allocation15 + $0x1c0] sm:$0xff]
        %v2670 = vld [vmem:[#allocation15 + $0x1c8] sm:$0xff]
        %v2671 = vld [vmem:[#allocation15 + $0x1d0] sm:$0xff]
        %v2672 = vld [vmem:[#allocation15 + $0x1d8] sm:$0xff]
        %v2673 = vld [vmem:[#allocation15 + $0x1e0] sm:$0xff]
        %v2674 = vld [vmem:[#allocation15 + $0x1e8] sm:$0xff]
        %v2675 = vld [vmem:[#allocation15 + $0x1f0] sm:$0xff]
        %v2676 = vld [vmem:[#allocation15 + $0x1f8] sm:$0xff]
        %2677 = vmatprep.subr.mxu0 %v2674
        %2678 = vmatpush1.msra.mxu0 %v2673
        %2679 = vmatprep.subr.mxu0 %v2670
        %2680 = vmatpush1.msra.mxu0 %v2669
        %2681 = vmatprep.subr.mxu0 %v2666
        %2682 = vmatpush1.msra.mxu0 %v2665
        %2683 = vmatprep.subr.mxu0 %v2662
        %2684 = vmatpush1.msra.mxu0 %v2661
        %2685 = vmatprep.subr.mxu0 %v2658
        %2686 = vmatpush1.msra.mxu0 %v2657
        %2687 = vmatprep.subr.mxu0 %v2654
        %2688 = vmatpush1.msra.mxu0 %v2653
        %2689 = vmatprep.subr.mxu0 %v2650
        %2690 = vmatpush1.msra.mxu0 %v2649
        %2691 = vmatprep.subr.mxu0 %v2646
        %2692 = vmatpush1.msra.mxu0 %v2645
        %2693 = vmatprep.subr.mxu0 %v2642
        %2694 = vmatpush1.msra.mxu0 %v2641
        %2695 = vmatprep.subr.mxu0 %v2638
        %2696 = vmatpush1.msra.mxu0 %v2637
        %2697 = vmatprep.subr.mxu0 %v2634
        %2698 = vmatpush1.msra.mxu0 %v2633
        %2699 = vmatprep.subr.mxu0 %v2630
        %2700 = vmatpush1.msra.mxu0 %v2629
        %2701 = vmatprep.subr.mxu0 %v2626
        %2702 = vmatpush1.msra.mxu0 %v2625
        %2703 = vmatprep.subr.mxu0 %v2622
        %2704 = vmatpush1.msra.mxu0 %v2621
        %2705 = vmatprep.subr.mxu0 %v2618
        %2706 = vmatpush1.msra.mxu0 %v2617
        %2707 = vmatprep.subr.mxu0 %v2614
        %2708 = vmatpush1.msra.mxu0 %v2613
        %2709 = vmatprep.subr.mxu0 0.0
        %2710 = vmatpush2.msra.mxu0 0.0
        %2711 = vmatprep.subr.mxu0 0.0
        %2712 = vmatpush2.msra.mxu0 0.0
        %2713 = vmatprep.subr.mxu0 0.0
        %2714 = vmatpush2.msra.mxu0 0.0
        %2715 = vmatprep.subr.mxu0 0.0
        %2716 = vmatpush2.msra.mxu0 0.0
        %2717 = vmatprep.subr.mxu0 0.0
        %2718 = vmatpush2.msra.mxu0 0.0
        %2719 = vmatprep.subr.mxu0 0.0
        %2720 = vmatpush2.msra.mxu0 0.0
        %2721 = vmatprep.subr.mxu0 0.0
        %2722 = vmatpush2.msra.mxu0 0.0
        %2723 = vmatprep.subr.mxu0 0.0
        %2724 = vmatpush2.msra.mxu0 0.0
        %2725 = vmatprep.subr.mxu0 0.0
        %2726 = vmatpush2.msra.mxu0 0.0
        %2727 = vmatprep.subr.mxu0 0.0
        %2728 = vmatpush2.msra.mxu0 0.0
        %2729 = vmatprep.subr.mxu0 0.0
        %2730 = vmatpush2.msra.mxu0 0.0
        %2731 = vmatprep.subr.mxu0 0.0
        %2732 = vmatpush2.msra.mxu0 0.0
        %2733 = vmatprep.subr.mxu0 0.0
        %2734 = vmatpush2.msra.mxu0 0.0
        %2735 = vmatprep.subr.mxu0 0.0
        %2736 = vmatpush2.msra.mxu0 0.0
        %2737 = vmatprep.subr.mxu0 0.0
        %2738 = vmatpush2.msra.mxu0 0.0
        %2739 = vmatprep.subr.mxu0 0.0
        %2740 = vmatpush2.msra.mxu0 0.0
        %2741 = vmatprep.mubr.f32.mxu0 0.0
        %2742 = vmatmul.mubr.f32.gmra.mxu0 %v2609
        %v2743 = vpop.f32.mrf.mxu0
        %v2744 = vadd.f32 0.0, %v2743
        %v2745 = vpop.f32.mrf.mxu0
        %v2746 = vadd.f32 0.0, %v2745
        %2747 = vdwg.mxu0
        %2748 = vmatprep.subr.mxu0 %v2676
        %2749 = vmatpush1.msra.mxu0 %v2675
        %2750 = vmatprep.subr.mxu0 %v2672
        %2751 = vmatpush1.msra.mxu0 %v2671
        %2752 = vmatprep.subr.mxu0 %v2668
        %2753 = vmatpush1.msra.mxu0 %v2667
        %2754 = vmatprep.subr.mxu0 %v2664
        %2755 = vmatpush1.msra.mxu0 %v2663
        %2756 = vmatprep.subr.mxu0 %v2660
        %2757 = vmatpush1.msra.mxu0 %v2659
        %2758 = vmatprep.subr.mxu0 %v2656
        %2759 = vmatpush1.msra.mxu0 %v2655
        %2760 = vmatprep.subr.mxu0 %v2652
        %2761 = vmatpush1.msra.mxu0 %v2651
        %2762 = vmatprep.subr.mxu0 %v2648
        %2763 = vmatpush1.msra.mxu0 %v2647
        %2764 = vmatprep.subr.mxu0 %v2644
        %2765 = vmatpush1.msra.mxu0 %v2643
        %2766 = vmatprep.subr.mxu0 %v2640
        %2767 = vmatpush1.msra.mxu0 %v2639
        %2768 = vmatprep.subr.mxu0 %v2636
        %2769 = vmatpush1.msra.mxu0 %v2635
        %2770 = vmatprep.subr.mxu0 %v2632
        %2771 = vmatpush1.msra.mxu0 %v2631
        %2772 = vmatprep.subr.mxu0 %v2628
        %2773 = vmatpush1.msra.mxu0 %v2627
        %2774 = vmatprep.subr.mxu0 %v2624
        %2775 = vmatpush1.msra.mxu0 %v2623
        %2776 = vmatprep.subr.mxu0 %v2620
        %2777 = vmatpush1.msra.mxu0 %v2619
        %2778 = vmatprep.subr.mxu0 %v2616
        %2779 = vmatpush1.msra.mxu0 %v2615
        %2780 = vmatprep.subr.mxu0 0.0
        %2781 = vmatpush2.msra.mxu0 0.0
        %2782 = vmatprep.subr.mxu0 0.0
        %2783 = vmatpush2.msra.mxu0 0.0
        %2784 = vmatprep.subr.mxu0 0.0
        %2785 = vmatpush2.msra.mxu0 0.0
        %2786 = vmatprep.subr.mxu0 0.0
        %2787 = vmatpush2.msra.mxu0 0.0
        %2788 = vmatprep.subr.mxu0 0.0
        %2789 = vmatpush2.msra.mxu0 0.0
        %2790 = vmatprep.subr.mxu0 0.0
        %2791 = vmatpush2.msra.mxu0 0.0
        %2792 = vmatprep.subr.mxu0 0.0
        %2793 = vmatpush2.msra.mxu0 0.0
        %2794 = vmatprep.subr.mxu0 0.0
        %2795 = vmatpush2.msra.mxu0 0.0
        %2796 = vmatprep.subr.mxu0 0.0
        %2797 = vmatpush2.msra.mxu0 0.0
        %2798 = vmatprep.subr.mxu0 0.0
        %2799 = vmatpush2.msra.mxu0 0.0
        %2800 = vmatprep.subr.mxu0 0.0
        %2801 = vmatpush2.msra.mxu0 0.0
        %2802 = vmatprep.subr.mxu0 0.0
        %2803 = vmatpush2.msra.mxu0 0.0
        %2804 = vmatprep.subr.mxu0 0.0
        %2805 = vmatpush2.msra.mxu0 0.0
        %2806 = vmatprep.subr.mxu0 0.0
        %2807 = vmatpush2.msra.mxu0 0.0
        %2808 = vmatprep.subr.mxu0 0.0
        %2809 = vmatpush2.msra.mxu0 0.0
        %2810 = vmatprep.subr.mxu0 0.0
        %2811 = vmatpush2.msra.mxu0 0.0
        %2812 = vmatprep.mubr.f32.mxu0 0.0
        %2813 = vmatmul.mubr.f32.gmra.mxu0 %v2609
        %v2814 = vpop.f32.mrf.mxu0
        %v2815 = vadd.f32 0.0, %v2814
        %v2816 = vpop.f32.mrf.mxu0
        %v2817 = vadd.f32 0.0, %v2816
        %2818 = vdwg.mxu0
        %v2823 = vcombine.low %v2744, %v2746
        %v2824 = vcombine.low %v2815, %v2817
        %v2826 = vunpack.c.l.s4 1966171168
        %v2827 = vunpack.c.0.s8 %v2826
        %v2828 = vlaneseq
        %v2829 = vshrl.u32 %v2828, 7
        %v2830 = vsub.s32 %v2827, %v2829
        %v2831 = vrot.slane %v2823, %v2830
        %v2833 = vunpack.c.l.s4 1966171168
        %v2834 = vunpack.c.0.s8 %v2833
        %v2835 = vlaneseq
        %v2836 = vshrl.u32 %v2835, 7
        %v2837 = vsub.s32 %v2834, %v2836
        %v2838 = vrot.slane %v2824, %v2837
        %v2839 = vcombine.low %v2831, %v2838
        %v2841 = vunpack.c.l.s4 1966171168
        %v2842 = vunpack.c.0.s8 %v2841
        %v2843 = vlaneseq
        %v2844 = vshrl.u32 %v2843, 7
        %v2845 = vsub.s32 %v2842, %v2844
        %v2846 = vrot.slane %v2839, %v2845
        %v2848 = vadd.f32 %v2612, %v2846
        %v2849 = vxor.u32 %v2848, 2147483648
        %v2850 = vmul.f32 %v2849, 1.442695
        %v2851 = vpow.pop %v2850
        %v2852 = vadd.f32 %v2851, 1.0
        %v2853 = vrcp.pop %v2852
        %v2854 = vmul.f32 1.0, %v2853
        %v2856 = vrot.slane %v2848, 1
        %v2858 = vxor.u32 %v2856, 2147483648
        %v2859 = vmul.f32 %v2858, 1.442695
        %v2860 = vpow.pop %v2859
        %v2861 = vadd.f32 %v2860, 1.0
        %v2862 = vrcp.pop %v2861
        %v2863 = vmul.f32 1.0, %v2862
        %v2864 = vrot.slane %v2848, 2
        %v2866 = vtanh.pop %v2864
        %v2867 = vrot.slane %v2848, 3
        %v2869 = vxor.u32 %v2867, 2147483648
        %v2870 = vmul.f32 %v2869, 1.442695
        %v2871 = vpow.pop %v2870
        %v2872 = vadd.f32 %v2871, 1.0
        %v2873 = vrcp.pop %v2872
        %v2874 = vmul.f32 1.0, %v2873
        %v2875 = vmul.f32 %v2863, %v2610
        %v2876 = vmul.f32 %v2854, %v2866
        %v2877 = vadd.f32 %v2875, %v2876
        %v2878 = vtanh.pop %v2877
        %v2879 = vmul.f32 %v2874, %v2878
        %2880 = vst [vmem:[#allocation3 + $0x6] sm:$0x1] %v2879
        %s2881 = sadd.s32 %s957, 7
        %s2882 = sld [smem:[#allocation5 + %s2881]]
        %v2883 = vstv %s2882
        %v2884 = vmul.f32 %v2879, %v2883
        %v2885 = vmul.f32 %v2877, %v2883
        %s2886 = scalar_lea.vmem [#allocation2], 7
        %v2887 = vld [vmem:[%s2886] ss:$8 sm:$0xf]
        %v2888 = vld [vmem:[#allocation15] sm:$0xff]
        %v2889 = vld [vmem:[#allocation15 + $0x8] sm:$0xff]
        %v2890 = vld [vmem:[#allocation15 + $0x10] sm:$0xff]
        %v2891 = vld [vmem:[#allocation15 + $0x18] sm:$0xff]
        %v2892 = vld [vmem:[#allocation15 + $0x20] sm:$0xff]
        %v2893 = vld [vmem:[#allocation15 + $0x28] sm:$0xff]
        %v2894 = vld [vmem:[#allocation15 + $0x30] sm:$0xff]
        %v2895 = vld [vmem:[#allocation15 + $0x38] sm:$0xff]
        %v2896 = vld [vmem:[#allocation15 + $0x40] sm:$0xff]
        %v2897 = vld [vmem:[#allocation15 + $0x48] sm:$0xff]
        %v2898 = vld [vmem:[#allocation15 + $0x50] sm:$0xff]
        %v2899 = vld [vmem:[#allocation15 + $0x58] sm:$0xff]
        %v2900 = vld [vmem:[#allocation15 + $0x60] sm:$0xff]
        %v2901 = vld [vmem:[#allocation15 + $0x68] sm:$0xff]
        %v2902 = vld [vmem:[#allocation15 + $0x70] sm:$0xff]
        %v2903 = vld [vmem:[#allocation15 + $0x78] sm:$0xff]
        %v2904 = vld [vmem:[#allocation15 + $0x80] sm:$0xff]
        %v2905 = vld [vmem:[#allocation15 + $0x88] sm:$0xff]
        %v2906 = vld [vmem:[#allocation15 + $0x90] sm:$0xff]
        %v2907 = vld [vmem:[#allocation15 + $0x98] sm:$0xff]
        %v2908 = vld [vmem:[#allocation15 + $0xa0] sm:$0xff]
        %v2909 = vld [vmem:[#allocation15 + $0xa8] sm:$0xff]
        %v2910 = vld [vmem:[#allocation15 + $0xb0] sm:$0xff]
        %v2911 = vld [vmem:[#allocation15 + $0xb8] sm:$0xff]
        %v2912 = vld [vmem:[#allocation15 + $0xc0] sm:$0xff]
        %v2913 = vld [vmem:[#allocation15 + $0xc8] sm:$0xff]
        %v2914 = vld [vmem:[#allocation15 + $0xd0] sm:$0xff]
        %v2915 = vld [vmem:[#allocation15 + $0xd8] sm:$0xff]
        %v2916 = vld [vmem:[#allocation15 + $0xe0] sm:$0xff]
        %v2917 = vld [vmem:[#allocation15 + $0xe8] sm:$0xff]
        %v2918 = vld [vmem:[#allocation15 + $0xf0] sm:$0xff]
        %v2919 = vld [vmem:[#allocation15 + $0xf8] sm:$0xff]
        %v2920 = vld [vmem:[#allocation15 + $0x100] sm:$0xff]
        %v2921 = vld [vmem:[#allocation15 + $0x108] sm:$0xff]
        %v2922 = vld [vmem:[#allocation15 + $0x110] sm:$0xff]
        %v2923 = vld [vmem:[#allocation15 + $0x118] sm:$0xff]
        %v2924 = vld [vmem:[#allocation15 + $0x120] sm:$0xff]
        %v2925 = vld [vmem:[#allocation15 + $0x128] sm:$0xff]
        %v2926 = vld [vmem:[#allocation15 + $0x130] sm:$0xff]
        %v2927 = vld [vmem:[#allocation15 + $0x138] sm:$0xff]
        %v2928 = vld [vmem:[#allocation15 + $0x140] sm:$0xff]
        %v2929 = vld [vmem:[#allocation15 + $0x148] sm:$0xff]
        %v2930 = vld [vmem:[#allocation15 + $0x150] sm:$0xff]
        %v2931 = vld [vmem:[#allocation15 + $0x158] sm:$0xff]
        %v2932 = vld [vmem:[#allocation15 + $0x160] sm:$0xff]
        %v2933 = vld [vmem:[#allocation15 + $0x168] sm:$0xff]
        %v2934 = vld [vmem:[#allocation15 + $0x170] sm:$0xff]
        %v2935 = vld [vmem:[#allocation15 + $0x178] sm:$0xff]
        %v2936 = vld [vmem:[#allocation15 + $0x180] sm:$0xff]
        %v2937 = vld [vmem:[#allocation15 + $0x188] sm:$0xff]
        %v2938 = vld [vmem:[#allocation15 + $0x190] sm:$0xff]
        %v2939 = vld [vmem:[#allocation15 + $0x198] sm:$0xff]
        %v2940 = vld [vmem:[#allocation15 + $0x1a0] sm:$0xff]
        %v2941 = vld [vmem:[#allocation15 + $0x1a8] sm:$0xff]
        %v2942 = vld [vmem:[#allocation15 + $0x1b0] sm:$0xff]
        %v2943 = vld [vmem:[#allocation15 + $0x1b8] sm:$0xff]
        %v2944 = vld [vmem:[#allocation15 + $0x1c0] sm:$0xff]
        %v2945 = vld [vmem:[#allocation15 + $0x1c8] sm:$0xff]
        %v2946 = vld [vmem:[#allocation15 + $0x1d0] sm:$0xff]
        %v2947 = vld [vmem:[#allocation15 + $0x1d8] sm:$0xff]
        %v2948 = vld [vmem:[#allocation15 + $0x1e0] sm:$0xff]
        %v2949 = vld [vmem:[#allocation15 + $0x1e8] sm:$0xff]
        %v2950 = vld [vmem:[#allocation15 + $0x1f0] sm:$0xff]
        %v2951 = vld [vmem:[#allocation15 + $0x1f8] sm:$0xff]
        %2952 = vmatprep.subr.mxu0 %v2949
        %2953 = vmatpush1.msra.mxu0 %v2948
        %2954 = vmatprep.subr.mxu0 %v2945
        %2955 = vmatpush1.msra.mxu0 %v2944
        %2956 = vmatprep.subr.mxu0 %v2941
        %2957 = vmatpush1.msra.mxu0 %v2940
        %2958 = vmatprep.subr.mxu0 %v2937
        %2959 = vmatpush1.msra.mxu0 %v2936
        %2960 = vmatprep.subr.mxu0 %v2933
        %2961 = vmatpush1.msra.mxu0 %v2932
        %2962 = vmatprep.subr.mxu0 %v2929
        %2963 = vmatpush1.msra.mxu0 %v2928
        %2964 = vmatprep.subr.mxu0 %v2925
        %2965 = vmatpush1.msra.mxu0 %v2924
        %2966 = vmatprep.subr.mxu0 %v2921
        %2967 = vmatpush1.msra.mxu0 %v2920
        %2968 = vmatprep.subr.mxu0 %v2917
        %2969 = vmatpush1.msra.mxu0 %v2916
        %2970 = vmatprep.subr.mxu0 %v2913
        %2971 = vmatpush1.msra.mxu0 %v2912
        %2972 = vmatprep.subr.mxu0 %v2909
        %2973 = vmatpush1.msra.mxu0 %v2908
        %2974 = vmatprep.subr.mxu0 %v2905
        %2975 = vmatpush1.msra.mxu0 %v2904
        %2976 = vmatprep.subr.mxu0 %v2901
        %2977 = vmatpush1.msra.mxu0 %v2900
        %2978 = vmatprep.subr.mxu0 %v2897
        %2979 = vmatpush1.msra.mxu0 %v2896
        %2980 = vmatprep.subr.mxu0 %v2893
        %2981 = vmatpush1.msra.mxu0 %v2892
        %2982 = vmatprep.subr.mxu0 %v2889
        %2983 = vmatpush1.msra.mxu0 %v2888
        %2984 = vmatprep.subr.mxu0 0.0
        %2985 = vmatpush2.msra.mxu0 0.0
        %2986 = vmatprep.subr.mxu0 0.0
        %2987 = vmatpush2.msra.mxu0 0.0
        %2988 = vmatprep.subr.mxu0 0.0
        %2989 = vmatpush2.msra.mxu0 0.0
        %2990 = vmatprep.subr.mxu0 0.0
        %2991 = vmatpush2.msra.mxu0 0.0
        %2992 = vmatprep.subr.mxu0 0.0
        %2993 = vmatpush2.msra.mxu0 0.0
        %2994 = vmatprep.subr.mxu0 0.0
        %2995 = vmatpush2.msra.mxu0 0.0
        %2996 = vmatprep.subr.mxu0 0.0
        %2997 = vmatpush2.msra.mxu0 0.0
        %2998 = vmatprep.subr.mxu0 0.0
        %2999 = vmatpush2.msra.mxu0 0.0
        %3000 = vmatprep.subr.mxu0 0.0
        %3001 = vmatpush2.msra.mxu0 0.0
        %3002 = vmatprep.subr.mxu0 0.0
        %3003 = vmatpush2.msra.mxu0 0.0
        %3004 = vmatprep.subr.mxu0 0.0
        %3005 = vmatpush2.msra.mxu0 0.0
        %3006 = vmatprep.subr.mxu0 0.0
        %3007 = vmatpush2.msra.mxu0 0.0
        %3008 = vmatprep.subr.mxu0 0.0
        %3009 = vmatpush2.msra.mxu0 0.0
        %3010 = vmatprep.subr.mxu0 0.0
        %3011 = vmatpush2.msra.mxu0 0.0
        %3012 = vmatprep.subr.mxu0 0.0
        %3013 = vmatpush2.msra.mxu0 0.0
        %3014 = vmatprep.subr.mxu0 0.0
        %3015 = vmatpush2.msra.mxu0 0.0
        %3016 = vmatprep.mubr.f32.mxu0 0.0
        %3017 = vmatmul.mubr.f32.gmra.mxu0 %v2884
        %v3018 = vpop.f32.mrf.mxu0
        %v3019 = vadd.f32 0.0, %v3018
        %v3020 = vpop.f32.mrf.mxu0
        %v3021 = vadd.f32 0.0, %v3020
        %3022 = vdwg.mxu0
        %3023 = vmatprep.subr.mxu0 %v2951
        %3024 = vmatpush1.msra.mxu0 %v2950
        %3025 = vmatprep.subr.mxu0 %v2947
        %3026 = vmatpush1.msra.mxu0 %v2946
        %3027 = vmatprep.subr.mxu0 %v2943
        %3028 = vmatpush1.msra.mxu0 %v2942
        %3029 = vmatprep.subr.mxu0 %v2939
        %3030 = vmatpush1.msra.mxu0 %v2938
        %3031 = vmatprep.subr.mxu0 %v2935
        %3032 = vmatpush1.msra.mxu0 %v2934
        %3033 = vmatprep.subr.mxu0 %v2931
        %3034 = vmatpush1.msra.mxu0 %v2930
        %3035 = vmatprep.subr.mxu0 %v2927
        %3036 = vmatpush1.msra.mxu0 %v2926
        %3037 = vmatprep.subr.mxu0 %v2923
        %3038 = vmatpush1.msra.mxu0 %v2922
        %3039 = vmatprep.subr.mxu0 %v2919
        %3040 = vmatpush1.msra.mxu0 %v2918
        %3041 = vmatprep.subr.mxu0 %v2915
        %3042 = vmatpush1.msra.mxu0 %v2914
        %3043 = vmatprep.subr.mxu0 %v2911
        %3044 = vmatpush1.msra.mxu0 %v2910
        %3045 = vmatprep.subr.mxu0 %v2907
        %3046 = vmatpush1.msra.mxu0 %v2906
        %3047 = vmatprep.subr.mxu0 %v2903
        %3048 = vmatpush1.msra.mxu0 %v2902
        %3049 = vmatprep.subr.mxu0 %v2899
        %3050 = vmatpush1.msra.mxu0 %v2898
        %3051 = vmatprep.subr.mxu0 %v2895
        %3052 = vmatpush1.msra.mxu0 %v2894
        %3053 = vmatprep.subr.mxu0 %v2891
        %3054 = vmatpush1.msra.mxu0 %v2890
        %3055 = vmatprep.subr.mxu0 0.0
        %3056 = vmatpush2.msra.mxu0 0.0
        %3057 = vmatprep.subr.mxu0 0.0
        %3058 = vmatpush2.msra.mxu0 0.0
        %3059 = vmatprep.subr.mxu0 0.0
        %3060 = vmatpush2.msra.mxu0 0.0
        %3061 = vmatprep.subr.mxu0 0.0
        %3062 = vmatpush2.msra.mxu0 0.0
        %3063 = vmatprep.subr.mxu0 0.0
        %3064 = vmatpush2.msra.mxu0 0.0
        %3065 = vmatprep.subr.mxu0 0.0
        %3066 = vmatpush2.msra.mxu0 0.0
        %3067 = vmatprep.subr.mxu0 0.0
        %3068 = vmatpush2.msra.mxu0 0.0
        %3069 = vmatprep.subr.mxu0 0.0
        %3070 = vmatpush2.msra.mxu0 0.0
        %3071 = vmatprep.subr.mxu0 0.0
        %3072 = vmatpush2.msra.mxu0 0.0
        %3073 = vmatprep.subr.mxu0 0.0
        %3074 = vmatpush2.msra.mxu0 0.0
        %3075 = vmatprep.subr.mxu0 0.0
        %3076 = vmatpush2.msra.mxu0 0.0
        %3077 = vmatprep.subr.mxu0 0.0
        %3078 = vmatpush2.msra.mxu0 0.0
        %3079 = vmatprep.subr.mxu0 0.0
        %3080 = vmatpush2.msra.mxu0 0.0
        %3081 = vmatprep.subr.mxu0 0.0
        %3082 = vmatpush2.msra.mxu0 0.0
        %3083 = vmatprep.subr.mxu0 0.0
        %3084 = vmatpush2.msra.mxu0 0.0
        %3085 = vmatprep.subr.mxu0 0.0
        %3086 = vmatpush2.msra.mxu0 0.0
        %3087 = vmatprep.mubr.f32.mxu0 0.0
        %3088 = vmatmul.mubr.f32.gmra.mxu0 %v2884
        %v3089 = vpop.f32.mrf.mxu0
        %v3090 = vadd.f32 0.0, %v3089
        %v3091 = vpop.f32.mrf.mxu0
        %v3092 = vadd.f32 0.0, %v3091
        %3093 = vdwg.mxu0
        %v3098 = vcombine.low %v3019, %v3021
        %v3099 = vcombine.low %v3090, %v3092
        %v3101 = vunpack.c.l.s4 1966171168
        %v3102 = vunpack.c.0.s8 %v3101
        %v3103 = vlaneseq
        %v3104 = vshrl.u32 %v3103, 7
        %v3105 = vsub.s32 %v3102, %v3104
        %v3106 = vrot.slane %v3098, %v3105
        %v3108 = vunpack.c.l.s4 1966171168
        %v3109 = vunpack.c.0.s8 %v3108
        %v3110 = vlaneseq
        %v3111 = vshrl.u32 %v3110, 7
        %v3112 = vsub.s32 %v3109, %v3111
        %v3113 = vrot.slane %v3099, %v3112
        %v3114 = vcombine.low %v3106, %v3113
        %v3116 = vunpack.c.l.s4 1966171168
        %v3117 = vunpack.c.0.s8 %v3116
        %v3118 = vlaneseq
        %v3119 = vshrl.u32 %v3118, 7
        %v3120 = vsub.s32 %v3117, %v3119
        %v3121 = vrot.slane %v3114, %v3120
        %v3123 = vadd.f32 %v2887, %v3121
        %v3124 = vxor.u32 %v3123, 2147483648
        %v3125 = vmul.f32 %v3124, 1.442695
        %v3126 = vpow.pop %v3125
        %v3127 = vadd.f32 %v3126, 1.0
        %v3128 = vrcp.pop %v3127
        %v3129 = vmul.f32 1.0, %v3128
        %v3131 = vrot.slane %v3123, 1
        %v3133 = vxor.u32 %v3131, 2147483648
        %v3134 = vmul.f32 %v3133, 1.442695
        %v3135 = vpow.pop %v3134
        %v3136 = vadd.f32 %v3135, 1.0
        %v3137 = vrcp.pop %v3136
        %v3138 = vmul.f32 1.0, %v3137
        %v3139 = vrot.slane %v3123, 2
        %v3141 = vtanh.pop %v3139
        %v3142 = vrot.slane %v3123, 3
        %v3144 = vxor.u32 %v3142, 2147483648
        %v3145 = vmul.f32 %v3144, 1.442695
        %v3146 = vpow.pop %v3145
        %v3147 = vadd.f32 %v3146, 1.0
        %v3148 = vrcp.pop %v3147
        %v3149 = vmul.f32 1.0, %v3148
        %v3150 = vmul.f32 %v3138, %v2885
        %v3151 = vmul.f32 %v3129, %v3141
        %v3152 = vadd.f32 %v3150, %v3151
        %v3153 = vtanh.pop %v3152
        %v3154 = vmul.f32 %v3149, %v3153
        %3155 = vst [vmem:[#allocation3 + $0x7] sm:$0x1] %v3154
        %v3156 = vld [vmem:[#allocation3] sm:$0xff]
        %v3157 = vld [vmem:[%s9] sm:$0xff]
        %v3158 = vld [vmem:[%s9 + $0x8] sm:$0xff]
        %v3159 = vld [vmem:[%s9 + $0x10] sm:$0xff]
        %v3160 = vld [vmem:[%s9 + $0x18] sm:$0xff]
        %v3161 = vld [vmem:[%s9 + $0x20] sm:$0xff]
        %v3162 = vld [vmem:[%s9 + $0x28] sm:$0xff]
        %v3163 = vld [vmem:[%s9 + $0x30] sm:$0xff]
        %v3164 = vld [vmem:[%s9 + $0x38] sm:$0xff]
        %v3165 = vld [vmem:[%s9 + $0x40] sm:$0xff]
        %v3166 = vld [vmem:[%s9 + $0x48] sm:$0xff]
        %v3167 = vld [vmem:[%s9 + $0x50] sm:$0xff]
        %v3168 = vld [vmem:[%s9 + $0x58] sm:$0xff]
        %v3169 = vld [vmem:[%s9 + $0x60] sm:$0xff]
        %v3170 = vld [vmem:[%s9 + $0x68] sm:$0xff]
        %v3171 = vld [vmem:[%s9 + $0x70] sm:$0xff]
        %v3172 = vld [vmem:[%s9 + $0x78] sm:$0xff]
        %v3173 = vld [vmem:[%s10] sm:$0x1]
        %v3175 = vlaneseq
        %v3176 = vshrl.u32 %v3175, 7
        %v3177 = vsub.s32 0, %v3176
        %v3178 = vrot.slane %v3173, %v3177
        %3180 = vmatprep.subr.mxu0 0.0
        %3181 = vmatpush1.msra.mxu0 %v3172
        %3182 = vmatprep.subr.mxu0 0.0
        %3183 = vmatpush1.msra.mxu0 %v3171
        %3184 = vmatprep.subr.mxu0 0.0
        %3185 = vmatpush1.msra.mxu0 %v3170
        %3186 = vmatprep.subr.mxu0 0.0
        %3187 = vmatpush1.msra.mxu0 %v3169
        %3188 = vmatprep.subr.mxu0 0.0
        %3189 = vmatpush1.msra.mxu0 %v3168
        %3190 = vmatprep.subr.mxu0 0.0
        %3191 = vmatpush1.msra.mxu0 %v3167
        %3192 = vmatprep.subr.mxu0 0.0
        %3193 = vmatpush1.msra.mxu0 %v3166
        %3194 = vmatprep.subr.mxu0 0.0
        %3195 = vmatpush1.msra.mxu0 %v3165
        %3196 = vmatprep.subr.mxu0 0.0
        %3197 = vmatpush1.msra.mxu0 %v3164
        %3198 = vmatprep.subr.mxu0 0.0
        %3199 = vmatpush1.msra.mxu0 %v3163
        %3200 = vmatprep.subr.mxu0 0.0
        %3201 = vmatpush1.msra.mxu0 %v3162
        %3202 = vmatprep.subr.mxu0 0.0
        %3203 = vmatpush1.msra.mxu0 %v3161
        %3204 = vmatprep.subr.mxu0 0.0
        %3205 = vmatpush1.msra.mxu0 %v3160
        %3206 = vmatprep.subr.mxu0 0.0
        %3207 = vmatpush1.msra.mxu0 %v3159
        %3208 = vmatprep.subr.mxu0 0.0
        %3209 = vmatpush1.msra.mxu0 %v3158
        %3210 = vmatprep.subr.mxu0 0.0
        %3211 = vmatpush1.msra.mxu0 %v3157
        %3212 = vmatprep.subr.mxu0 0.0
        %3213 = vmatpush2.msra.mxu0 0.0
        %3214 = vmatprep.subr.mxu0 0.0
        %3215 = vmatpush2.msra.mxu0 0.0
        %3216 = vmatprep.subr.mxu0 0.0
        %3217 = vmatpush2.msra.mxu0 0.0
        %3218 = vmatprep.subr.mxu0 0.0
        %3219 = vmatpush2.msra.mxu0 0.0
        %3220 = vmatprep.subr.mxu0 0.0
        %3221 = vmatpush2.msra.mxu0 0.0
        %3222 = vmatprep.subr.mxu0 0.0
        %3223 = vmatpush2.msra.mxu0 0.0
        %3224 = vmatprep.subr.mxu0 0.0
        %3225 = vmatpush2.msra.mxu0 0.0
        %3226 = vmatprep.subr.mxu0 0.0
        %3227 = vmatpush2.msra.mxu0 0.0
        %3228 = vmatprep.subr.mxu0 0.0
        %3229 = vmatpush2.msra.mxu0 0.0
        %3230 = vmatprep.subr.mxu0 0.0
        %3231 = vmatpush2.msra.mxu0 0.0
        %3232 = vmatprep.subr.mxu0 0.0
        %3233 = vmatpush2.msra.mxu0 0.0
        %3234 = vmatprep.subr.mxu0 0.0
        %3235 = vmatpush2.msra.mxu0 0.0
        %3236 = vmatprep.subr.mxu0 0.0
        %3237 = vmatpush2.msra.mxu0 0.0
        %3238 = vmatprep.subr.mxu0 0.0
        %3239 = vmatpush2.msra.mxu0 0.0
        %3240 = vmatprep.subr.mxu0 0.0
        %3241 = vmatpush2.msra.mxu0 0.0
        %3242 = vmatprep.subr.mxu0 0.0
        %3243 = vmatpush2.msra.mxu0 0.0
        %3244 = vmatprep.mubr.f32.mxu0 0.0
        %3245 = vmatmul.mubr.f32.gmra.mxu0 %v3156
        %v3246 = vpop.f32.mrf.mxu0
        %v3247 = vadd.f32 %v3178, %v3246
        %v3248 = vpop.f32.mrf.mxu0
        %3249 = vdwg.mxu0
        %vm3250 = vcmask 64512
        %v3251 = vsel %vm3250, %v3247, -inf
        %3252 = vmax.xlane.f32.xlu0 %v3251
        %v3253 = vpop.xlane.xlu0 %3252
        %v3254 = vsub.f32 %v3247, %v3253
        %v3255 = vmul.f32 %v3254, 1.442695
        %v3256 = vpow.pop %v3255
        %v3257 = vsel %vm3250, %v3256, 0.0
        %3258 = vadd.xlane.f32.xlu0 %v3257
        %v3259 = vpop.xlane.xlu0 %3258
        %v3260 = vrcp.pop %v3259
        %v3261 = vmul.f32 %v3256, %v3260
        %3262 = vst.msk [vmem:[%s639] sm:$0xff] %vm3250, %v3261
        %v3263 = vld [vmem:[%s11] sm:$0xff]
        %v3264 = vld [vmem:[%s11 + $0x8] sm:$0xff]
        %v3265 = vld [vmem:[%s11 + $0x10] sm:$0xff]
        %v3266 = vld [vmem:[%s11 + $0x18] sm:$0xff]
        %v3267 = vld [vmem:[%s11 + $0x20] sm:$0xff]
        %v3268 = vld [vmem:[%s11 + $0x28] sm:$0xff]
        %v3269 = vld [vmem:[%s11 + $0x30] sm:$0xff]
        %v3270 = vld [vmem:[%s11 + $0x38] sm:$0xff]
        %v3271 = vld [vmem:[%s11 + $0x40] sm:$0xff]
        %v3272 = vld [vmem:[%s11 + $0x48] sm:$0xff]
        %v3273 = vld [vmem:[%s11 + $0x50] sm:$0xff]
        %v3274 = vld [vmem:[%s11 + $0x58] sm:$0xff]
        %v3275 = vld [vmem:[%s11 + $0x60] sm:$0xff]
        %v3276 = vld [vmem:[%s11 + $0x68] sm:$0xff]
        %v3277 = vld [vmem:[%s11 + $0x70] sm:$0xff]
        %v3278 = vld [vmem:[%s11 + $0x78] sm:$0xff]
        %v3279 = vld [vmem:[#allocation4] sm:$0x1]
        %v3281 = vlaneseq
        %v3282 = vshrl.u32 %v3281, 7
        %v3283 = vsub.s32 0, %v3282
        %v3284 = vrot.slane %v3279, %v3283
        %3286 = vmatprep.subr.mxu0 0.0
        %3287 = vmatpush1.msra.mxu0 %v3278
        %3288 = vmatprep.subr.mxu0 0.0
        %3289 = vmatpush1.msra.mxu0 %v3277
        %3290 = vmatprep.subr.mxu0 0.0
        %3291 = vmatpush1.msra.mxu0 %v3276
        %3292 = vmatprep.subr.mxu0 0.0
        %3293 = vmatpush1.msra.mxu0 %v3275
        %3294 = vmatprep.subr.mxu0 0.0
        %3295 = vmatpush1.msra.mxu0 %v3274
        %3296 = vmatprep.subr.mxu0 0.0
        %3297 = vmatpush1.msra.mxu0 %v3273
        %3298 = vmatprep.subr.mxu0 0.0
        %3299 = vmatpush1.msra.mxu0 %v3272
        %3300 = vmatprep.subr.mxu0 0.0
        %3301 = vmatpush1.msra.mxu0 %v3271
        %3302 = vmatprep.subr.mxu0 0.0
        %3303 = vmatpush1.msra.mxu0 %v3270
        %3304 = vmatprep.subr.mxu0 0.0
        %3305 = vmatpush1.msra.mxu0 %v3269
        %3306 = vmatprep.subr.mxu0 0.0
        %3307 = vmatpush1.msra.mxu0 %v3268
        %3308 = vmatprep.subr.mxu0 0.0
        %3309 = vmatpush1.msra.mxu0 %v3267
        %3310 = vmatprep.subr.mxu0 0.0
        %3311 = vmatpush1.msra.mxu0 %v3266
        %3312 = vmatprep.subr.mxu0 0.0
        %3313 = vmatpush1.msra.mxu0 %v3265
        %3314 = vmatprep.subr.mxu0 0.0
        %3315 = vmatpush1.msra.mxu0 %v3264
        %3316 = vmatprep.subr.mxu0 0.0
        %3317 = vmatpush1.msra.mxu0 %v3263
        %3318 = vmatprep.subr.mxu0 0.0
        %3319 = vmatpush2.msra.mxu0 0.0
        %3320 = vmatprep.subr.mxu0 0.0
        %3321 = vmatpush2.msra.mxu0 0.0
        %3322 = vmatprep.subr.mxu0 0.0
        %3323 = vmatpush2.msra.mxu0 0.0
        %3324 = vmatprep.subr.mxu0 0.0
        %3325 = vmatpush2.msra.mxu0 0.0
        %3326 = vmatprep.subr.mxu0 0.0
        %3327 = vmatpush2.msra.mxu0 0.0
        %3328 = vmatprep.subr.mxu0 0.0
        %3329 = vmatpush2.msra.mxu0 0.0
        %3330 = vmatprep.subr.mxu0 0.0
        %3331 = vmatpush2.msra.mxu0 0.0
        %3332 = vmatprep.subr.mxu0 0.0
        %3333 = vmatpush2.msra.mxu0 0.0
        %3334 = vmatprep.subr.mxu0 0.0
        %3335 = vmatpush2.msra.mxu0 0.0
        %3336 = vmatprep.subr.mxu0 0.0
        %3337 = vmatpush2.msra.mxu0 0.0
        %3338 = vmatprep.subr.mxu0 0.0
        %3339 = vmatpush2.msra.mxu0 0.0
        %3340 = vmatprep.subr.mxu0 0.0
        %3341 = vmatpush2.msra.mxu0 0.0
        %3342 = vmatprep.subr.mxu0 0.0
        %3343 = vmatpush2.msra.mxu0 0.0
        %3344 = vmatprep.subr.mxu0 0.0
        %3345 = vmatpush2.msra.mxu0 0.0
        %3346 = vmatprep.subr.mxu0 0.0
        %3347 = vmatpush2.msra.mxu0 0.0
        %3348 = vmatprep.subr.mxu0 0.0
        %3349 = vmatpush2.msra.mxu0 0.0
        %3350 = vmatprep.mubr.f32.mxu0 0.0
        %3351 = vmatmul.mubr.f32.gmra.mxu0 %v3156
        %v3352 = vpop.f32.mrf.mxu0
        %v3353 = vadd.f32 %v3284, %v3352
        %v3354 = vpop.f32.mrf.mxu0
        %3355 = vdwg.mxu0
        %vm3356 = vcmask 7168
        %3357 = vst.msk [vmem:[%s665] sm:$0xff] %vm3356, %v3353
        %3358 = vst [vmem:[%s651] sm:$0x1] %v3154
        %3359 = vst [vmem:[%s657] sm:$0x1] %v3152
        %s3360 = sand.u32 %s340, 1
        %s3361 = scalar_lea.sflag [#allocation7], %s3360
        %s3362 = sand.u32 %s340, 1
        %s3363 = smul.addr %s3362, 8
        %s3364 = scalar_lea.vmem [#allocation16], %s3363
        %p3365 = scmp.lt.s32.totalorder %s44, 1
        %s3366 = scalar_select %p3365, %s44, 1
        %s3367 = smul.addr %s3366, 8
        %s3368 = scalar_lea.vmem %s14, %s3367
        %s3369 = sand.u32 %s44, 1
        %s3370 = scalar_lea.sflag [#allocation18], %s3369
        %s3371 = sand.u32 %s392, 1
        %s3372 = scalar_lea.vmem [#allocation17], %s3371
        %s3373 = sand.u32 %s44, 1
        %s3374 = scalar_lea.sflag [#allocation18], %s3373
        %s3375 = sand.u32 %s418, 1
        %s3376 = scalar_lea.vmem [#allocation19], %s3375
        // Predicated region
        $region97: #{tpu_custom_call.1} parent=71 // pred_check
          %p3377 = pneg %p350
        $region98: #{tpu_custom_call.1} parent=71 // pred_check_branch
          %3379 = sbr.rel (%p3377) target = $region100
        $region99: #{tpu_custom_call.1} parent=71 // pred_region
          %s3381 = ssub.s32 128, 128
          %3382 = vsyncadd %s3361, %s3381
          %s3383 = smul.addr %s44, 128
          %s3384 = scalar_lea.hbm %s13, %s3383
          %s3386 = sshll.u32 %s3364, 4
          %s3387 = int_to_ptr.vmem [resolvable:$true] %s3386
          %3389 = dma.vmem_to_hbm [thread:$0]  %s3387, 128, %s3384, %s3361
        $region100: #{tpu_custom_call.1} parent=71 // pred_fallthru
          _
        // Predicated region
        $region101: #{tpu_custom_call.1} parent=71 // pred_check
          %p3390 = pneg %p376
        $region102: #{tpu_custom_call.1} parent=71 // pred_check_branch
          %3392 = sbr.rel (%p3390) target = $region104
        $region103: #{tpu_custom_call.1} parent=71 // pred_region
          _
        $region104: #{tpu_custom_call.1} parent=71 // pred_fallthru
          _
        // Predicated region
        $region105: #{tpu_custom_call.1} parent=71 // pred_check
          %p3393 = pneg %p402
        $region106: #{tpu_custom_call.1} parent=71 // pred_check_branch
          %3395 = sbr.rel (%p3393) target = $region108
        $region107: #{tpu_custom_call.1} parent=71 // pred_region
          %s3397 = ssub.s32 16, 16
          %3398 = vsyncadd %s3370, %s3397
          %s3399 = smul.addr %s44, 16
          %s3400 = scalar_lea.hbm %s15, %s3399
          %s3402 = sshll.u32 %s3372, 4
          %s3403 = int_to_ptr.vmem [resolvable:$true] %s3402
          %3405 = dma.vmem_to_hbm [thread:$0]  %s3403, 16, %s3400, %s3370
        $region108: #{tpu_custom_call.1} parent=71 // pred_fallthru
          _
        // Predicated region
        $region109: #{tpu_custom_call.1} parent=71 // pred_check
          %p3406 = pneg %p428
        $region110: #{tpu_custom_call.1} parent=71 // pred_check_branch
          %3408 = sbr.rel (%p3406) target = $region112
        $region111: #{tpu_custom_call.1} parent=71 // pred_region
          %s3410 = ssub.s32 16, 16
          %3411 = vsyncadd %s3374, %s3410
          %s3412 = smul.addr %s44, 16
          %s3413 = scalar_lea.hbm %s16, %s3412
          %s3415 = sshll.u32 %s3376, 4
          %s3416 = int_to_ptr.vmem [resolvable:$true] %s3415
          %3418 = dma.vmem_to_hbm [thread:$0]  %s3416, 16, %s3413, %s3374
        $region112: #{tpu_custom_call.1} parent=71 // pred_fallthru
          _
      $region72: #{tpu_custom_call.1} parent=5 // pred_fallthru
        _
      %p3419 = scmp.le.s32.totalorder 2, %s39
      // Predicated region
      $region113: #{tpu_custom_call.1} parent=5 // pred_check
        %p3420 = pneg %p3419
      $region114: #{tpu_custom_call.1} parent=5 // pred_check_branch
        %3422 = sbr.rel (%p3420) target = $region116
      $region115: #{tpu_custom_call.1} parent=5 // pred_region
        %s3423 = ssub.s32 %s39, 2
        // Predicated region
        $region117: #{tpu_custom_call.1} parent=115 // pred_check
          %p3424 = pneg %p356
        $region118: #{tpu_custom_call.1} parent=115 // pred_check_branch
          %3426 = sbr.rel (%p3424) target = $region120
        $region119: #{tpu_custom_call.1} parent=115 // pred_region
          %s3427 = sand.u32 %s341, 1
          %s3428 = scalar_lea.sflag [#allocation7], %s3427
          %s3429 = sand.u32 %s341, 1
          %s3430 = smul.addr %s3429, 8
          %s3431 = scalar_lea.vmem [#allocation16], %s3430
          %3432 = dma.done %s3428, 128
        $region120: #{tpu_custom_call.1} parent=115 // pred_fallthru
          _
        // Predicated region
        $region121: #{tpu_custom_call.1} parent=115 // pred_check
          %p3433 = pneg %p382
        $region122: #{tpu_custom_call.1} parent=115 // pred_check_branch
          %3435 = sbr.rel (%p3433) target = $region124
        $region123: #{tpu_custom_call.1} parent=115 // pred_region
          %p3436 = scmp.lt.s32.totalorder %s45, 1
          %s3437 = scalar_select %p3436, %s45, 1
          %s3438 = smul.addr %s3437, 8
          %s3439 = scalar_lea.vmem %s14, %s3438
        $region124: #{tpu_custom_call.1} parent=115 // pred_fallthru
          _
        // Predicated region
        $region125: #{tpu_custom_call.1} parent=115 // pred_check
          %p3440 = pneg %p408
        $region126: #{tpu_custom_call.1} parent=115 // pred_check_branch
          %3442 = sbr.rel (%p3440) target = $region128
        $region127: #{tpu_custom_call.1} parent=115 // pred_region
          %s3443 = sand.u32 %s45, 1
          %s3444 = scalar_lea.sflag [#allocation18], %s3443
          %s3445 = sand.u32 %s393, 1
          %s3446 = scalar_lea.vmem [#allocation17], %s3445
          %3447 = dma.done %s3444, 16
        $region128: #{tpu_custom_call.1} parent=115 // pred_fallthru
          _
        // Predicated region
        $region129: #{tpu_custom_call.1} parent=115 // pred_check
          %p3448 = pneg %p434
        $region130: #{tpu_custom_call.1} parent=115 // pred_check_branch
          %3450 = sbr.rel (%p3448) target = $region132
        $region131: #{tpu_custom_call.1} parent=115 // pred_region
          %s3451 = sand.u32 %s45, 1
          %s3452 = scalar_lea.sflag [#allocation18], %s3451
          %s3453 = sand.u32 %s419, 1
          %s3454 = scalar_lea.vmem [#allocation19], %s3453
          %3455 = dma.done %s3452, 16
        $region132: #{tpu_custom_call.1} parent=115 // pred_fallthru
          _
      $region116: #{tpu_custom_call.1} parent=5 // pred_fallthru
        _
    $region6: #{tpu_custom_call.1} parent=1 // loop_footer
      %s43 = sadd.s32 1, %s39
    $region7: #{tpu_custom_call.1} parent=1 // loop_footer_branch
      %38 = sbr.rel target = $region3
    $region8: #{tpu_custom_call.1} parent=1 // loop_exit
      _
    %3456 = vsyncpa [#allocation6], 1
    %s3457 = scalar_lea.sflag [#allocation6], 1
    %3458 = vsyncpa %s3457, 1
    %3459 = vsyncpa [#allocation11], 1
    %s3460 = scalar_lea.sflag [#allocation11], 1
    %3461 = vsyncpa %s3460, 1
    %3462 = vsyncpa [#allocation14], 1
    %3463 = vsyncpa [#allocation7], 1
    %s3464 = scalar_lea.sflag [#allocation7], 1
    %3465 = vsyncpa %s3464, 1
    %3466 = vsyncpa [#allocation18], 1
    %s3467 = scalar_lea.sflag [#allocation18], 1
    %3468 = vsyncpa %s3467, 1
    %3469 = vsyncpa [#allocation8], 1
    %s3470 = scalar_lea.sflag [#allocation8], 1
    %3471 = vsyncpa %s3470, 1

</llo_original>
